<compile_context>
chip_gen: v6e
topology: v6e:2x2x1
jax: 0.10.0
libtpu: 0.0.40
codegen_flags: <defaults>
</compile_context>

<pallas_src>
import functools
import math

import jax
import jax.numpy as jnp
from jax.experimental import pallas as pl
from jax.experimental.pallas import tpu as pltpu

EPS = 1e-5        # nn.LayerNorm default
NEG_INF = -1e30   # finite causal-mask fill (exp never sees -inf - -inf)

PARAM_ORDER = (
    "ln1_g", "ln1_b",
    "sa_wq", "sa_bq", "sa_wk", "sa_wv", "sa_bv", "sa_wo", "sa_bo",
    "ln2_g", "ln2_b",
    "ca_wq", "ca_bq", "ca_wk", "ca_wv", "ca_bv", "ca_wo", "ca_bo",
    "ln3_g", "ln3_b",
    "fc1_w", "fc1_b", "fc2_w", "fc2_b",
)
_BF16_WEIGHTS = frozenset({
    "sa_wq", "sa_wk", "sa_wv", "sa_wo",
    "ca_wq", "ca_wk", "ca_wv", "ca_wo",
    "fc1_w", "fc2_w",
})


# ---------------------------------------------------------------------------
# in-kernel math helpers
# ---------------------------------------------------------------------------
def _layer_norm_f32(x, g, b):
    x = x.astype(jnp.float32)
    mean = jnp.mean(x, axis=-1, keepdims=True)
    var = jnp.mean(jnp.square(x - mean), axis=-1, keepdims=True)
    return (x - mean) * jax.lax.rsqrt(var + EPS) * g + b


def _mha_block_softmax(q_in, kv_in, wq, bq, wk, wv, bv, wo, bo,
                       num_heads, causal, kv_block):
    """WhisperAttention with KV-block-tiled online softmax.

    q_in: (T, D) f32 (post-LN); kv_in: (T or S, D).  wq/bq already carry the
    head_dim**-0.5 scaling (folded in prepare_params).  Matmuls run in bf16
    with f32 accumulation; softmax statistics stay in f32.  Normalization is
    deferred to the (H, T, hd) context instead of the (H, T, S) probabilities.
    """
    T, D = q_in.shape
    S = kv_in.shape[0]
    H = num_heads
    hd = D // H

    q_in16 = q_in.astype(jnp.bfloat16)
    kv_in16 = kv_in.astype(jnp.bfloat16)

    q = jnp.dot(q_in16, wq, preferred_element_type=jnp.float32) + bq
    k = jnp.dot(kv_in16, wk, preferred_element_type=jnp.float32)      # no bias
    v = jnp.dot(kv_in16, wv, preferred_element_type=jnp.float32) + bv

    # Batch-leading (H, *, hd) layout for the MXU einsums.
    # TODO(synk): batch-in-middle einsums ('thd,shd->hts') would remove these
    # once-per-call head transposes but do not lower reliably through Mosaic's
    # dot_general, so the explicit transposes are kept.
    qh = q.reshape(T, H, hd).transpose(1, 0, 2).astype(jnp.bfloat16)
    kh = k.reshape(S, H, hd).transpose(1, 0, 2).astype(jnp.bfloat16)
    vh = v.reshape(S, H, hd).transpose(1, 0, 2).astype(jnp.bfloat16)

    blk = max(1, min(kv_block, S))
    n_blk = -(-S // blk)

    # Online (flash-style) softmax over KV blocks: live scores are
    # (H, T, blk) instead of (H, T, S) (e.g. ~54 MB at Whisper-large).
    m = jnp.full((H, T, 1), NEG_INF, dtype=jnp.float32)
    l = jnp.zeros((H, T, 1), dtype=jnp.float32)
    acc = jnp.zeros((H, T, hd), dtype=jnp.float32)

    for i in range(n_blk):                       # static, fully unrolled
        s0 = i * blk
        sz = min(blk, S - s0)
        kb = kh[:, s0:s0 + sz, :]
        vb = vh[:, s0:s0 + sz, :]
        s = jnp.einsum("htd,hsd->hts", qh, kb,
                       preferred_element_type=jnp.float32)        # f32 scores
        if causal:
            row = jax.lax.broadcasted_iota(jnp.int32, (T, sz), 0)
            col = jax.lax.broadcasted_iota(jnp.int32, (T, sz), 1) + s0
            s = jnp.where((col <= row)[None, :, :], s, NEG_INF)
        m_new = jnp.maximum(m, jnp.max(s, axis=-1, keepdims=True))
        alpha = jnp.exp(m - m_new)
        p = jnp.exp(s - m_new)                                    # EUP exp, f32
        l = alpha * l + jnp.sum(p, axis=-1, keepdims=True)
        acc = alpha * acc + jnp.einsum(
            "hts,hsd->htd", p.astype(jnp.bfloat16), vb,
            preferred_element_type=jnp.float32)
        m = m_new

    # Deferred normalization: one multiply over (H, T, hd), not (H, T, S).
    ctx = acc * pl.reciprocal(l, approx=True)
    attn = ctx.transpose(1, 0, 2).reshape(T, D).astype(jnp.bfloat16)
    return jnp.dot(attn, wo, preferred_element_type=jnp.float32) + bo


def _attention_half(x, enc, p, num_heads, kv_block):
    """Self-attention + cross-attention (pre-LN, residual).  Returns the
    post-attention residual stream (f32) and LN3(x) in bf16 for the FFN."""
    h = _layer_norm_f32(x, p["ln1_g"][...], p["ln1_b"][...])
    x = x + _mha_block_softmax(
        h, h, p["sa_wq"][...], p["sa_bq"][...], p["sa_wk"][...],
        p["sa_wv"][...], p["sa_bv"][...], p["sa_wo"][...], p["sa_bo"][...],
        num_heads, True, kv_block)

    # TODO(synk): for autoregressive decode the cross-attention K/V projection
    # of the (static) encoder states should be computed once and cached rather
    # than recomputed per generated token.
    h = _layer_norm_f32(x, p["ln2_g"][...], p["ln2_b"][...])
    x = x + _mha_block_softmax(
        h, enc, p["ca_wq"][...], p["ca_bq"][...], p["ca_wk"][...],
        p["ca_wv"][...], p["ca_bv"][...], p["ca_wo"][...], p["ca_bo"][...],
        num_heads, False, kv_block)

    h3 = _layer_norm_f32(x, p["ln3_g"][...], p["ln3_b"][...]).astype(jnp.bfloat16)
    return x, h3


# ---------------------------------------------------------------------------
# Pallas kernel
# ---------------------------------------------------------------------------
def _decoder_layer_kernel(num_heads, kv_block, n_f, *refs):
    x_ref, enc_ref = refs[0], refs[1]
    p = dict(zip(PARAM_ORDER, refs[2:2 + len(PARAM_ORDER)]))
    rest = refs[2 + len(PARAM_ORDER):]

    if n_f == 1:
        # FFN weights fully VMEM-resident: single pass, no chunk loop and no
        # accumulator read-modify-write.
        (out_ref,) = rest
        x_mid, h3 = _attention_half(x_ref[0], enc_ref[0], p, num_heads, kv_block)
        g = jnp.dot(h3, p["fc1_w"][...],
                    preferred_element_type=jnp.float32) + p["fc1_b"][...]
        # TODO(synk): PyTorch ACT2FN["gelu"] is exact erf-GELU; tanh approx is
        # used because erf has no guaranteed Mosaic lowering.
        g = jax.nn.gelu(g, approximate=True)
        ffn = jnp.dot(g.astype(jnp.bfloat16), p["fc2_w"][...],
                      preferred_element_type=jnp.float32) + p["fc2_b"][...]
        out_ref[0] = (x_mid + ffn).astype(out_ref.dtype)
        return

    # Chunked FFN path (only when the whole FFN does not fit the VMEM budget):
    # attention runs once per batch element (chunk 0); its result and LN3(x)
    # persist in VMEM scratch across the chunk sweep.
    out_ref, xmid_sc, h3_sc, acc_sc = rest
    f = pl.program_id(1)

    @pl.when(f == 0)
    def _():
        x_mid, h3 = _attention_half(x_ref[0], enc_ref[0], p, num_heads, kv_block)
        xmid_sc[...] = x_mid
        h3_sc[...] = h3
        acc_sc[...] = jnp.zeros_like(acc_sc)

    g = jnp.dot(h3_sc[...], p["fc1_w"][...],
                preferred_element_type=jnp.float32) + p["fc1_b"][...]
    g = jax.nn.gelu(g, approximate=True)   # TODO(synk): erf-GELU (see above)
    acc_sc[...] += jnp.dot(g.astype(jnp.bfloat16), p["fc2_w"][...],
                           preferred_element_type=jnp.float32)

    @pl.when(f == n_f - 1)
    def _():
        out_ref[0] = (xmid_sc[...] + acc_sc[...]
                      + p["fc2_b"][...]).astype(out_ref.dtype)


# ---------------------------------------------------------------------------
# host-side planning helpers
# ---------------------------------------------------------------------------
def prepare_params(raw_params, num_heads):
    """One-time host-side parameter preparation:
      * folds the q scaling (head_dim**-0.5) into q_proj weight and bias
      * casts matmul weights to bf16 (halves HBM->VMEM traffic); LayerNorm
        params and biases stay f32.
    """
    D = raw_params["sa_wq"].shape[0]
    scaling = (D // num_heads) ** -0.5
    out = {}
    for name in PARAM_ORDER:
        w = jnp.asarray(raw_params[name], jnp.float32)
        if name in ("sa_wq", "sa_bq", "ca_wq", "ca_bq"):
            w = w * scaling
        out[name] = w.astype(jnp.bfloat16) if name in _BF16_WEIGHTS else w
    return out


def _vmem_limit_bytes():
    """3/4 of this chip's physical VMEM, capped at 100 MiB."""
    try:
        cap = pltpu.get_tpu_info().vmem_capacity_bytes
    except Exception:
        cap = 64 * 1024 * 1024
    return int(min(cap * 3 // 4, 100 * 1024 * 1024))


def _resident_bytes(D, F, T, S, H, f_chunk, kv_block, const_bufs):
    """Rough VMEM footprint estimate for a given FFN chunk size."""
    n_f = F // f_chunk
    ffn_bufs = const_bufs if n_f == 1 else 2
    const_w = (8 * D * D * 2 + 16 * D * 4) * const_bufs       # attn W + LN/bias
    io = 2 * T * D * 4 + 2 * S * D * 2 + 2 * T * D * 4        # x, enc, out
    ffn_w = (2 * D * f_chunk * 2 + f_chunk * 4) * ffn_bufs    # fc1/fc2 chunk
    scratch = T * D * 10 if n_f > 1 else 0                    # xmid + h3 + acc
    blk = max(1, min(kv_block, max(S, T)))
    trans = ((3 * T + 2 * S) * D * 2        # q/k/v bf16 head tensors
             + 2 * H * T * blk * 4          # score + prob block (f32)
             + 3 * T * D * 4                # context / residual temporaries
             + T * f_chunk * 4)             # FFN hidden chunk
    return const_w + io + ffn_w + scratch + trans


def _auto_f_chunk(D, F, T, S, H, kv_block, vmem_limit, const_bufs):
    """Largest FFN chunk fitting the VMEM budget; prefer the whole FFN (n_f=1)
    so fc1/fc2 stay resident across the entire batch sweep."""
    budget = int(vmem_limit * 0.9)
    if _resident_bytes(D, F, T, S, H, F, kv_block, const_bufs) <= budget:
        return F
    c = (F // 128) * 128
    while c >= 128:
        if F % c == 0 and _resident_bytes(D, F, T, S, H, c, kv_block,
                                          const_bufs) <= budget:
            return c
        c -= 128
    return math.gcd(F, 128) if F >= 128 else F


_SINGLE_BUFFER_OK = None


def _probe_kernel(x_ref, o_ref):
    o_ref[...] = x_ref[...] + 1.0


def _single_buffer_supported():
    """One-time probe: does this jax build accept pipeline_mode=pl.Buffered(1)
    (single-buffered constant-index weights)?  Only this tiny probe is guarded
    by try/except; the real kernel is built exactly once with the known-good
    configuration, so genuine compile errors are never masked."""
    global _SINGLE_BUFFER_OK
    if _SINGLE_BUFFER_OK is None:
        try:
            fn = pl.pallas_call(
                _probe_kernel,
                out_shape=jax.ShapeDtypeStruct((8, 128), jnp.float32),
                grid=(2,),
                in_specs=[pl.BlockSpec((8, 128), lambda i: (0, 0),
                                       pipeline_mode=pl.Buffered(1))],
                out_specs=pl.BlockSpec((8, 128), lambda i: (0, 0)),
            )
            jax.block_until_ready(fn(jnp.zeros((8, 128), jnp.float32)))
            _SINGLE_BUFFER_OK = True
        except Exception:
            _SINGLE_BUFFER_OK = False
    return _SINGLE_BUFFER_OK


# ---------------------------------------------------------------------------
# wrapper (jit-friendly; no host syncs inside)
# ---------------------------------------------------------------------------
def whisper_decoder_layer(x, enc, params, num_heads, *, f_chunk=None,
                          kv_block=256):
    """WhisperDecoderLayer forward (eval mode; dropout = identity).

    x:      (B, T, D) decoder hidden states
    enc:    (B, S, D) encoder hidden states
    params: output of prepare_params()
    Returns (B, T, D) float32.
    """
    B, T, D = x.shape
    S = enc.shape[1]
    F = params["fc1_w"].shape[1]

    const_bufs = 1 if _single_buffer_supported() else 2
    vmem_limit = _vmem_limit_bytes()
    if f_chunk is None:
        f_chunk = _auto_f_chunk(D, F, T, S, num_heads, kv_block, vmem_limit,
                                const_bufs)
    assert F % f_chunk == 0, "ffn_dim must be divisible by f_chunk"
    n_f = F // f_chunk
    # TODO(synk): when n_f > 1 and B > 1, grid=(B, n_f) re-streams the FFN
    # weight chunks once per batch element; a separate token-flattened FFN pass
    # would amortize that.  With the capacity-aware default, n_f == 1 whenever
    # VMEM allows, so the FFN weights are fetched exactly once.

    def const_spec(shape):
        kw = {"pipeline_mode": pl.Buffered(1)} if const_bufs == 1 else {}
        nd = len(shape)
        return pl.BlockSpec(shape, lambda b, f, _nd=nd: (0,) * _nd, **kw)

    w_specs = []
    for name in PARAM_ORDER:
        shape = params[name].shape
        if n_f > 1 and name == "fc1_w":
            spec = pl.BlockSpec((D, f_chunk), lambda b, f: (0, f))
        elif n_f > 1 and name == "fc1_b":
            spec = pl.BlockSpec((1, f_chunk), lambda b, f: (0, f))
        elif n_f > 1 and name == "fc2_w":
            spec = pl.BlockSpec((f_chunk, D), lambda b, f: (f, 0))
        else:
            spec = const_spec(shape)
        w_specs.append(spec)

    in_specs = [
        pl.BlockSpec((1, T, D), lambda b, f: (b, 0, 0)),   # hidden_states
        pl.BlockSpec((1, S, D), lambda b, f: (b, 0, 0)),   # encoder states
    ] + w_specs

    scratch = [] if n_f == 1 else [
        pltpu.VMEM((T, D), jnp.float32),    # x after both attention blocks
        pltpu.VMEM((T, D), jnp.bfloat16),   # LN3(x) feeding the FFN
        pltpu.VMEM((T, D), jnp.float32),    # FFN chunk accumulator
    ]

    kernel = functools.partial(_decoder_layer_kernel, num_heads, kv_block, n_f)
    return pl.pallas_call(
        kernel,
        out_shape=jax.ShapeDtypeStruct((B, T, D), jnp.float32),
        grid_spec=pltpu.PrefetchScalarGridSpec(
            num_scalar_prefetch=0,
            grid=(B, n_f),
            in_specs=in_specs,
            out_specs=pl.BlockSpec((1, T, D), lambda b, f: (b, 0, 0)),
            scratch_shapes=scratch,
        ),
        compiler_params=pltpu.CompilerParams(
            dimension_semantics=("parallel", "arbitrary"),
            vmem_limit_bytes=vmem_limit,
        ),
    )(x.astype(jnp.float32), enc.astype(jnp.bfloat16),
      *[params[n] for n in PARAM_ORDER])


# ---------------------------------------------------------------------------
# pure-JAX references (f32-exact and precision-matched)
# ---------------------------------------------------------------------------
def _mha_ref(q_in, kv_in, wq, bq, wk, wv, bv, wo, bo, num_heads, causal,
             scaling, compute_dtype):
    T, D = q_in.shape
    S = kv_in.shape[0]
    hd = D // num_heads
    c = lambda a: a.astype(compute_dtype)
    f = lambda a: a.astype(jnp.float32)
    q = (jnp.dot(c(q_in), c(wq), preferred_element_type=jnp.float32)
         + f(bq)) * scaling
    k = jnp.dot(c(kv_in), c(wk), preferred_element_type=jnp.float32)
    v = jnp.dot(c(kv_in), c(wv), preferred_element_type=jnp.float32) + f(bv)
    qh = q.reshape(T, num_heads, hd).transpose(1, 0, 2)
    kh = k.reshape(S, num_heads, hd).transpose(1, 0, 2)
    vh = v.reshape(S, num_heads, hd).transpose(1, 0, 2)
    s = jnp.einsum("htd,hsd->hts", c(qh), c(kh),
                   preferred_element_type=jnp.float32)
    if causal:
        row = jax.lax.broadcasted_iota(jnp.int32, (T, S), 0)
        col = jax.lax.broadcasted_iota(jnp.int32, (T, S), 1)
        s = jnp.where((col <= row)[None], s, NEG_INF)
    p = jax.nn.softmax(s, axis=-1)
    ctx = jnp.einsum("hts,hsd->htd", c(p), c(vh),
                     preferred_element_type=jnp.float32)
    attn = ctx.transpose(1, 0, 2).reshape(T, D)
    return jnp.dot(c(attn), c(wo), preferred_element_type=jnp.float32) + f(bo)


def _decoder_layer_ref(x, enc, p, num_heads, scaling, compute_dtype):
    ln = lambda t, g, b: _layer_norm_f32(t, p[g].astype(jnp.float32),
                                         p[b].astype(jnp.float32))
    c = lambda a: a.astype(compute_dtype)
    h = ln(x, "ln1_g", "ln1_b")
    x = x + _mha_ref(h, h, p["sa_wq"], p["sa_bq"], p["sa_wk"], p["sa_wv"],
                     p["sa_bv"], p["sa_wo"], p["sa_bo"], num_heads, True,
                     scaling, compute_dtype)
    h = ln(x, "ln2_g", "ln2_b")
    x = x + _mha_ref(h, enc, p["ca_wq"], p["ca_bq"], p["ca_wk"], p["ca_wv"],
                     p["ca_bv"], p["ca_wo"], p["ca_bo"], num_heads, False,
                     scaling, compute_dtype)
    h = ln(x, "ln3_g", "ln3_b")
    g = jnp.dot(c(h), c(p["fc1_w"]),
                preferred_element_type=jnp.float32) + p["fc1_b"].astype(jnp.float32)
    g = jax.nn.gelu(g, approximate=True)
    ff = jnp.dot(c(g), c(p["fc2_w"]),
                 preferred_element_type=jnp.float32) + p["fc2_b"].astype(jnp.float32)
    return x + ff


# ---------------------------------------------------------------------------
# deterministic synthetic parameters + demo
# ---------------------------------------------------------------------------
def make_params(key, d_model, ffn_dim):
    ks = iter(jax.random.split(key, 32))

    def w(shape, scale=0.02):
        return (scale * jax.random.normal(next(ks), shape)).astype(jnp.float32)

    D, F = d_model, ffn_dim
    return {
        "ln1_g": 1.0 + w((1, D)), "ln1_b": w((1, D)),
        "sa_wq": w((D, D)), "sa_bq": w((1, D)),
        "sa_wk": w((D, D)),                       # k_proj has no bias
        "sa_wv": w((D, D)), "sa_bv": w((1, D)),
        "sa_wo": w((D, D)), "sa_bo": w((1, D)),
        "ln2_g": 1.0 + w((1, D)), "ln2_b": w((1, D)),
        "ca_wq": w((D, D)), "ca_bq": w((1, D)),
        "ca_wk": w((D, D)),
        "ca_wv": w((D, D)), "ca_bv": w((1, D)),
        "ca_wo": w((D, D)), "ca_bo": w((1, D)),
        "ln3_g": 1.0 + w((1, D)), "ln3_b": w((1, D)),
        "fc1_w": w((D, F)), "fc1_b": w((1, F)),
        "fc2_w": w((F, D)), "fc2_b": w((1, D)),
    }


if __name__ == "__main__":
    B, T, S = 2, 8, 16          # batch, decoder seq, encoder seq
    D, H, F = 32, 4, 256        # d_model, decoder_attention_heads, ffn_dim

    root = jax.random.PRNGKey(0)
    k_x, k_enc, k_p = jax.random.split(root, 3)
    x = jax.random.normal(k_x, (B, T, D), dtype=jnp.float32)
    enc = jax.random.normal(k_enc, (B, S, D), dtype=jnp.float32)
    raw = make_params(k_p, D, F)
    prepared = prepare_params(raw, H)      # one-time host transform

    # default (capacity-aware) path: n_f == 1 at these sizes, weights resident
    run = jax.jit(lambda xx, ee, pp: whisper_decoder_layer(xx, ee, pp, H))
    out = jax.block_until_ready(run(x, enc, prepared))

    # coverage: chunked FFN (2 chunks) + multi-block online softmax (kv_block=4)
    run_chunked = jax.jit(lambda xx, ee, pp: whisper_decoder_layer(
        xx, ee, pp, H, f_chunk=128, kv_block=4))
    out_chunked = jax.block_until_ready(run_chunked(x, enc, prepared))

    # references: precision-matched (bf16 matmuls, folded scaling) and pure f32
    hd = D // H
    ref_bf16 = jax.vmap(lambda xb, eb: _decoder_layer_ref(
        xb, eb, prepared, H, 1.0, jnp.bfloat16))(x, enc)
    ref_f32 = jax.vmap(lambda xb, eb: _decoder_layer_ref(
        xb, eb, raw, H, hd ** -0.5, jnp.float32))(x, enc)

    for name, o in (("auto", out), ("chunked", out_chunked)):
        assert o.shape == (B, T, D)
        err_m = float(jnp.max(jnp.abs(o - ref_bf16)))
        err_f = float(jnp.max(jnp.abs(o - ref_f32)))
        assert err_m < 1e-2, f"{name}: vs precision-matched ref, max err {err_m}"
        assert err_f < 3e-2, f"{name}: vs f32 ref, max err {err_f}"

    print("KERNEL_OK")
</pallas_src>

<mosaic_0001>
module attributes {stable_mosaic.version = 11 : i64} {
  func.func @_decoder_layer_kernel(%arg0: i32, %arg1: i32, %arg2: memref<1x8x32xf32, #tpu.memory_space<vmem>>, %arg3: memref<1x16x32xbf16, #tpu.memory_space<vmem>>, %arg4: memref<1x32xf32, #tpu.memory_space<vmem>>, %arg5: memref<1x32xf32, #tpu.memory_space<vmem>>, %arg6: memref<32x32xbf16, #tpu.memory_space<vmem>>, %arg7: memref<1x32xf32, #tpu.memory_space<vmem>>, %arg8: memref<32x32xbf16, #tpu.memory_space<vmem>>, %arg9: memref<32x32xbf16, #tpu.memory_space<vmem>>, %arg10: memref<1x32xf32, #tpu.memory_space<vmem>>, %arg11: memref<32x32xbf16, #tpu.memory_space<vmem>>, %arg12: memref<1x32xf32, #tpu.memory_space<vmem>>, %arg13: memref<1x32xf32, #tpu.memory_space<vmem>>, %arg14: memref<1x32xf32, #tpu.memory_space<vmem>>, %arg15: memref<32x32xbf16, #tpu.memory_space<vmem>>, %arg16: memref<1x32xf32, #tpu.memory_space<vmem>>, %arg17: memref<32x32xbf16, #tpu.memory_space<vmem>>, %arg18: memref<32x32xbf16, #tpu.memory_space<vmem>>, %arg19: memref<1x32xf32, #tpu.memory_space<vmem>>, %arg20: memref<32x32xbf16, #tpu.memory_space<vmem>>, %arg21: memref<1x32xf32, #tpu.memory_space<vmem>>, %arg22: memref<1x32xf32, #tpu.memory_space<vmem>>, %arg23: memref<1x32xf32, #tpu.memory_space<vmem>>, %arg24: memref<32x256xbf16, #tpu.memory_space<vmem>>, %arg25: memref<1x256xf32, #tpu.memory_space<vmem>>, %arg26: memref<256x32xbf16, #tpu.memory_space<vmem>>, %arg27: memref<1x32xf32, #tpu.memory_space<vmem>>, %arg28: memref<1x8x32xf32, #tpu.memory_space<vmem>>) attributes {dimension_semantics = [#tpu.dimension_semantics<parallel>, #tpu.dimension_semantics<arbitrary>], iteration_bounds = array<i64: 2, 1>, scalar_prefetch = 0 : i64, scratch_operands = 0 : i64, tpu.core_type = #tpu.core_type<tc>, window_params = [{transform_indices = @transform_0, window_bounds = array<i64: 1, 8, 32>}, {transform_indices = @transform_1, window_bounds = array<i64: 1, 16, 32>}, {pipeline_mode = #tpu.pipeline_mode<synchronous>, transform_indices = @transform_2, window_bounds = array<i64: 1, 32>}, {pipeline_mode = #tpu.pipeline_mode<synchronous>, transform_indices = @transform_3, window_bounds = array<i64: 1, 32>}, {pipeline_mode = #tpu.pipeline_mode<synchronous>, transform_indices = @transform_4, window_bounds = array<i64: 32, 32>}, {pipeline_mode = #tpu.pipeline_mode<synchronous>, transform_indices = @transform_5, window_bounds = array<i64: 1, 32>}, {pipeline_mode = #tpu.pipeline_mode<synchronous>, transform_indices = @transform_6, window_bounds = array<i64: 32, 32>}, {pipeline_mode = #tpu.pipeline_mode<synchronous>, transform_indices = @transform_7, window_bounds = array<i64: 32, 32>}, {pipeline_mode = #tpu.pipeline_mode<synchronous>, transform_indices = @transform_8, window_bounds = array<i64: 1, 32>}, {pipeline_mode = #tpu.pipeline_mode<synchronous>, transform_indices = @transform_9, window_bounds = array<i64: 32, 32>}, {pipeline_mode = #tpu.pipeline_mode<synchronous>, transform_indices = @transform_10, window_bounds = array<i64: 1, 32>}, {pipeline_mode = #tpu.pipeline_mode<synchronous>, transform_indices = @transform_11, window_bounds = array<i64: 1, 32>}, {pipeline_mode = #tpu.pipeline_mode<synchronous>, transform_indices = @transform_12, window_bounds = array<i64: 1, 32>}, {pipeline_mode = #tpu.pipeline_mode<synchronous>, transform_indices = @transform_13, window_bounds = array<i64: 32, 32>}, {pipeline_mode = #tpu.pipeline_mode<synchronous>, transform_indices = @transform_14, window_bounds = array<i64: 1, 32>}, {pipeline_mode = #tpu.pipeline_mode<synchronous>, transform_indices = @transform_15, window_bounds = array<i64: 32, 32>}, {pipeline_mode = #tpu.pipeline_mode<synchronous>, transform_indices = @transform_16, window_bounds = array<i64: 32, 32>}, {pipeline_mode = #tpu.pipeline_mode<synchronous>, transform_indices = @transform_17, window_bounds = array<i64: 1, 32>}, {pipeline_mode = #tpu.pipeline_mode<synchronous>, transform_indices = @transform_18, window_bounds = array<i64: 32, 32>}, {pipeline_mode = #tpu.pipeline_mode<synchronous>, transform_indices = @transform_19, window_bounds = array<i64: 1, 32>}, {pipeline_mode = #tpu.pipeline_mode<synchronous>, transform_indices = @transform_20, window_bounds = array<i64: 1, 32>}, {pipeline_mode = #tpu.pipeline_mode<synchronous>, transform_indices = @transform_21, window_bounds = array<i64: 1, 32>}, {pipeline_mode = #tpu.pipeline_mode<synchronous>, transform_indices = @transform_22, window_bounds = array<i64: 32, 256>}, {pipeline_mode = #tpu.pipeline_mode<synchronous>, transform_indices = @transform_23, window_bounds = array<i64: 1, 256>}, {pipeline_mode = #tpu.pipeline_mode<synchronous>, transform_indices = @transform_24, window_bounds = array<i64: 256, 32>}, {pipeline_mode = #tpu.pipeline_mode<synchronous>, transform_indices = @transform_25, window_bounds = array<i64: 1, 32>}, {transform_indices = @transform_26, window_bounds = array<i64: 1, 8, 32>}]} {
    %c0 = arith.constant 0 : index
    %c0_0 = arith.constant 0 : index
    %c0_1 = arith.constant 0 : index
    %0 = vector.load %arg2[%c0, %c0_0, %c0_1] : memref<1x8x32xf32, #tpu.memory_space<vmem>>, vector<1x8x32xf32>
    %1 = vector.shape_cast %0 : vector<1x8x32xf32> to vector<8x32xf32>
    %c0_2 = arith.constant 0 : index
    %c0_3 = arith.constant 0 : index
    %c0_4 = arith.constant 0 : index
    %2 = vector.load %arg3[%c0_2, %c0_3, %c0_4] : memref<1x16x32xbf16, #tpu.memory_space<vmem>>, vector<1x16x32xbf16>
    %3 = vector.shape_cast %2 : vector<1x16x32xbf16> to vector<16x32xbf16>
    %c0_5 = arith.constant 0 : index
    %c0_6 = arith.constant 0 : index
    %4 = vector.load %arg4[%c0_5, %c0_6] : memref<1x32xf32, #tpu.memory_space<vmem>>, vector<1x32xf32>
    %c0_7 = arith.constant 0 : index
    %c0_8 = arith.constant 0 : index
    %5 = vector.load %arg5[%c0_7, %c0_8] : memref<1x32xf32, #tpu.memory_space<vmem>>, vector<1x32xf32>
    %cst = arith.constant dense<0.000000e+00> : vector<8xf32>
    %6 = vector.multi_reduction <add>, %1, %cst [1] : vector<8x32xf32> to vector<8xf32>
    %7 = vector.shape_cast %6 : vector<8xf32> to vector<8x1xf32>
    %cst_9 = arith.constant 3.200000e+01 : f32
    %8 = vector.broadcast %cst_9 : f32 to vector<8x1xf32>
    %9 = arith.divf %7, %8 : vector<8x1xf32>
    %10 = vector.broadcast %9 : vector<8x1xf32> to vector<8x32xf32>
    %11 = arith.subf %1, %10 : vector<8x32xf32>
    %12 = arith.mulf %11, %11 : vector<8x32xf32>
    %cst_10 = arith.constant dense<0.000000e+00> : vector<8xf32>
    %13 = vector.multi_reduction <add>, %12, %cst_10 [1] : vector<8x32xf32> to vector<8xf32>
    %14 = vector.shape_cast %13 : vector<8xf32> to vector<8x1xf32>
    %cst_11 = arith.constant 3.200000e+01 : f32
    %15 = vector.broadcast %cst_11 : f32 to vector<8x1xf32>
    %16 = arith.divf %14, %15 : vector<8x1xf32>
    %17 = vector.broadcast %9 : vector<8x1xf32> to vector<8x32xf32>
    %18 = arith.subf %1, %17 : vector<8x32xf32>
    %cst_12 = arith.constant 9.99999974E-6 : f32
    %19 = vector.broadcast %cst_12 : f32 to vector<8x1xf32>
    %20 = arith.addf %16, %19 : vector<8x1xf32>
    %21 = math.rsqrt %20 : vector<8x1xf32>
    %22 = vector.broadcast %21 : vector<8x1xf32> to vector<8x32xf32>
    %23 = arith.mulf %18, %22 : vector<8x32xf32>
    %24 = vector.broadcast %4 : vector<1x32xf32> to vector<8x32xf32>
    %25 = arith.mulf %23, %24 : vector<8x32xf32>
    %26 = vector.broadcast %5 : vector<1x32xf32> to vector<8x32xf32>
    %27 = arith.addf %25, %26 : vector<8x32xf32>
    %c0_13 = arith.constant 0 : index
    %c0_14 = arith.constant 0 : index
    %28 = vector.load %arg6[%c0_13, %c0_14] : memref<32x32xbf16, #tpu.memory_space<vmem>>, vector<32x32xbf16>
    %c0_15 = arith.constant 0 : index
    %c0_16 = arith.constant 0 : index
    %29 = vector.load %arg7[%c0_15, %c0_16] : memref<1x32xf32, #tpu.memory_space<vmem>>, vector<1x32xf32>
    %c0_17 = arith.constant 0 : index
    %c0_18 = arith.constant 0 : index
    %30 = vector.load %arg8[%c0_17, %c0_18] : memref<32x32xbf16, #tpu.memory_space<vmem>>, vector<32x32xbf16>
    %c0_19 = arith.constant 0 : index
    %c0_20 = arith.constant 0 : index
    %31 = vector.load %arg9[%c0_19, %c0_20] : memref<32x32xbf16, #tpu.memory_space<vmem>>, vector<32x32xbf16>
    %c0_21 = arith.constant 0 : index
    %c0_22 = arith.constant 0 : index
    %32 = vector.load %arg10[%c0_21, %c0_22] : memref<1x32xf32, #tpu.memory_space<vmem>>, vector<1x32xf32>
    %c0_23 = arith.constant 0 : index
    %c0_24 = arith.constant 0 : index
    %33 = vector.load %arg11[%c0_23, %c0_24] : memref<32x32xbf16, #tpu.memory_space<vmem>>, vector<32x32xbf16>
    %c0_25 = arith.constant 0 : index
    %c0_26 = arith.constant 0 : index
    %34 = vector.load %arg12[%c0_25, %c0_26] : memref<1x32xf32, #tpu.memory_space<vmem>>, vector<1x32xf32>
    %35 = arith.truncf %27 : vector<8x32xf32> to vector<8x32xbf16>
    %36 = arith.truncf %27 : vector<8x32xf32> to vector<8x32xbf16>
    %cst_27 = arith.constant dense<0.000000e+00> : vector<8x32xf32>
    %37 = tpu.matmul %35, %28, %cst_27 {dimension_numbers = #tpu.dot_dimension_numbers<[1], [0], [0], [1], [0, 0, 1, 1], [], []>} : vector<8x32xbf16>, vector<32x32xbf16>, vector<8x32xf32> -> vector<8x32xf32>
    %38 = vector.broadcast %29 : vector<1x32xf32> to vector<8x32xf32>
    %39 = arith.addf %37, %38 : vector<8x32xf32>
    %cst_28 = arith.constant dense<0.000000e+00> : vector<8x32xf32>
    %40 = tpu.matmul %36, %30, %cst_28 {dimension_numbers = #tpu.dot_dimension_numbers<[1], [0], [0], [1], [0, 0, 1, 1], [], []>} : vector<8x32xbf16>, vector<32x32xbf16>, vector<8x32xf32> -> vector<8x32xf32>
    %cst_29 = arith.constant dense<0.000000e+00> : vector<8x32xf32>
    %41 = tpu.matmul %36, %31, %cst_29 {dimension_numbers = #tpu.dot_dimension_numbers<[1], [0], [0], [1], [0, 0, 1, 1], [], []>} : vector<8x32xbf16>, vector<32x32xbf16>, vector<8x32xf32> -> vector<8x32xf32>
    %42 = vector.broadcast %32 : vector<1x32xf32> to vector<8x32xf32>
    %43 = arith.addf %41, %42 : vector<8x32xf32>
    %44 = vector.shape_cast %39 : vector<8x32xf32> to vector<8x4x8xf32>
    %45 = tpu.transpose %44, [1, 0, 2] : vector<8x4x8xf32> -> vector<4x8x8xf32>
    %46 = arith.truncf %45 : vector<4x8x8xf32> to vector<4x8x8xbf16>
    %47 = vector.shape_cast %40 : vector<8x32xf32> to vector<8x4x8xf32>
    %48 = tpu.transpose %47, [1, 0, 2] : vector<8x4x8xf32> -> vector<4x8x8xf32>
    %49 = arith.truncf %48 : vector<4x8x8xf32> to vector<4x8x8xbf16>
    %50 = vector.shape_cast %43 : vector<8x32xf32> to vector<8x4x8xf32>
    %51 = tpu.transpose %50, [1, 0, 2] : vector<8x4x8xf32> -> vector<4x8x8xf32>
    %52 = arith.truncf %51 : vector<4x8x8xf32> to vector<4x8x8xbf16>
    %cst_30 = arith.constant -1.000000e+30 : f32
    %53 = vector.broadcast %cst_30 : f32 to vector<4x8x1xf32>
    %cst_31 = arith.constant 0.000000e+00 : f32
    %54 = vector.broadcast %cst_31 : f32 to vector<4x8x1xf32>
    %cst_32 = arith.constant 0.000000e+00 : f32
    %55 = vector.broadcast %cst_32 : f32 to vector<4x8x8xf32>
    "tpu.trace_start"() <{level = 10 : i32, message = "htd,hsd->hts"}> : () -> ()
    %cst_33 = arith.constant dense<0.000000e+00> : vector<4x8x8xf32>
    %56 = tpu.matmul %46, %49, %cst_33 {dimension_numbers = #tpu.dot_dimension_numbers<[2], [2], [1], [1], [0, 0, 0, 1, 1, 1], [0], [0]>} : vector<4x8x8xbf16>, vector<4x8x8xbf16>, vector<4x8x8xf32> -> vector<4x8x8xf32>
    "tpu.trace_stop"() : () -> ()
    %57 = tpu.iota {dimensions = array<i32: 0>} : vector<8x8xi32>
    %58 = tpu.iota {dimensions = array<i32: 1>} : vector<8x8xi32>
    %c0_i32 = arith.constant 0 : i32
    %59 = vector.broadcast %c0_i32 : i32 to vector<8x8xi32>
    %60 = arith.addi %58, %59 : vector<8x8xi32>
    %61 = arith.cmpi sle, %60, %57 : vector<8x8xi32>
    %62 = vector.shape_cast %61 : vector<8x8xi1> to vector<1x8x8xi1>
    %cst_34 = arith.constant -1.000000e+30 : f32
    %63 = vector.shape_cast %62 : vector<1x8x8xi1> to vector<1x8x8xi1>
    %64 = vector.broadcast %63 : vector<1x8x8xi1> to vector<4x8x8xi1>
    %65 = vector.broadcast %cst_34 : f32 to vector<4x8x8xf32>
    %66 = arith.select %64, %56, %65 : vector<4x8x8xi1>, vector<4x8x8xf32>
    %cst_35 = arith.constant dense<0xFF800000> : vector<4x8xf32>
    %67 = vector.multi_reduction <maximumf>, %66, %cst_35 [2] : vector<4x8x8xf32> to vector<4x8xf32>
    %68 = vector.shape_cast %67 : vector<4x8xf32> to vector<4x8x1xf32>
    %69 = arith.maximumf %53, %68 : vector<4x8x1xf32>
    %70 = arith.subf %53, %69 : vector<4x8x1xf32>
    %71 = math.exp %70 : vector<4x8x1xf32>
    %72 = vector.broadcast %69 : vector<4x8x1xf32> to vector<4x8x8xf32>
    %73 = arith.subf %66, %72 : vector<4x8x8xf32>
    %74 = math.exp %73 : vector<4x8x8xf32>
    %75 = arith.mulf %71, %54 : vector<4x8x1xf32>
    %cst_36 = arith.constant dense<0.000000e+00> : vector<4x8xf32>
    %76 = vector.multi_reduction <add>, %74, %cst_36 [2] : vector<4x8x8xf32> to vector<4x8xf32>
    %77 = vector.shape_cast %76 : vector<4x8xf32> to vector<4x8x1xf32>
    %78 = arith.addf %75, %77 : vector<4x8x1xf32>
    %79 = vector.broadcast %71 : vector<4x8x1xf32> to vector<4x8x8xf32>
    %80 = arith.mulf %79, %55 : vector<4x8x8xf32>
    %81 = arith.truncf %74 : vector<4x8x8xf32> to vector<4x8x8xbf16>
    "tpu.trace_start"() <{level = 10 : i32, message = "hts,hsd->htd"}> : () -> ()
    %cst_37 = arith.constant dense<0.000000e+00> : vector<4x8x8xf32>
    %82 = tpu.matmul %81, %52, %cst_37 {dimension_numbers = #tpu.dot_dimension_numbers<[2], [1], [1], [2], [0, 0, 0, 1, 1, 2], [0], [0]>} : vector<4x8x8xbf16>, vector<4x8x8xbf16>, vector<4x8x8xf32> -> vector<4x8x8xf32>
    "tpu.trace_stop"() : () -> ()
    %83 = arith.addf %80, %82 : vector<4x8x8xf32>
    %84 = tpu.reciprocal %78 {approx = true} : vector<4x8x1xf32> -> vector<4x8x1xf32>
    %85 = vector.broadcast %84 : vector<4x8x1xf32> to vector<4x8x8xf32>
    %86 = arith.mulf %83, %85 : vector<4x8x8xf32>
    %87 = tpu.transpose %86, [1, 0, 2] : vector<4x8x8xf32> -> vector<8x4x8xf32>
    %88 = vector.shape_cast %87 : vector<8x4x8xf32> to vector<8x32xf32>
    %89 = arith.truncf %88 : vector<8x32xf32> to vector<8x32xbf16>
    %cst_38 = arith.constant dense<0.000000e+00> : vector<8x32xf32>
    %90 = tpu.matmul %89, %33, %cst_38 {dimension_numbers = #tpu.dot_dimension_numbers<[1], [0], [0], [1], [0, 0, 1, 1], [], []>} : vector<8x32xbf16>, vector<32x32xbf16>, vector<8x32xf32> -> vector<8x32xf32>
    %91 = vector.broadcast %34 : vector<1x32xf32> to vector<8x32xf32>
    %92 = arith.addf %90, %91 : vector<8x32xf32>
    %93 = arith.addf %1, %92 : vector<8x32xf32>
    %c0_39 = arith.constant 0 : index
    %c0_40 = arith.constant 0 : index
    %94 = vector.load %arg13[%c0_39, %c0_40] : memref<1x32xf32, #tpu.memory_space<vmem>>, vector<1x32xf32>
    %c0_41 = arith.constant 0 : index
    %c0_42 = arith.constant 0 : index
    %95 = vector.load %arg14[%c0_41, %c0_42] : memref<1x32xf32, #tpu.memory_space<vmem>>, vector<1x32xf32>
    %cst_43 = arith.constant dense<0.000000e+00> : vector<8xf32>
    %96 = vector.multi_reduction <add>, %93, %cst_43 [1] : vector<8x32xf32> to vector<8xf32>
    %97 = vector.shape_cast %96 : vector<8xf32> to vector<8x1xf32>
    %cst_44 = arith.constant 3.200000e+01 : f32
    %98 = vector.broadcast %cst_44 : f32 to vector<8x1xf32>
    %99 = arith.divf %97, %98 : vector<8x1xf32>
    %100 = vector.broadcast %99 : vector<8x1xf32> to vector<8x32xf32>
    %101 = arith.subf %93, %100 : vector<8x32xf32>
    %102 = arith.mulf %101, %101 : vector<8x32xf32>
    %cst_45 = arith.constant dense<0.000000e+00> : vector<8xf32>
    %103 = vector.multi_reduction <add>, %102, %cst_45 [1] : vector<8x32xf32> to vector<8xf32>
    %104 = vector.shape_cast %103 : vector<8xf32> to vector<8x1xf32>
    %cst_46 = arith.constant 3.200000e+01 : f32
    %105 = vector.broadcast %cst_46 : f32 to vector<8x1xf32>
    %106 = arith.divf %104, %105 : vector<8x1xf32>
    %107 = vector.broadcast %99 : vector<8x1xf32> to vector<8x32xf32>
    %108 = arith.subf %93, %107 : vector<8x32xf32>
    %cst_47 = arith.constant 9.99999974E-6 : f32
    %109 = vector.broadcast %cst_47 : f32 to vector<8x1xf32>
    %110 = arith.addf %106, %109 : vector<8x1xf32>
    %111 = math.rsqrt %110 : vector<8x1xf32>
    %112 = vector.broadcast %111 : vector<8x1xf32> to vector<8x32xf32>
    %113 = arith.mulf %108, %112 : vector<8x32xf32>
    %114 = vector.broadcast %94 : vector<1x32xf32> to vector<8x32xf32>
    %115 = arith.mulf %113, %114 : vector<8x32xf32>
    %116 = vector.broadcast %95 : vector<1x32xf32> to vector<8x32xf32>
    %117 = arith.addf %115, %116 : vector<8x32xf32>
    %c0_48 = arith.constant 0 : index
    %c0_49 = arith.constant 0 : index
    %118 = vector.load %arg15[%c0_48, %c0_49] : memref<32x32xbf16, #tpu.memory_space<vmem>>, vector<32x32xbf16>
    %c0_50 = arith.constant 0 : index
    %c0_51 = arith.constant 0 : index
    %119 = vector.load %arg16[%c0_50, %c0_51] : memref<1x32xf32, #tpu.memory_space<vmem>>, vector<1x32xf32>
    %c0_52 = arith.constant 0 : index
    %c0_53 = arith.constant 0 : index
    %120 = vector.load %arg17[%c0_52, %c0_53] : memref<32x32xbf16, #tpu.memory_space<vmem>>, vector<32x32xbf16>
    %c0_54 = arith.constant 0 : index
    %c0_55 = arith.constant 0 : index
    %121 = vector.load %arg18[%c0_54, %c0_55] : memref<32x32xbf16, #tpu.memory_space<vmem>>, vector<32x32xbf16>
    %c0_56 = arith.constant 0 : index
    %c0_57 = arith.constant 0 : index
    %122 = vector.load %arg19[%c0_56, %c0_57] : memref<1x32xf32, #tpu.memory_space<vmem>>, vector<1x32xf32>
    %c0_58 = arith.constant 0 : index
    %c0_59 = arith.constant 0 : index
    %123 = vector.load %arg20[%c0_58, %c0_59] : memref<32x32xbf16, #tpu.memory_space<vmem>>, vector<32x32xbf16>
    %c0_60 = arith.constant 0 : index
    %c0_61 = arith.constant 0 : index
    %124 = vector.load %arg21[%c0_60, %c0_61] : memref<1x32xf32, #tpu.memory_space<vmem>>, vector<1x32xf32>
    %125 = arith.truncf %117 : vector<8x32xf32> to vector<8x32xbf16>
    %cst_62 = arith.constant dense<0.000000e+00> : vector<8x32xf32>
    %126 = tpu.matmul %125, %118, %cst_62 {dimension_numbers = #tpu.dot_dimension_numbers<[1], [0], [0], [1], [0, 0, 1, 1], [], []>} : vector<8x32xbf16>, vector<32x32xbf16>, vector<8x32xf32> -> vector<8x32xf32>
    %127 = vector.broadcast %119 : vector<1x32xf32> to vector<8x32xf32>
    %128 = arith.addf %126, %127 : vector<8x32xf32>
    %cst_63 = arith.constant dense<0.000000e+00> : vector<16x32xf32>
    %129 = tpu.matmul %3, %120, %cst_63 {dimension_numbers = #tpu.dot_dimension_numbers<[1], [0], [0], [1], [0, 0, 1, 1], [], []>} : vector<16x32xbf16>, vector<32x32xbf16>, vector<16x32xf32> -> vector<16x32xf32>
    %cst_64 = arith.constant dense<0.000000e+00> : vector<16x32xf32>
    %130 = tpu.matmul %3, %121, %cst_64 {dimension_numbers = #tpu.dot_dimension_numbers<[1], [0], [0], [1], [0, 0, 1, 1], [], []>} : vector<16x32xbf16>, vector<32x32xbf16>, vector<16x32xf32> -> vector<16x32xf32>
    %131 = vector.broadcast %122 : vector<1x32xf32> to vector<16x32xf32>
    %132 = arith.addf %130, %131 : vector<16x32xf32>
    %133 = vector.shape_cast %128 : vector<8x32xf32> to vector<8x4x8xf32>
    %134 = tpu.transpose %133, [1, 0, 2] : vector<8x4x8xf32> -> vector<4x8x8xf32>
    %135 = arith.truncf %134 : vector<4x8x8xf32> to vector<4x8x8xbf16>
    %136 = vector.shape_cast %129 : vector<16x32xf32> to vector<16x4x8xf32>
    %137 = tpu.transpose %136, [1, 0, 2] : vector<16x4x8xf32> -> vector<4x16x8xf32>
    %138 = arith.truncf %137 : vector<4x16x8xf32> to vector<4x16x8xbf16>
    %139 = vector.shape_cast %132 : vector<16x32xf32> to vector<16x4x8xf32>
    %140 = tpu.transpose %139, [1, 0, 2] : vector<16x4x8xf32> -> vector<4x16x8xf32>
    %141 = arith.truncf %140 : vector<4x16x8xf32> to vector<4x16x8xbf16>
    %cst_65 = arith.constant -1.000000e+30 : f32
    %142 = vector.broadcast %cst_65 : f32 to vector<4x8x1xf32>
    %cst_66 = arith.constant 0.000000e+00 : f32
    %143 = vector.broadcast %cst_66 : f32 to vector<4x8x1xf32>
    %cst_67 = arith.constant 0.000000e+00 : f32
    %144 = vector.broadcast %cst_67 : f32 to vector<4x8x8xf32>
    "tpu.trace_start"() <{level = 10 : i32, message = "htd,hsd->hts"}> : () -> ()
    %cst_68 = arith.constant dense<0.000000e+00> : vector<4x8x16xf32>
    %145 = tpu.matmul %135, %138, %cst_68 {dimension_numbers = #tpu.dot_dimension_numbers<[2], [2], [1], [1], [0, 0, 0, 1, 1, 1], [0], [0]>} : vector<4x8x8xbf16>, vector<4x16x8xbf16>, vector<4x8x16xf32> -> vector<4x8x16xf32>
    "tpu.trace_stop"() : () -> ()
    %cst_69 = arith.constant dense<0xFF800000> : vector<4x8xf32>
    %146 = vector.multi_reduction <maximumf>, %145, %cst_69 [2] : vector<4x8x16xf32> to vector<4x8xf32>
    %147 = vector.shape_cast %146 : vector<4x8xf32> to vector<4x8x1xf32>
    %148 = arith.maximumf %142, %147 : vector<4x8x1xf32>
    %149 = arith.subf %142, %148 : vector<4x8x1xf32>
    %150 = math.exp %149 : vector<4x8x1xf32>
    %151 = vector.broadcast %148 : vector<4x8x1xf32> to vector<4x8x16xf32>
    %152 = arith.subf %145, %151 : vector<4x8x16xf32>
    %153 = math.exp %152 : vector<4x8x16xf32>
    %154 = arith.mulf %150, %143 : vector<4x8x1xf32>
    %cst_70 = arith.constant dense<0.000000e+00> : vector<4x8xf32>
    %155 = vector.multi_reduction <add>, %153, %cst_70 [2] : vector<4x8x16xf32> to vector<4x8xf32>
    %156 = vector.shape_cast %155 : vector<4x8xf32> to vector<4x8x1xf32>
    %157 = arith.addf %154, %156 : vector<4x8x1xf32>
    %158 = vector.broadcast %150 : vector<4x8x1xf32> to vector<4x8x8xf32>
    %159 = arith.mulf %158, %144 : vector<4x8x8xf32>
    %160 = arith.truncf %153 : vector<4x8x16xf32> to vector<4x8x16xbf16>
    "tpu.trace_start"() <{level = 10 : i32, message = "hts,hsd->htd"}> : () -> ()
    %cst_71 = arith.constant dense<0.000000e+00> : vector<4x8x8xf32>
    %161 = tpu.matmul %160, %141, %cst_71 {dimension_numbers = #tpu.dot_dimension_numbers<[2], [1], [1], [2], [0, 0, 0, 1, 1, 2], [0], [0]>} : vector<4x8x16xbf16>, vector<4x16x8xbf16>, vector<4x8x8xf32> -> vector<4x8x8xf32>
    "tpu.trace_stop"() : () -> ()
    %162 = arith.addf %159, %161 : vector<4x8x8xf32>
    %163 = tpu.reciprocal %157 {approx = true} : vector<4x8x1xf32> -> vector<4x8x1xf32>
    %164 = vector.broadcast %163 : vector<4x8x1xf32> to vector<4x8x8xf32>
    %165 = arith.mulf %162, %164 : vector<4x8x8xf32>
    %166 = tpu.transpose %165, [1, 0, 2] : vector<4x8x8xf32> -> vector<8x4x8xf32>
    %167 = vector.shape_cast %166 : vector<8x4x8xf32> to vector<8x32xf32>
    %168 = arith.truncf %167 : vector<8x32xf32> to vector<8x32xbf16>
    %cst_72 = arith.constant dense<0.000000e+00> : vector<8x32xf32>
    %169 = tpu.matmul %168, %123, %cst_72 {dimension_numbers = #tpu.dot_dimension_numbers<[1], [0], [0], [1], [0, 0, 1, 1], [], []>} : vector<8x32xbf16>, vector<32x32xbf16>, vector<8x32xf32> -> vector<8x32xf32>
    %170 = vector.broadcast %124 : vector<1x32xf32> to vector<8x32xf32>
    %171 = arith.addf %169, %170 : vector<8x32xf32>
    %172 = arith.addf %93, %171 : vector<8x32xf32>
    %c0_73 = arith.constant 0 : index
    %c0_74 = arith.constant 0 : index
    %173 = vector.load %arg22[%c0_73, %c0_74] : memref<1x32xf32, #tpu.memory_space<vmem>>, vector<1x32xf32>
    %c0_75 = arith.constant 0 : index
    %c0_76 = arith.constant 0 : index
    %174 = vector.load %arg23[%c0_75, %c0_76] : memref<1x32xf32, #tpu.memory_space<vmem>>, vector<1x32xf32>
    %cst_77 = arith.constant dense<0.000000e+00> : vector<8xf32>
    %175 = vector.multi_reduction <add>, %172, %cst_77 [1] : vector<8x32xf32> to vector<8xf32>
    %176 = vector.shape_cast %175 : vector<8xf32> to vector<8x1xf32>
    %cst_78 = arith.constant 3.200000e+01 : f32
    %177 = vector.broadcast %cst_78 : f32 to vector<8x1xf32>
    %178 = arith.divf %176, %177 : vector<8x1xf32>
    %179 = vector.broadcast %178 : vector<8x1xf32> to vector<8x32xf32>
    %180 = arith.subf %172, %179 : vector<8x32xf32>
    %181 = arith.mulf %180, %180 : vector<8x32xf32>
    %cst_79 = arith.constant dense<0.000000e+00> : vector<8xf32>
    %182 = vector.multi_reduction <add>, %181, %cst_79 [1] : vector<8x32xf32> to vector<8xf32>
    %183 = vector.shape_cast %182 : vector<8xf32> to vector<8x1xf32>
    %cst_80 = arith.constant 3.200000e+01 : f32
    %184 = vector.broadcast %cst_80 : f32 to vector<8x1xf32>
    %185 = arith.divf %183, %184 : vector<8x1xf32>
    %186 = vector.broadcast %178 : vector<8x1xf32> to vector<8x32xf32>
    %187 = arith.subf %172, %186 : vector<8x32xf32>
    %cst_81 = arith.constant 9.99999974E-6 : f32
    %188 = vector.broadcast %cst_81 : f32 to vector<8x1xf32>
    %189 = arith.addf %185, %188 : vector<8x1xf32>
    %190 = math.rsqrt %189 : vector<8x1xf32>
    %191 = vector.broadcast %190 : vector<8x1xf32> to vector<8x32xf32>
    %192 = arith.mulf %187, %191 : vector<8x32xf32>
    %193 = vector.broadcast %173 : vector<1x32xf32> to vector<8x32xf32>
    %194 = arith.mulf %192, %193 : vector<8x32xf32>
    %195 = vector.broadcast %174 : vector<1x32xf32> to vector<8x32xf32>
    %196 = arith.addf %194, %195 : vector<8x32xf32>
    %197 = arith.truncf %196 : vector<8x32xf32> to vector<8x32xbf16>
    %c0_82 = arith.constant 0 : index
    %c0_83 = arith.constant 0 : index
    %198 = vector.load %arg24[%c0_82, %c0_83] : memref<32x256xbf16, #tpu.memory_space<vmem>>, vector<32x256xbf16>
    %cst_84 = arith.constant dense<0.000000e+00> : vector<8x256xf32>
    %199 = tpu.matmul %197, %198, %cst_84 {dimension_numbers = #tpu.dot_dimension_numbers<[1], [0], [0], [1], [0, 0, 1, 1], [], []>} : vector<8x32xbf16>, vector<32x256xbf16>, vector<8x256xf32> -> vector<8x256xf32>
    %c0_85 = arith.constant 0 : index
    %c0_86 = arith.constant 0 : index
    %200 = vector.load %arg25[%c0_85, %c0_86] : memref<1x256xf32, #tpu.memory_space<vmem>>, vector<1x256xf32>
    %201 = vector.broadcast %200 : vector<1x256xf32> to vector<8x256xf32>
    %202 = arith.addf %199, %201 : vector<8x256xf32>
    %203 = arith.mulf %202, %202 : vector<8x256xf32>
    %204 = arith.mulf %202, %203 : vector<8x256xf32>
    %cst_87 = arith.constant 4.471500e-02 : f32
    %205 = vector.broadcast %cst_87 : f32 to vector<8x256xf32>
    %206 = arith.mulf %205, %204 : vector<8x256xf32>
    %207 = arith.addf %202, %206 : vector<8x256xf32>
    %cst_88 = arith.constant 0.797884583 : f32
    %208 = vector.broadcast %cst_88 : f32 to vector<8x256xf32>
    %209 = arith.mulf %208, %207 : vector<8x256xf32>
    %210 = math.tanh %209 : vector<8x256xf32>
    %cst_89 = arith.constant 1.000000e+00 : f32
    %211 = vector.broadcast %cst_89 : f32 to vector<8x256xf32>
    %212 = arith.addf %211, %210 : vector<8x256xf32>
    %cst_90 = arith.constant 5.000000e-01 : f32
    %213 = vector.broadcast %cst_90 : f32 to vector<8x256xf32>
    %214 = arith.mulf %213, %212 : vector<8x256xf32>
    %215 = arith.mulf %202, %214 : vector<8x256xf32>
    %216 = arith.truncf %215 : vector<8x256xf32> to vector<8x256xbf16>
    %c0_91 = arith.constant 0 : index
    %c0_92 = arith.constant 0 : index
    %217 = vector.load %arg26[%c0_91, %c0_92] : memref<256x32xbf16, #tpu.memory_space<vmem>>, vector<256x32xbf16>
    %cst_93 = arith.constant dense<0.000000e+00> : vector<8x32xf32>
    %218 = tpu.matmul %216, %217, %cst_93 {dimension_numbers = #tpu.dot_dimension_numbers<[1], [0], [0], [1], [0, 0, 1, 1], [], []>} : vector<8x256xbf16>, vector<256x32xbf16>, vector<8x32xf32> -> vector<8x32xf32>
    %c0_94 = arith.constant 0 : index
    %c0_95 = arith.constant 0 : index
    %219 = vector.load %arg27[%c0_94, %c0_95] : memref<1x32xf32, #tpu.memory_space<vmem>>, vector<1x32xf32>
    %220 = vector.broadcast %219 : vector<1x32xf32> to vector<8x32xf32>
    %221 = arith.addf %218, %220 : vector<8x32xf32>
    %222 = arith.addf %172, %221 : vector<8x32xf32>
    %c0_96 = arith.constant 0 : index
    %c0_97 = arith.constant 0 : index
    %c0_98 = arith.constant 0 : index
    %223 = vector.load %arg28[%c0_96, %c0_97, %c0_98] : memref<1x8x32xf32, #tpu.memory_space<vmem>>, vector<1x8x32xf32>
    %224 = vector.shape_cast %223 : vector<1x8x32xf32> to vector<8x32xf32>
    %225 = vector.shape_cast %222 : vector<8x32xf32> to vector<1x8x32xf32>
    tpu.vector_store %arg28[%c0_96, %c0_97, %c0_98], %225 {strides = array<i32>} : memref<1x8x32xf32, #tpu.memory_space<vmem>>, vector<1x8x32xf32>,
    return
  }
  func.func @transform_0(%arg0: i32, %arg1: i32) -> (i32, i32, i32) {
    %c0_i32 = arith.constant 0 : i32
    %c0_i32_0 = arith.constant 0 : i32
    %c0_i32_1 = arith.constant 0 : i32
    return %arg0, %c0_i32, %c0_i32_0 : i32, i32, i32
  }
  func.func @transform_1(%arg0: i32, %arg1: i32) -> (i32, i32, i32) {
    %c0_i32 = arith.constant 0 : i32
    %c0_i32_0 = arith.constant 0 : i32
    %c0_i32_1 = arith.constant 0 : i32
    return %arg0, %c0_i32, %c0_i32_0 : i32, i32, i32
  }
  func.func @transform_2(%arg0: i32, %arg1: i32) -> (i32, i32) {
    %c0_i32 = arith.constant 0 : i32
    %c0_i32_0 = arith.constant 0 : i32
    %c0_i32_1 = arith.constant 0 : i32
    return %c0_i32, %c0_i32_0 : i32, i32
  }
  func.func @transform_3(%arg0: i32, %arg1: i32) -> (i32, i32) {
    %c0_i32 = arith.constant 0 : i32
    %c0_i32_0 = arith.constant 0 : i32
    %c0_i32_1 = arith.constant 0 : i32
    return %c0_i32, %c0_i32_0 : i32, i32
  }
  func.func @transform_4(%arg0: i32, %arg1: i32) -> (i32, i32) {
    %c0_i32 = arith.constant 0 : i32
    %c0_i32_0 = arith.constant 0 : i32
    %c0_i32_1 = arith.constant 0 : i32
    return %c0_i32, %c0_i32_0 : i32, i32
  }
  func.func @transform_5(%arg0: i32, %arg1: i32) -> (i32, i32) {
    %c0_i32 = arith.constant 0 : i32
    %c0_i32_0 = arith.constant 0 : i32
    %c0_i32_1 = arith.constant 0 : i32
    return %c0_i32, %c0_i32_0 : i32, i32
  }
  func.func @transform_6(%arg0: i32, %arg1: i32) -> (i32, i32) {
    %c0_i32 = arith.constant 0 : i32
    %c0_i32_0 = arith.constant 0 : i32
    %c0_i32_1 = arith.constant 0 : i32
    return %c0_i32, %c0_i32_0 : i32, i32
  }
  func.func @transform_7(%arg0: i32, %arg1: i32) -> (i32, i32) {
    %c0_i32 = arith.constant 0 : i32
    %c0_i32_0 = arith.constant 0 : i32
    %c0_i32_1 = arith.constant 0 : i32
    return %c0_i32, %c0_i32_0 : i32, i32
  }
  func.func @transform_8(%arg0: i32, %arg1: i32) -> (i32, i32) {
    %c0_i32 = arith.constant 0 : i32
    %c0_i32_0 = arith.constant 0 : i32
    %c0_i32_1 = arith.constant 0 : i32
    return %c0_i32, %c0_i32_0 : i32, i32
  }
  func.func @transform_9(%arg0: i32, %arg1: i32) -> (i32, i32) {
    %c0_i32 = arith.constant 0 : i32
    %c0_i32_0 = arith.constant 0 : i32
    %c0_i32_1 = arith.constant 0 : i32
    return %c0_i32, %c0_i32_0 : i32, i32
  }
  func.func @transform_10(%arg0: i32, %arg1: i32) -> (i32, i32) {
    %c0_i32 = arith.constant 0 : i32
    %c0_i32_0 = arith.constant 0 : i32
    %c0_i32_1 = arith.constant 0 : i32
    return %c0_i32, %c0_i32_0 : i32, i32
  }
  func.func @transform_11(%arg0: i32, %arg1: i32) -> (i32, i32) {
    %c0_i32 = arith.constant 0 : i32
    %c0_i32_0 = arith.constant 0 : i32
    %c0_i32_1 = arith.constant 0 : i32
    return %c0_i32, %c0_i32_0 : i32, i32
  }
  func.func @transform_12(%arg0: i32, %arg1: i32) -> (i32, i32) {
    %c0_i32 = arith.constant 0 : i32
    %c0_i32_0 = arith.constant 0 : i32
    %c0_i32_1 = arith.constant 0 : i32
    return %c0_i32, %c0_i32_0 : i32, i32
  }
  func.func @transform_13(%arg0: i32, %arg1: i32) -> (i32, i32) {
    %c0_i32 = arith.constant 0 : i32
    %c0_i32_0 = arith.constant 0 : i32
    %c0_i32_1 = arith.constant 0 : i32
    return %c0_i32, %c0_i32_0 : i32, i32
  }
  func.func @transform_14(%arg0: i32, %arg1: i32) -> (i32, i32) {
    %c0_i32 = arith.constant 0 : i32
    %c0_i32_0 = arith.constant 0 : i32
    %c0_i32_1 = arith.constant 0 : i32
    return %c0_i32, %c0_i32_0 : i32, i32
  }
  func.func @transform_15(%arg0: i32, %arg1: i32) -> (i32, i32) {
    %c0_i32 = arith.constant 0 : i32
    %c0_i32_0 = arith.constant 0 : i32
    %c0_i32_1 = arith.constant 0 : i32
    return %c0_i32, %c0_i32_0 : i32, i32
  }
  func.func @transform_16(%arg0: i32, %arg1: i32) -> (i32, i32) {
    %c0_i32 = arith.constant 0 : i32
    %c0_i32_0 = arith.constant 0 : i32
    %c0_i32_1 = arith.constant 0 : i32
    return %c0_i32, %c0_i32_0 : i32, i32
  }
  func.func @transform_17(%arg0: i32, %arg1: i32) -> (i32, i32) {
    %c0_i32 = arith.constant 0 : i32
    %c0_i32_0 = arith.constant 0 : i32
    %c0_i32_1 = arith.constant 0 : i32
    return %c0_i32, %c0_i32_0 : i32, i32
  }
  func.func @transform_18(%arg0: i32, %arg1: i32) -> (i32, i32) {
    %c0_i32 = arith.constant 0 : i32
    %c0_i32_0 = arith.constant 0 : i32
    %c0_i32_1 = arith.constant 0 : i32
    return %c0_i32, %c0_i32_0 : i32, i32
  }
  func.func @transform_19(%arg0: i32, %arg1: i32) -> (i32, i32) {
    %c0_i32 = arith.constant 0 : i32
    %c0_i32_0 = arith.constant 0 : i32
    %c0_i32_1 = arith.constant 0 : i32
    return %c0_i32, %c0_i32_0 : i32, i32
  }
  func.func @transform_20(%arg0: i32, %arg1: i32) -> (i32, i32) {
    %c0_i32 = arith.constant 0 : i32
    %c0_i32_0 = arith.constant 0 : i32
    %c0_i32_1 = arith.constant 0 : i32
    return %c0_i32, %c0_i32_0 : i32, i32
  }
  func.func @transform_21(%arg0: i32, %arg1: i32) -> (i32, i32) {
    %c0_i32 = arith.constant 0 : i32
    %c0_i32_0 = arith.constant 0 : i32
    %c0_i32_1 = arith.constant 0 : i32
    return %c0_i32, %c0_i32_0 : i32, i32
  }
  func.func @transform_22(%arg0: i32, %arg1: i32) -> (i32, i32) {
    %c0_i32 = arith.constant 0 : i32
    %c0_i32_0 = arith.constant 0 : i32
    %c0_i32_1 = arith.constant 0 : i32
    return %c0_i32, %c0_i32_0 : i32, i32
  }
  func.func @transform_23(%arg0: i32, %arg1: i32) -> (i32, i32) {
    %c0_i32 = arith.constant 0 : i32
    %c0_i32_0 = arith.constant 0 : i32
    %c0_i32_1 = arith.constant 0 : i32
    return %c0_i32, %c0_i32_0 : i32, i32
  }
  func.func @transform_24(%arg0: i32, %arg1: i32) -> (i32, i32) {
    %c0_i32 = arith.constant 0 : i32
    %c0_i32_0 = arith.constant 0 : i32
    %c0_i32_1 = arith.constant 0 : i32
    return %c0_i32, %c0_i32_0 : i32, i32
  }
  func.func @transform_25(%arg0: i32, %arg1: i32) -> (i32, i32) {
    %c0_i32 = arith.constant 0 : i32
    %c0_i32_0 = arith.constant 0 : i32
    %c0_i32_1 = arith.constant 0 : i32
    return %c0_i32, %c0_i32_0 : i32, i32
  }
  func.func @transform_26(%arg0: i32, %arg1: i32) -> (i32, i32, i32) {
    %c0_i32 = arith.constant 0 : i32
    %c0_i32_0 = arith.constant 0 : i32
    %c0_i32_1 = arith.constant 0 : i32
    return %arg0, %c0_i32, %c0_i32_0 : i32, i32, i32
  }
}

</mosaic_0001>

<llo_original>
// kernel: _lambda_.1
$region0: #{_lambda_.1}
  #allocation0 [shape = 'u32[]', space=smem, size = 0x4, offset = 0x4, fixed_abs, tag = 'smem constant byte address 0x4 - core index']
  #allocation1 [shape = 'u32[144,128]{1,0:T(1,128)}', space=vmem, size = 0x12000, scoped, tag = 'internal scratch']
  %s0 = inlined_call_operand.vmem [shape: f32[2,8,32], index: 0, kind: input, shape index: {}]
  %s1 = inlined_call_operand.vmem [shape: bf16[2,16,32], index: 1, kind: input, shape index: {}]
  %s2 = inlined_call_operand.vmem [shape: f32[1,32], index: 2, kind: input, shape index: {}]
  %s3 = inlined_call_operand.vmem [shape: f32[1,32], index: 3, kind: input, shape index: {}]
  %s4 = inlined_call_operand.vmem [shape: bf16[32,32], index: 4, kind: input, shape index: {}]
  %s5 = inlined_call_operand.vmem [shape: f32[1,32], index: 5, kind: input, shape index: {}]
  %s6 = inlined_call_operand.vmem [shape: bf16[32,32], index: 6, kind: input, shape index: {}]
  %s7 = inlined_call_operand.vmem [shape: bf16[32,32], index: 7, kind: input, shape index: {}]
  %s8 = inlined_call_operand.vmem [shape: f32[1,32], index: 8, kind: input, shape index: {}]
  %s9 = inlined_call_operand.vmem [shape: bf16[32,32], index: 9, kind: input, shape index: {}]
  %s10 = inlined_call_operand.vmem [shape: f32[1,32], index: 10, kind: input, shape index: {}]
  %s11 = inlined_call_operand.vmem [shape: f32[1,32], index: 11, kind: input, shape index: {}]
  %s12 = inlined_call_operand.vmem [shape: f32[1,32], index: 12, kind: input, shape index: {}]
  %s13 = inlined_call_operand.vmem [shape: bf16[32,32], index: 13, kind: input, shape index: {}]
  %s14 = inlined_call_operand.vmem [shape: f32[1,32], index: 14, kind: input, shape index: {}]
  %s15 = inlined_call_operand.vmem [shape: bf16[32,32], index: 15, kind: input, shape index: {}]
  %s16 = inlined_call_operand.vmem [shape: bf16[32,32], index: 16, kind: input, shape index: {}]
  %s17 = inlined_call_operand.vmem [shape: f32[1,32], index: 17, kind: input, shape index: {}]
  %s18 = inlined_call_operand.vmem [shape: bf16[32,32], index: 18, kind: input, shape index: {}]
  %s19 = inlined_call_operand.vmem [shape: f32[1,32], index: 19, kind: input, shape index: {}]
  %s20 = inlined_call_operand.vmem [shape: f32[1,32], index: 20, kind: input, shape index: {}]
  %s21 = inlined_call_operand.vmem [shape: f32[1,32], index: 21, kind: input, shape index: {}]
  %s22 = inlined_call_operand.vmem [shape: bf16[32,256], index: 22, kind: input, shape index: {}]
  %s23 = inlined_call_operand.vmem [shape: f32[1,256], index: 23, kind: input, shape index: {}]
  %s24 = inlined_call_operand.vmem [shape: bf16[256,32], index: 24, kind: input, shape index: {}]
  %s25 = inlined_call_operand.vmem [shape: f32[1,32], index: 25, kind: input, shape index: {}]
  %s26 = inlined_call_operand.hbm [shape: f32[2,8,32], index: 26, kind: output, shape index: {}]
  %s27 = sld [smem:[#allocation0]]
  $region137: #{_lambda_.1} parent=0
    _
  %s29 = ssub.s32 1, %s27
  %s30 = scalar_select 0, %s29, %s27
  $region1: #{_lambda_.1} parent=0
    #allocation2 [shape = 'u8[8192]{0}', space=vmem, size = 0x2000, scoped, tag = 'output window, operand 0']
    #allocation3 [shape = 's32[2]{0}', space=sflag, size = 0x8, scoped, tag = 'scoped memory for _lambda_.1']
    %31 = vsyncpa [#allocation3], 0
    %s32 = scalar_lea.sflag [#allocation3], 1
    %33 = vsyncpa %s32, 0
    loop: start=0, step=1, limit=4
    $region2: #{_lambda_.1} parent=1 // loop_pre_header
      _
    $region3: #{_lambda_.1} parent=1 // loop_header
      %s35 = sphi 0, %s39
      %p36 = scmp.ge.s32.totalorder %s35, 4
      %s42 = sphi 0, %s54
      %s43 = sphi 0, %s50
      %s44 = sphi 0, %s42
      %s45 = sphi 0, %s43
      %s46 = sphi 0, %s44
      %s47 = sphi 0, %s45
      %s57 = sphi 0, %s59
      %s60 = sphi 0, %s57
      %s61 = sphi 0, %s60
      %s77 = sphi 0, %s61
      %s83 = sphi 0, %s85
      %s86 = sphi 0, %s83
      %s87 = sphi 0, %s86
      %s103 = sphi 0, %s87
      %s107 = sphi 0, %s107
      %s109 = sphi 0, %s107
      %s110 = sphi 0, %s109
      %s124 = sphi 0, %s110
      %s128 = sphi 0, %s128
      %s130 = sphi 0, %s128
      %s131 = sphi 0, %s130
      %s145 = sphi 0, %s131
      %s149 = sphi 0, %s149
      %s151 = sphi 0, %s149
      %s152 = sphi 0, %s151
      %s166 = sphi 0, %s152
      %s170 = sphi 0, %s170
      %s172 = sphi 0, %s170
      %s173 = sphi 0, %s172
      %s187 = sphi 0, %s173
      %s191 = sphi 0, %s191
      %s193 = sphi 0, %s191
      %s194 = sphi 0, %s193
      %s208 = sphi 0, %s194
      %s212 = sphi 0, %s212
      %s214 = sphi 0, %s212
      %s215 = sphi 0, %s214
      %s229 = sphi 0, %s215
      %s233 = sphi 0, %s233
      %s235 = sphi 0, %s233
      %s236 = sphi 0, %s235
      %s250 = sphi 0, %s236
      %s254 = sphi 0, %s254
      %s256 = sphi 0, %s254
      %s257 = sphi 0, %s256
      %s271 = sphi 0, %s257
      %s275 = sphi 0, %s275
      %s277 = sphi 0, %s275
      %s278 = sphi 0, %s277
      %s292 = sphi 0, %s278
      %s296 = sphi 0, %s296
      %s298 = sphi 0, %s296
      %s299 = sphi 0, %s298
      %s313 = sphi 0, %s299
      %s317 = sphi 0, %s317
      %s319 = sphi 0, %s317
      %s320 = sphi 0, %s319
      %s334 = sphi 0, %s320
      %s338 = sphi 0, %s338
      %s340 = sphi 0, %s338
      %s341 = sphi 0, %s340
      %s355 = sphi 0, %s341
      %s359 = sphi 0, %s359
      %s361 = sphi 0, %s359
      %s362 = sphi 0, %s361
      %s376 = sphi 0, %s362
      %s380 = sphi 0, %s380
      %s382 = sphi 0, %s380
      %s383 = sphi 0, %s382
      %s397 = sphi 0, %s383
      %s401 = sphi 0, %s401
      %s403 = sphi 0, %s401
      %s404 = sphi 0, %s403
      %s418 = sphi 0, %s404
      %s422 = sphi 0, %s422
      %s424 = sphi 0, %s422
      %s425 = sphi 0, %s424
      %s439 = sphi 0, %s425
      %s443 = sphi 0, %s443
      %s445 = sphi 0, %s443
      %s446 = sphi 0, %s445
      %s460 = sphi 0, %s446
      %s464 = sphi 0, %s464
      %s466 = sphi 0, %s464
      %s467 = sphi 0, %s466
      %s481 = sphi 0, %s467
      %s485 = sphi 0, %s485
      %s487 = sphi 0, %s485
      %s488 = sphi 0, %s487
      %s502 = sphi 0, %s488
      %s506 = sphi 0, %s506
      %s508 = sphi 0, %s506
      %s509 = sphi 0, %s508
      %s523 = sphi 0, %s509
      %s527 = sphi 0, %s527
      %s529 = sphi 0, %s527
      %s530 = sphi 0, %s529
      %s544 = sphi 0, %s530
      %s548 = sphi 0, %s548
      %s550 = sphi 0, %s548
      %s551 = sphi 0, %s550
      %s565 = sphi 0, %s551
      %s569 = sphi 0, %s569
      %s571 = sphi 0, %s569
      %s572 = sphi 0, %s571
      %s586 = sphi 0, %s572
      %s590 = sphi 0, %s590
      %s592 = sphi 0, %s590
      %s593 = sphi 0, %s592
      %s607 = sphi 0, %s593
      %s613 = sphi 0, %s615
      %s616 = sphi 0, %s613
      %s617 = sphi 0, %s616
      %s633 = sphi 0, %s617
    $region4: #{_lambda_.1} parent=1 // loop_header_branch
      %38 = sbr.rel (%p36) target = $region8
    $region5: #{_lambda_.1} parent=1 // loop_body
      %s40 = ssub.s32 %s35, 1
      %s41 = ssub.s32 %s35, 2
      %s48 = sadd.s32 1, %s43
      %p49 = scmp.ge.s32.totalorder %s48, 1
      %s50 = scalar_select %p49, 0, %s48
      %s51 = sadd.s32 1, %s42
      %s52 = scalar_select %p49, %s51, %s42
      %p53 = scmp.ge.s32.totalorder %s52, 2
      %s54 = scalar_select %p53, 0, %s52
      %s55 = ssub.s32 %s42, %s54
      %p56 = scmp.eq.s32.totalorder %s55, 0
      %s58 = sadd.s32 %s57, 1
      %s59 = scalar_select %p56, %s57, %s58
      %p62 = pneg %p56
      %p63 = scmp.eq.s32.totalorder %s35, 1
      %p64 = por %p62, %p63
      %p65 = scmp.ne.s32.totalorder %s57, %s60
      %p66 = scmp.eq.s32.totalorder %s35, 0
      %p67 = por %p65, %p66
      %p68 = scmp.ne.s32.totalorder %s57, %s60
      %p69 = scmp.eq.s32.totalorder %s40, 1
      %p70 = por %p68, %p69
      %p71 = scmp.ne.s32.totalorder %s60, %s61
      %p72 = scmp.eq.s32.totalorder %s40, 0
      %p73 = por %p71, %p72
      %p74 = scmp.ne.s32.totalorder %s60, %s61
      %p75 = scmp.eq.s32.totalorder %s41, 1
      %p76 = por %p74, %p75
      %p78 = scmp.ne.s32.totalorder %s61, %s77
      %p79 = scmp.eq.s32.totalorder %s41, 0
      %p80 = por %p78, %p79
      %s81 = ssub.s32 %s42, %s54
      %p82 = scmp.eq.s32.totalorder %s81, 0
      %s84 = sadd.s32 %s83, 1
      %s85 = scalar_select %p82, %s83, %s84
      %p88 = pneg %p82
      %p89 = scmp.eq.s32.totalorder %s35, 1
      %p90 = por %p88, %p89
      %p91 = scmp.ne.s32.totalorder %s83, %s86
      %p92 = scmp.eq.s32.totalorder %s35, 0
      %p93 = por %p91, %p92
      %p94 = scmp.ne.s32.totalorder %s83, %s86
      %p95 = scmp.eq.s32.totalorder %s40, 1
      %p96 = por %p94, %p95
      %p97 = scmp.ne.s32.totalorder %s86, %s87
      %p98 = scmp.eq.s32.totalorder %s40, 0
      %p99 = por %p97, %p98
      %p100 = scmp.ne.s32.totalorder %s86, %s87
      %p101 = scmp.eq.s32.totalorder %s41, 1
      %p102 = por %p100, %p101
      %p104 = scmp.ne.s32.totalorder %s87, %s103
      %p105 = scmp.eq.s32.totalorder %s41, 0
      %p106 = por %p104, %p105
      %s108 = sadd.s32 %s107, 1
      %p111 = scmp.eq.s32.totalorder %s35, 1
      %p112 = scmp.ne.s32.totalorder %s107, %s109
      %p113 = scmp.eq.s32.totalorder %s35, 0
      %p114 = por %p112, %p113
      %p115 = scmp.ne.s32.totalorder %s107, %s109
      %p116 = scmp.eq.s32.totalorder %s40, 1
      %p117 = por %p115, %p116
      %p118 = scmp.ne.s32.totalorder %s109, %s110
      %p119 = scmp.eq.s32.totalorder %s40, 0
      %p120 = por %p118, %p119
      %p121 = scmp.ne.s32.totalorder %s109, %s110
      %p122 = scmp.eq.s32.totalorder %s41, 1
      %p123 = por %p121, %p122
      %p125 = scmp.ne.s32.totalorder %s110, %s124
      %p126 = scmp.eq.s32.totalorder %s41, 0
      %p127 = por %p125, %p126
      %s129 = sadd.s32 %s128, 1
      %p132 = scmp.eq.s32.totalorder %s35, 1
      %p133 = scmp.ne.s32.totalorder %s128, %s130
      %p134 = scmp.eq.s32.totalorder %s35, 0
      %p135 = por %p133, %p134
      %p136 = scmp.ne.s32.totalorder %s128, %s130
      %p137 = scmp.eq.s32.totalorder %s40, 1
      %p138 = por %p136, %p137
      %p139 = scmp.ne.s32.totalorder %s130, %s131
      %p140 = scmp.eq.s32.totalorder %s40, 0
      %p141 = por %p139, %p140
      %p142 = scmp.ne.s32.totalorder %s130, %s131
      %p143 = scmp.eq.s32.totalorder %s41, 1
      %p144 = por %p142, %p143
      %p146 = scmp.ne.s32.totalorder %s131, %s145
      %p147 = scmp.eq.s32.totalorder %s41, 0
      %p148 = por %p146, %p147
      %s150 = sadd.s32 %s149, 1
      %p153 = scmp.eq.s32.totalorder %s35, 1
      %p154 = scmp.ne.s32.totalorder %s149, %s151
      %p155 = scmp.eq.s32.totalorder %s35, 0
      %p156 = por %p154, %p155
      %p157 = scmp.ne.s32.totalorder %s149, %s151
      %p158 = scmp.eq.s32.totalorder %s40, 1
      %p159 = por %p157, %p158
      %p160 = scmp.ne.s32.totalorder %s151, %s152
      %p161 = scmp.eq.s32.totalorder %s40, 0
      %p162 = por %p160, %p161
      %p163 = scmp.ne.s32.totalorder %s151, %s152
      %p164 = scmp.eq.s32.totalorder %s41, 1
      %p165 = por %p163, %p164
      %p167 = scmp.ne.s32.totalorder %s152, %s166
      %p168 = scmp.eq.s32.totalorder %s41, 0
      %p169 = por %p167, %p168
      %s171 = sadd.s32 %s170, 1
      %p174 = scmp.eq.s32.totalorder %s35, 1
      %p175 = scmp.ne.s32.totalorder %s170, %s172
      %p176 = scmp.eq.s32.totalorder %s35, 0
      %p177 = por %p175, %p176
      %p178 = scmp.ne.s32.totalorder %s170, %s172
      %p179 = scmp.eq.s32.totalorder %s40, 1
      %p180 = por %p178, %p179
      %p181 = scmp.ne.s32.totalorder %s172, %s173
      %p182 = scmp.eq.s32.totalorder %s40, 0
      %p183 = por %p181, %p182
      %p184 = scmp.ne.s32.totalorder %s172, %s173
      %p185 = scmp.eq.s32.totalorder %s41, 1
      %p186 = por %p184, %p185
      %p188 = scmp.ne.s32.totalorder %s173, %s187
      %p189 = scmp.eq.s32.totalorder %s41, 0
      %p190 = por %p188, %p189
      %s192 = sadd.s32 %s191, 1
      %p195 = scmp.eq.s32.totalorder %s35, 1
      %p196 = scmp.ne.s32.totalorder %s191, %s193
      %p197 = scmp.eq.s32.totalorder %s35, 0
      %p198 = por %p196, %p197
      %p199 = scmp.ne.s32.totalorder %s191, %s193
      %p200 = scmp.eq.s32.totalorder %s40, 1
      %p201 = por %p199, %p200
      %p202 = scmp.ne.s32.totalorder %s193, %s194
      %p203 = scmp.eq.s32.totalorder %s40, 0
      %p204 = por %p202, %p203
      %p205 = scmp.ne.s32.totalorder %s193, %s194
      %p206 = scmp.eq.s32.totalorder %s41, 1
      %p207 = por %p205, %p206
      %p209 = scmp.ne.s32.totalorder %s194, %s208
      %p210 = scmp.eq.s32.totalorder %s41, 0
      %p211 = por %p209, %p210
      %s213 = sadd.s32 %s212, 1
      %p216 = scmp.eq.s32.totalorder %s35, 1
      %p217 = scmp.ne.s32.totalorder %s212, %s214
      %p218 = scmp.eq.s32.totalorder %s35, 0
      %p219 = por %p217, %p218
      %p220 = scmp.ne.s32.totalorder %s212, %s214
      %p221 = scmp.eq.s32.totalorder %s40, 1
      %p222 = por %p220, %p221
      %p223 = scmp.ne.s32.totalorder %s214, %s215
      %p224 = scmp.eq.s32.totalorder %s40, 0
      %p225 = por %p223, %p224
      %p226 = scmp.ne.s32.totalorder %s214, %s215
      %p227 = scmp.eq.s32.totalorder %s41, 1
      %p228 = por %p226, %p227
      %p230 = scmp.ne.s32.totalorder %s215, %s229
      %p231 = scmp.eq.s32.totalorder %s41, 0
      %p232 = por %p230, %p231
      %s234 = sadd.s32 %s233, 1
      %p237 = scmp.eq.s32.totalorder %s35, 1
      %p238 = scmp.ne.s32.totalorder %s233, %s235
      %p239 = scmp.eq.s32.totalorder %s35, 0
      %p240 = por %p238, %p239
      %p241 = scmp.ne.s32.totalorder %s233, %s235
      %p242 = scmp.eq.s32.totalorder %s40, 1
      %p243 = por %p241, %p242
      %p244 = scmp.ne.s32.totalorder %s235, %s236
      %p245 = scmp.eq.s32.totalorder %s40, 0
      %p246 = por %p244, %p245
      %p247 = scmp.ne.s32.totalorder %s235, %s236
      %p248 = scmp.eq.s32.totalorder %s41, 1
      %p249 = por %p247, %p248
      %p251 = scmp.ne.s32.totalorder %s236, %s250
      %p252 = scmp.eq.s32.totalorder %s41, 0
      %p253 = por %p251, %p252
      %s255 = sadd.s32 %s254, 1
      %p258 = scmp.eq.s32.totalorder %s35, 1
      %p259 = scmp.ne.s32.totalorder %s254, %s256
      %p260 = scmp.eq.s32.totalorder %s35, 0
      %p261 = por %p259, %p260
      %p262 = scmp.ne.s32.totalorder %s254, %s256
      %p263 = scmp.eq.s32.totalorder %s40, 1
      %p264 = por %p262, %p263
      %p265 = scmp.ne.s32.totalorder %s256, %s257
      %p266 = scmp.eq.s32.totalorder %s40, 0
      %p267 = por %p265, %p266
      %p268 = scmp.ne.s32.totalorder %s256, %s257
      %p269 = scmp.eq.s32.totalorder %s41, 1
      %p270 = por %p268, %p269
      %p272 = scmp.ne.s32.totalorder %s257, %s271
      %p273 = scmp.eq.s32.totalorder %s41, 0
      %p274 = por %p272, %p273
      %s276 = sadd.s32 %s275, 1
      %p279 = scmp.eq.s32.totalorder %s35, 1
      %p280 = scmp.ne.s32.totalorder %s275, %s277
      %p281 = scmp.eq.s32.totalorder %s35, 0
      %p282 = por %p280, %p281
      %p283 = scmp.ne.s32.totalorder %s275, %s277
      %p284 = scmp.eq.s32.totalorder %s40, 1
      %p285 = por %p283, %p284
      %p286 = scmp.ne.s32.totalorder %s277, %s278
      %p287 = scmp.eq.s32.totalorder %s40, 0
      %p288 = por %p286, %p287
      %p289 = scmp.ne.s32.totalorder %s277, %s278
      %p290 = scmp.eq.s32.totalorder %s41, 1
      %p291 = por %p289, %p290
      %p293 = scmp.ne.s32.totalorder %s278, %s292
      %p294 = scmp.eq.s32.totalorder %s41, 0
      %p295 = por %p293, %p294
      %s297 = sadd.s32 %s296, 1
      %p300 = scmp.eq.s32.totalorder %s35, 1
      %p301 = scmp.ne.s32.totalorder %s296, %s298
      %p302 = scmp.eq.s32.totalorder %s35, 0
      %p303 = por %p301, %p302
      %p304 = scmp.ne.s32.totalorder %s296, %s298
      %p305 = scmp.eq.s32.totalorder %s40, 1
      %p306 = por %p304, %p305
      %p307 = scmp.ne.s32.totalorder %s298, %s299
      %p308 = scmp.eq.s32.totalorder %s40, 0
      %p309 = por %p307, %p308
      %p310 = scmp.ne.s32.totalorder %s298, %s299
      %p311 = scmp.eq.s32.totalorder %s41, 1
      %p312 = por %p310, %p311
      %p314 = scmp.ne.s32.totalorder %s299, %s313
      %p315 = scmp.eq.s32.totalorder %s41, 0
      %p316 = por %p314, %p315
      %s318 = sadd.s32 %s317, 1
      %p321 = scmp.eq.s32.totalorder %s35, 1
      %p322 = scmp.ne.s32.totalorder %s317, %s319
      %p323 = scmp.eq.s32.totalorder %s35, 0
      %p324 = por %p322, %p323
      %p325 = scmp.ne.s32.totalorder %s317, %s319
      %p326 = scmp.eq.s32.totalorder %s40, 1
      %p327 = por %p325, %p326
      %p328 = scmp.ne.s32.totalorder %s319, %s320
      %p329 = scmp.eq.s32.totalorder %s40, 0
      %p330 = por %p328, %p329
      %p331 = scmp.ne.s32.totalorder %s319, %s320
      %p332 = scmp.eq.s32.totalorder %s41, 1
      %p333 = por %p331, %p332
      %p335 = scmp.ne.s32.totalorder %s320, %s334
      %p336 = scmp.eq.s32.totalorder %s41, 0
      %p337 = por %p335, %p336
      %s339 = sadd.s32 %s338, 1
      %p342 = scmp.eq.s32.totalorder %s35, 1
      %p343 = scmp.ne.s32.totalorder %s338, %s340
      %p344 = scmp.eq.s32.totalorder %s35, 0
      %p345 = por %p343, %p344
      %p346 = scmp.ne.s32.totalorder %s338, %s340
      %p347 = scmp.eq.s32.totalorder %s40, 1
      %p348 = por %p346, %p347
      %p349 = scmp.ne.s32.totalorder %s340, %s341
      %p350 = scmp.eq.s32.totalorder %s40, 0
      %p351 = por %p349, %p350
      %p352 = scmp.ne.s32.totalorder %s340, %s341
      %p353 = scmp.eq.s32.totalorder %s41, 1
      %p354 = por %p352, %p353
      %p356 = scmp.ne.s32.totalorder %s341, %s355
      %p357 = scmp.eq.s32.totalorder %s41, 0
      %p358 = por %p356, %p357
      %s360 = sadd.s32 %s359, 1
      %p363 = scmp.eq.s32.totalorder %s35, 1
      %p364 = scmp.ne.s32.totalorder %s359, %s361
      %p365 = scmp.eq.s32.totalorder %s35, 0
      %p366 = por %p364, %p365
      %p367 = scmp.ne.s32.totalorder %s359, %s361
      %p368 = scmp.eq.s32.totalorder %s40, 1
      %p369 = por %p367, %p368
      %p370 = scmp.ne.s32.totalorder %s361, %s362
      %p371 = scmp.eq.s32.totalorder %s40, 0
      %p372 = por %p370, %p371
      %p373 = scmp.ne.s32.totalorder %s361, %s362
      %p374 = scmp.eq.s32.totalorder %s41, 1
      %p375 = por %p373, %p374
      %p377 = scmp.ne.s32.totalorder %s362, %s376
      %p378 = scmp.eq.s32.totalorder %s41, 0
      %p379 = por %p377, %p378
      %s381 = sadd.s32 %s380, 1
      %p384 = scmp.eq.s32.totalorder %s35, 1
      %p385 = scmp.ne.s32.totalorder %s380, %s382
      %p386 = scmp.eq.s32.totalorder %s35, 0
      %p387 = por %p385, %p386
      %p388 = scmp.ne.s32.totalorder %s380, %s382
      %p389 = scmp.eq.s32.totalorder %s40, 1
      %p390 = por %p388, %p389
      %p391 = scmp.ne.s32.totalorder %s382, %s383
      %p392 = scmp.eq.s32.totalorder %s40, 0
      %p393 = por %p391, %p392
      %p394 = scmp.ne.s32.totalorder %s382, %s383
      %p395 = scmp.eq.s32.totalorder %s41, 1
      %p396 = por %p394, %p395
      %p398 = scmp.ne.s32.totalorder %s383, %s397
      %p399 = scmp.eq.s32.totalorder %s41, 0
      %p400 = por %p398, %p399
      %s402 = sadd.s32 %s401, 1
      %p405 = scmp.eq.s32.totalorder %s35, 1
      %p406 = scmp.ne.s32.totalorder %s401, %s403
      %p407 = scmp.eq.s32.totalorder %s35, 0
      %p408 = por %p406, %p407
      %p409 = scmp.ne.s32.totalorder %s401, %s403
      %p410 = scmp.eq.s32.totalorder %s40, 1
      %p411 = por %p409, %p410
      %p412 = scmp.ne.s32.totalorder %s403, %s404
      %p413 = scmp.eq.s32.totalorder %s40, 0
      %p414 = por %p412, %p413
      %p415 = scmp.ne.s32.totalorder %s403, %s404
      %p416 = scmp.eq.s32.totalorder %s41, 1
      %p417 = por %p415, %p416
      %p419 = scmp.ne.s32.totalorder %s404, %s418
      %p420 = scmp.eq.s32.totalorder %s41, 0
      %p421 = por %p419, %p420
      %s423 = sadd.s32 %s422, 1
      %p426 = scmp.eq.s32.totalorder %s35, 1
      %p427 = scmp.ne.s32.totalorder %s422, %s424
      %p428 = scmp.eq.s32.totalorder %s35, 0
      %p429 = por %p427, %p428
      %p430 = scmp.ne.s32.totalorder %s422, %s424
      %p431 = scmp.eq.s32.totalorder %s40, 1
      %p432 = por %p430, %p431
      %p433 = scmp.ne.s32.totalorder %s424, %s425
      %p434 = scmp.eq.s32.totalorder %s40, 0
      %p435 = por %p433, %p434
      %p436 = scmp.ne.s32.totalorder %s424, %s425
      %p437 = scmp.eq.s32.totalorder %s41, 1
      %p438 = por %p436, %p437
      %p440 = scmp.ne.s32.totalorder %s425, %s439
      %p441 = scmp.eq.s32.totalorder %s41, 0
      %p442 = por %p440, %p441
      %s444 = sadd.s32 %s443, 1
      %p447 = scmp.eq.s32.totalorder %s35, 1
      %p448 = scmp.ne.s32.totalorder %s443, %s445
      %p449 = scmp.eq.s32.totalorder %s35, 0
      %p450 = por %p448, %p449
      %p451 = scmp.ne.s32.totalorder %s443, %s445
      %p452 = scmp.eq.s32.totalorder %s40, 1
      %p453 = por %p451, %p452
      %p454 = scmp.ne.s32.totalorder %s445, %s446
      %p455 = scmp.eq.s32.totalorder %s40, 0
      %p456 = por %p454, %p455
      %p457 = scmp.ne.s32.totalorder %s445, %s446
      %p458 = scmp.eq.s32.totalorder %s41, 1
      %p459 = por %p457, %p458
      %p461 = scmp.ne.s32.totalorder %s446, %s460
      %p462 = scmp.eq.s32.totalorder %s41, 0
      %p463 = por %p461, %p462
      %s465 = sadd.s32 %s464, 1
      %p468 = scmp.eq.s32.totalorder %s35, 1
      %p469 = scmp.ne.s32.totalorder %s464, %s466
      %p470 = scmp.eq.s32.totalorder %s35, 0
      %p471 = por %p469, %p470
      %p472 = scmp.ne.s32.totalorder %s464, %s466
      %p473 = scmp.eq.s32.totalorder %s40, 1
      %p474 = por %p472, %p473
      %p475 = scmp.ne.s32.totalorder %s466, %s467
      %p476 = scmp.eq.s32.totalorder %s40, 0
      %p477 = por %p475, %p476
      %p478 = scmp.ne.s32.totalorder %s466, %s467
      %p479 = scmp.eq.s32.totalorder %s41, 1
      %p480 = por %p478, %p479
      %p482 = scmp.ne.s32.totalorder %s467, %s481
      %p483 = scmp.eq.s32.totalorder %s41, 0
      %p484 = por %p482, %p483
      %s486 = sadd.s32 %s485, 1
      %p489 = scmp.eq.s32.totalorder %s35, 1
      %p490 = scmp.ne.s32.totalorder %s485, %s487
      %p491 = scmp.eq.s32.totalorder %s35, 0
      %p492 = por %p490, %p491
      %p493 = scmp.ne.s32.totalorder %s485, %s487
      %p494 = scmp.eq.s32.totalorder %s40, 1
      %p495 = por %p493, %p494
      %p496 = scmp.ne.s32.totalorder %s487, %s488
      %p497 = scmp.eq.s32.totalorder %s40, 0
      %p498 = por %p496, %p497
      %p499 = scmp.ne.s32.totalorder %s487, %s488
      %p500 = scmp.eq.s32.totalorder %s41, 1
      %p501 = por %p499, %p500
      %p503 = scmp.ne.s32.totalorder %s488, %s502
      %p504 = scmp.eq.s32.totalorder %s41, 0
      %p505 = por %p503, %p504
      %s507 = sadd.s32 %s506, 1
      %p510 = scmp.eq.s32.totalorder %s35, 1
      %p511 = scmp.ne.s32.totalorder %s506, %s508
      %p512 = scmp.eq.s32.totalorder %s35, 0
      %p513 = por %p511, %p512
      %p514 = scmp.ne.s32.totalorder %s506, %s508
      %p515 = scmp.eq.s32.totalorder %s40, 1
      %p516 = por %p514, %p515
      %p517 = scmp.ne.s32.totalorder %s508, %s509
      %p518 = scmp.eq.s32.totalorder %s40, 0
      %p519 = por %p517, %p518
      %p520 = scmp.ne.s32.totalorder %s508, %s509
      %p521 = scmp.eq.s32.totalorder %s41, 1
      %p522 = por %p520, %p521
      %p524 = scmp.ne.s32.totalorder %s509, %s523
      %p525 = scmp.eq.s32.totalorder %s41, 0
      %p526 = por %p524, %p525
      %s528 = sadd.s32 %s527, 1
      %p531 = scmp.eq.s32.totalorder %s35, 1
      %p532 = scmp.ne.s32.totalorder %s527, %s529
      %p533 = scmp.eq.s32.totalorder %s35, 0
      %p534 = por %p532, %p533
      %p535 = scmp.ne.s32.totalorder %s527, %s529
      %p536 = scmp.eq.s32.totalorder %s40, 1
      %p537 = por %p535, %p536
      %p538 = scmp.ne.s32.totalorder %s529, %s530
      %p539 = scmp.eq.s32.totalorder %s40, 0
      %p540 = por %p538, %p539
      %p541 = scmp.ne.s32.totalorder %s529, %s530
      %p542 = scmp.eq.s32.totalorder %s41, 1
      %p543 = por %p541, %p542
      %p545 = scmp.ne.s32.totalorder %s530, %s544
      %p546 = scmp.eq.s32.totalorder %s41, 0
      %p547 = por %p545, %p546
      %s549 = sadd.s32 %s548, 1
      %p552 = scmp.eq.s32.totalorder %s35, 1
      %p553 = scmp.ne.s32.totalorder %s548, %s550
      %p554 = scmp.eq.s32.totalorder %s35, 0
      %p555 = por %p553, %p554
      %p556 = scmp.ne.s32.totalorder %s548, %s550
      %p557 = scmp.eq.s32.totalorder %s40, 1
      %p558 = por %p556, %p557
      %p559 = scmp.ne.s32.totalorder %s550, %s551
      %p560 = scmp.eq.s32.totalorder %s40, 0
      %p561 = por %p559, %p560
      %p562 = scmp.ne.s32.totalorder %s550, %s551
      %p563 = scmp.eq.s32.totalorder %s41, 1
      %p564 = por %p562, %p563
      %p566 = scmp.ne.s32.totalorder %s551, %s565
      %p567 = scmp.eq.s32.totalorder %s41, 0
      %p568 = por %p566, %p567
      %s570 = sadd.s32 %s569, 1
      %p573 = scmp.eq.s32.totalorder %s35, 1
      %p574 = scmp.ne.s32.totalorder %s569, %s571
      %p575 = scmp.eq.s32.totalorder %s35, 0
      %p576 = por %p574, %p575
      %p577 = scmp.ne.s32.totalorder %s569, %s571
      %p578 = scmp.eq.s32.totalorder %s40, 1
      %p579 = por %p577, %p578
      %p580 = scmp.ne.s32.totalorder %s571, %s572
      %p581 = scmp.eq.s32.totalorder %s40, 0
      %p582 = por %p580, %p581
      %p583 = scmp.ne.s32.totalorder %s571, %s572
      %p584 = scmp.eq.s32.totalorder %s41, 1
      %p585 = por %p583, %p584
      %p587 = scmp.ne.s32.totalorder %s572, %s586
      %p588 = scmp.eq.s32.totalorder %s41, 0
      %p589 = por %p587, %p588
      %s591 = sadd.s32 %s590, 1
      %p594 = scmp.eq.s32.totalorder %s35, 1
      %p595 = scmp.ne.s32.totalorder %s590, %s592
      %p596 = scmp.eq.s32.totalorder %s35, 0
      %p597 = por %p595, %p596
      %p598 = scmp.ne.s32.totalorder %s590, %s592
      %p599 = scmp.eq.s32.totalorder %s40, 1
      %p600 = por %p598, %p599
      %p601 = scmp.ne.s32.totalorder %s592, %s593
      %p602 = scmp.eq.s32.totalorder %s40, 0
      %p603 = por %p601, %p602
      %p604 = scmp.ne.s32.totalorder %s592, %s593
      %p605 = scmp.eq.s32.totalorder %s41, 1
      %p606 = por %p604, %p605
      %p608 = scmp.ne.s32.totalorder %s593, %s607
      %p609 = scmp.eq.s32.totalorder %s41, 0
      %p610 = por %p608, %p609
      %s611 = ssub.s32 %s42, %s54
      %p612 = scmp.eq.s32.totalorder %s611, 0
      %s614 = sadd.s32 %s613, 1
      %s615 = scalar_select %p612, %s613, %s614
      %p618 = pneg %p612
      %p619 = scmp.eq.s32.totalorder %s35, 1
      %p620 = por %p618, %p619
      %p621 = scmp.ne.s32.totalorder %s613, %s616
      %p622 = scmp.eq.s32.totalorder %s35, 0
      %p623 = por %p621, %p622
      %p624 = scmp.ne.s32.totalorder %s613, %s616
      %p625 = scmp.eq.s32.totalorder %s40, 1
      %p626 = por %p624, %p625
      %p627 = scmp.ne.s32.totalorder %s616, %s617
      %p628 = scmp.eq.s32.totalorder %s40, 0
      %p629 = por %p627, %p628
      %p630 = scmp.ne.s32.totalorder %s616, %s617
      %p631 = scmp.eq.s32.totalorder %s41, 1
      %p632 = por %p630, %p631
      %p634 = scmp.ne.s32.totalorder %s617, %s633
      %p635 = scmp.eq.s32.totalorder %s41, 0
      %p636 = por %p634, %p635
      %p637 = scmp.le.s32.totalorder 1, %s35
      %p638 = scmp.lt.s32.totalorder %s35, 3
      %p639 = pnand %p637, %p638
      %p640 = pneg %p639
      // Predicated region
      $region9: #{_lambda_.1} parent=5 // pred_check
        _
      $region10: #{_lambda_.1} parent=5 // pred_check_branch
        %642 = sbr.rel (%p639) target = $region12
      $region11: #{_lambda_.1} parent=5 // pred_region
        %s643 = ssub.s32 %s35, 1
        // Predicated region
        $region13: #{_lambda_.1} parent=11 // pred_check
          %p644 = pneg %p120
        $region14: #{_lambda_.1} parent=11 // pred_check_branch
          %646 = sbr.rel (%p644) target = $region16
        $region15: #{_lambda_.1} parent=11 // pred_region
          _
        $region16: #{_lambda_.1} parent=11 // pred_fallthru
          _
        // Predicated region
        $region17: #{_lambda_.1} parent=11 // pred_check
          %p647 = pneg %p141
        $region18: #{_lambda_.1} parent=11 // pred_check_branch
          %649 = sbr.rel (%p647) target = $region20
        $region19: #{_lambda_.1} parent=11 // pred_region
          _
        $region20: #{_lambda_.1} parent=11 // pred_fallthru
          _
        // Predicated region
        $region21: #{_lambda_.1} parent=11 // pred_check
          %p650 = pneg %p162
        $region22: #{_lambda_.1} parent=11 // pred_check_branch
          %652 = sbr.rel (%p650) target = $region24
        $region23: #{_lambda_.1} parent=11 // pred_region
          _
        $region24: #{_lambda_.1} parent=11 // pred_fallthru
          _
        // Predicated region
        $region25: #{_lambda_.1} parent=11 // pred_check
          %p653 = pneg %p183
        $region26: #{_lambda_.1} parent=11 // pred_check_branch
          %655 = sbr.rel (%p653) target = $region28
        $region27: #{_lambda_.1} parent=11 // pred_region
          _
        $region28: #{_lambda_.1} parent=11 // pred_fallthru
          _
        // Predicated region
        $region29: #{_lambda_.1} parent=11 // pred_check
          %p656 = pneg %p204
        $region30: #{_lambda_.1} parent=11 // pred_check_branch
          %658 = sbr.rel (%p656) target = $region32
        $region31: #{_lambda_.1} parent=11 // pred_region
          _
        $region32: #{_lambda_.1} parent=11 // pred_fallthru
          _
        // Predicated region
        $region33: #{_lambda_.1} parent=11 // pred_check
          %p659 = pneg %p225
        $region34: #{_lambda_.1} parent=11 // pred_check_branch
          %661 = sbr.rel (%p659) target = $region36
        $region35: #{_lambda_.1} parent=11 // pred_region
          _
        $region36: #{_lambda_.1} parent=11 // pred_fallthru
          _
        // Predicated region
        $region37: #{_lambda_.1} parent=11 // pred_check
          %p662 = pneg %p246
        $region38: #{_lambda_.1} parent=11 // pred_check_branch
          %664 = sbr.rel (%p662) target = $region40
        $region39: #{_lambda_.1} parent=11 // pred_region
          _
        $region40: #{_lambda_.1} parent=11 // pred_fallthru
          _
        // Predicated region
        $region41: #{_lambda_.1} parent=11 // pred_check
          %p665 = pneg %p267
        $region42: #{_lambda_.1} parent=11 // pred_check_branch
          %667 = sbr.rel (%p665) target = $region44
        $region43: #{_lambda_.1} parent=11 // pred_region
          _
        $region44: #{_lambda_.1} parent=11 // pred_fallthru
          _
        // Predicated region
        $region45: #{_lambda_.1} parent=11 // pred_check
          %p668 = pneg %p288
        $region46: #{_lambda_.1} parent=11 // pred_check_branch
          %670 = sbr.rel (%p668) target = $region48
        $region47: #{_lambda_.1} parent=11 // pred_region
          _
        $region48: #{_lambda_.1} parent=11 // pred_fallthru
          _
        // Predicated region
        $region49: #{_lambda_.1} parent=11 // pred_check
          %p671 = pneg %p309
        $region50: #{_lambda_.1} parent=11 // pred_check_branch
          %673 = sbr.rel (%p671) target = $region52
        $region51: #{_lambda_.1} parent=11 // pred_region
          _
        $region52: #{_lambda_.1} parent=11 // pred_fallthru
          _
        // Predicated region
        $region53: #{_lambda_.1} parent=11 // pred_check
          %p674 = pneg %p330
        $region54: #{_lambda_.1} parent=11 // pred_check_branch
          %676 = sbr.rel (%p674) target = $region56
        $region55: #{_lambda_.1} parent=11 // pred_region
          _
        $region56: #{_lambda_.1} parent=11 // pred_fallthru
          _
        // Predicated region
        $region57: #{_lambda_.1} parent=11 // pred_check
          %p677 = pneg %p351
        $region58: #{_lambda_.1} parent=11 // pred_check_branch
          %679 = sbr.rel (%p677) target = $region60
        $region59: #{_lambda_.1} parent=11 // pred_region
          _
        $region60: #{_lambda_.1} parent=11 // pred_fallthru
          _
        // Predicated region
        $region61: #{_lambda_.1} parent=11 // pred_check
          %p680 = pneg %p372
        $region62: #{_lambda_.1} parent=11 // pred_check_branch
          %682 = sbr.rel (%p680) target = $region64
        $region63: #{_lambda_.1} parent=11 // pred_region
          _
        $region64: #{_lambda_.1} parent=11 // pred_fallthru
          _
        // Predicated region
        $region65: #{_lambda_.1} parent=11 // pred_check
          %p683 = pneg %p393
        $region66: #{_lambda_.1} parent=11 // pred_check_branch
          %685 = sbr.rel (%p683) target = $region68
        $region67: #{_lambda_.1} parent=11 // pred_region
          _
        $region68: #{_lambda_.1} parent=11 // pred_fallthru
          _
        // Predicated region
        $region69: #{_lambda_.1} parent=11 // pred_check
          %p686 = pneg %p414
        $region70: #{_lambda_.1} parent=11 // pred_check_branch
          %688 = sbr.rel (%p686) target = $region72
        $region71: #{_lambda_.1} parent=11 // pred_region
          _
        $region72: #{_lambda_.1} parent=11 // pred_fallthru
          _
        // Predicated region
        $region73: #{_lambda_.1} parent=11 // pred_check
          %p689 = pneg %p435
        $region74: #{_lambda_.1} parent=11 // pred_check_branch
          %691 = sbr.rel (%p689) target = $region76
        $region75: #{_lambda_.1} parent=11 // pred_region
          _
        $region76: #{_lambda_.1} parent=11 // pred_fallthru
          _
        // Predicated region
        $region77: #{_lambda_.1} parent=11 // pred_check
          %p692 = pneg %p456
        $region78: #{_lambda_.1} parent=11 // pred_check_branch
          %694 = sbr.rel (%p692) target = $region80
        $region79: #{_lambda_.1} parent=11 // pred_region
          _
        $region80: #{_lambda_.1} parent=11 // pred_fallthru
          _
        // Predicated region
        $region81: #{_lambda_.1} parent=11 // pred_check
          %p695 = pneg %p477
        $region82: #{_lambda_.1} parent=11 // pred_check_branch
          %697 = sbr.rel (%p695) target = $region84
        $region83: #{_lambda_.1} parent=11 // pred_region
          _
        $region84: #{_lambda_.1} parent=11 // pred_fallthru
          _
        // Predicated region
        $region85: #{_lambda_.1} parent=11 // pred_check
          %p698 = pneg %p498
        $region86: #{_lambda_.1} parent=11 // pred_check_branch
          %700 = sbr.rel (%p698) target = $region88
        $region87: #{_lambda_.1} parent=11 // pred_region
          _
        $region88: #{_lambda_.1} parent=11 // pred_fallthru
          _
        // Predicated region
        $region89: #{_lambda_.1} parent=11 // pred_check
          %p701 = pneg %p519
        $region90: #{_lambda_.1} parent=11 // pred_check_branch
          %703 = sbr.rel (%p701) target = $region92
        $region91: #{_lambda_.1} parent=11 // pred_region
          _
        $region92: #{_lambda_.1} parent=11 // pred_fallthru
          _
        // Predicated region
        $region93: #{_lambda_.1} parent=11 // pred_check
          %p704 = pneg %p540
        $region94: #{_lambda_.1} parent=11 // pred_check_branch
          %706 = sbr.rel (%p704) target = $region96
        $region95: #{_lambda_.1} parent=11 // pred_region
          _
        $region96: #{_lambda_.1} parent=11 // pred_fallthru
          _
        // Predicated region
        $region97: #{_lambda_.1} parent=11 // pred_check
          %p707 = pneg %p561
        $region98: #{_lambda_.1} parent=11 // pred_check_branch
          %709 = sbr.rel (%p707) target = $region100
        $region99: #{_lambda_.1} parent=11 // pred_region
          _
        $region100: #{_lambda_.1} parent=11 // pred_fallthru
          _
        // Predicated region
        $region101: #{_lambda_.1} parent=11 // pred_check
          %p710 = pneg %p582
        $region102: #{_lambda_.1} parent=11 // pred_check_branch
          %712 = sbr.rel (%p710) target = $region104
        $region103: #{_lambda_.1} parent=11 // pred_region
          _
        $region104: #{_lambda_.1} parent=11 // pred_fallthru
          _
        // Predicated region
        $region105: #{_lambda_.1} parent=11 // pred_check
          %p713 = pneg %p603
        $region106: #{_lambda_.1} parent=11 // pred_check_branch
          %715 = sbr.rel (%p713) target = $region108
        $region107: #{_lambda_.1} parent=11 // pred_region
          _
        $region108: #{_lambda_.1} parent=11 // pred_fallthru
          _
      $region12: #{_lambda_.1} parent=5 // pred_fallthru
        _
      %p716 = scmp.lt.s32.totalorder %s35, 2
      // Predicated region
      $region109: #{_lambda_.1} parent=5 // pred_check
        %p717 = pneg %p716
      $region110: #{_lambda_.1} parent=5 // pred_check_branch
        %719 = sbr.rel (%p717) target = $region112
      $region111: #{_lambda_.1} parent=5 // pred_region
        // Predicated region
        $region113: #{_lambda_.1} parent=111 // pred_check
          %p720 = pneg %p67
        $region114: #{_lambda_.1} parent=111 // pred_check_branch
          %722 = sbr.rel (%p720) target = $region116
        $region115: #{_lambda_.1} parent=111 // pred_region
          %p723 = scmp.lt.s32.totalorder %s42, 1
          %s724 = scalar_select %p723, %s42, 1
          %s725 = smul.addr %s724, 8
          %s726 = scalar_lea.vmem %s0, %s725
        $region116: #{_lambda_.1} parent=111 // pred_fallthru
          _
        // Predicated region
        $region117: #{_lambda_.1} parent=111 // pred_check
          %p727 = pneg %p93
        $region118: #{_lambda_.1} parent=111 // pred_check_branch
          %729 = sbr.rel (%p727) target = $region120
        $region119: #{_lambda_.1} parent=111 // pred_region
          %p730 = scmp.lt.s32.totalorder %s42, 1
          %s731 = scalar_select %p730, %s42, 1
          %s732 = smul.addr %s731, 2
          %s733 = smul.addr %s732, 4
          %s734 = scalar_lea.vmem %s1, %s733
        $region120: #{_lambda_.1} parent=111 // pred_fallthru
          _
      $region112: #{_lambda_.1} parent=5 // pred_fallthru
        _
      %p735 = scmp.le.s32.totalorder 1, %s35
      %p736 = scmp.lt.s32.totalorder %s35, 3
      %p737 = pnand %p735, %p736
      %p738 = pneg %p737
      // Predicated region
      $region121: #{_lambda_.1} parent=5 // pred_check
        _
      $region122: #{_lambda_.1} parent=5 // pred_check_branch
        %740 = sbr.rel (%p737) target = $region124
      $region123: #{_lambda_.1} parent=5 // pred_region
        %s741 = ssub.s32 %s35, 1
        %p742 = scmp.lt.s32.totalorder %s44, 1
        %s743 = scalar_select %p742, %s44, 1
        %s744 = smul.addr %s743, 8
        %s745 = scalar_lea.vmem %s0, %s744
        %p746 = pneg %p73
        %p747 = pneg %p70
        %p748 = scmp.lt.s32.totalorder %s44, 1
        %s749 = scalar_select %p748, %s44, 1
        %s750 = smul.addr %s749, 2
        %s751 = smul.addr %s750, 4
        %s752 = scalar_lea.vmem %s1, %s751
        %p753 = pneg %p99
        %p754 = pneg %p96
        %p755 = pneg %p120
        %p756 = pneg %p117
        %p757 = pneg %p141
        %p758 = pneg %p138
        %p759 = pneg %p162
        %p760 = pneg %p159
        %p761 = pneg %p183
        %p762 = pneg %p180
        %p763 = pneg %p204
        %p764 = pneg %p201
        %p765 = pneg %p225
        %p766 = pneg %p222
        %p767 = pneg %p246
        %p768 = pneg %p243
        %p769 = pneg %p267
        %p770 = pneg %p264
        %p771 = pneg %p288
        %p772 = pneg %p285
        %p773 = pneg %p309
        %p774 = pneg %p306
        %p775 = pneg %p330
        %p776 = pneg %p327
        %p777 = pneg %p351
        %p778 = pneg %p348
        %p779 = pneg %p372
        %p780 = pneg %p369
        %p781 = pneg %p393
        %p782 = pneg %p390
        %p783 = pneg %p414
        %p784 = pneg %p411
        %p785 = pneg %p435
        %p786 = pneg %p432
        %p787 = pneg %p456
        %p788 = pneg %p453
        %p789 = pneg %p477
        %p790 = pneg %p474
        %p791 = pneg %p498
        %p792 = pneg %p495
        %p793 = pneg %p519
        %p794 = pneg %p516
        %p795 = pneg %p540
        %p796 = pneg %p537
        %p797 = pneg %p561
        %p798 = pneg %p558
        %p799 = pneg %p582
        %p800 = pneg %p579
        %p801 = pneg %p603
        %p802 = pneg %p600
        %p803 = pneg %p629
        %p804 = pneg %p626
        %s805 = sand.u32 %s616, 1
        %s806 = scalar_lea.sflag [#allocation3], %s805
        %s807 = sand.u32 %s616, 1
        %s808 = smul.addr %s807, 8
        %s809 = scalar_lea.vmem [#allocation2], %s808
        %p810 = scmp.lt.s32.totalorder %s44, 1
        %s811 = scalar_select %p810, %s44, 1
        %s812 = smul.addr %s811, 8
        %s813 = scalar_lea.vmem %s0, %s812
        %p814 = scmp.lt.s32.totalorder %s44, 1
        %s815 = scalar_select %p814, %s44, 1
        %s816 = smul.addr %s815, 2
        %s817 = smul.addr %s816, 4
        %s818 = scalar_lea.vmem %s1, %s817
        %v820 = vld [vmem:[%s813] sm:$0xff]
        %v821 = vld [vmem:[%s818] sm:$0xf]
        %v822 = vld [vmem:[%s818 + $0x4] sm:$0xf]
        %v823 = vld [vmem:[%s2] sm:$0x1]
        %v824 = vld [vmem:[%s3] sm:$0x1]
        %vm825 = vcmask 261120
        %v826 = vsel %vm825, %v820, 0.0
        %827 = vadd.xlane.f32.xlu0 %v826
        %v828 = vpop.xlane.xlu0 %827
        %v829 = vrcp.pop 32.0
        %v830 = vmul.f32 %v828, %v829
        %v831 = vsub.f32 %v820, %v830
        %v832 = vmul.f32 %v831, %v831
        %v833 = vsel %vm825, %v832, 0.0
        %834 = vadd.xlane.f32.xlu0 %v833
        %v835 = vpop.xlane.xlu0 %834
        %v836 = vmul.f32 %v835, %v829
        %v837 = vadd.f32 %v836, 1e-05
        %v838 = vrsqrt.pop %v837
        %v839 = vmul.f32 %v831, %v838
        %v841 = vlaneseq
        %v842 = vshrl.u32 %v841, 7
        %v843 = vsub.s32 0, %v842
        %v844 = vrot.slane %v823, %v843
        %v846 = vmul.f32 %v839, %v844
        %v848 = vlaneseq
        %v849 = vshrl.u32 %v848, 7
        %v850 = vsub.s32 0, %v849
        %v851 = vrot.slane %v824, %v850
        %v853 = vadd.f32 %v846, %v851
        %v854 = vld [vmem:[%s4] sm:$0xf]
        %v855 = vld [vmem:[%s4 + $0x4] sm:$0xf]
        %v856 = vld [vmem:[%s4 + $0x8] sm:$0xf]
        %v857 = vld [vmem:[%s4 + $0xc] sm:$0xf]
        %v858 = vld [vmem:[%s5] sm:$0x1]
        %v859 = vld [vmem:[%s6] sm:$0xf]
        %v860 = vld [vmem:[%s6 + $0x4] sm:$0xf]
        %v861 = vld [vmem:[%s6 + $0x8] sm:$0xf]
        %v862 = vld [vmem:[%s6 + $0xc] sm:$0xf]
        %v863 = vld [vmem:[%s7] sm:$0xf]
        %v864 = vld [vmem:[%s7 + $0x4] sm:$0xf]
        %v865 = vld [vmem:[%s7 + $0x8] sm:$0xf]
        %v866 = vld [vmem:[%s7 + $0xc] sm:$0xf]
        %v867 = vld [vmem:[%s8] sm:$0x1]
        %v868 = vld [vmem:[%s9] sm:$0xf]
        %v869 = vld [vmem:[%s9 + $0x4] sm:$0xf]
        %v870 = vld [vmem:[%s9 + $0x8] sm:$0xf]
        %v871 = vld [vmem:[%s9 + $0xc] sm:$0xf]
        %v872 = vld [vmem:[%s10] sm:$0x1]
        %v873 = vpack.c.bf16 %v853, %v853
        %v875 = vlaneseq
        %v876 = vshrl.u32 %v875, 7
        %v877 = vsub.s32 0, %v876
        %v878 = vrot.slane %v858, %v877
        %v884 = vunpack.c.l.b16 %v854
        %v885 = vunpack.c.l.b16 %v855
        %v886 = vunpack.c.l.b16 %v856
        %v887 = vunpack.c.l.b16 %v857
        %v888 = vpack.c.b16 %v885, %v884
        %v889 = vpack.c.b16 %v887, %v886
        %v893 = vsel %vm825, %v873, 0
        %895 = vmatprep.subr.bf16.mxu0 0
        %896 = vmatpush1.bf16.msra.mxu0 0
        %897 = vmatprep.subr.bf16.mxu0 0
        %898 = vmatpush1.bf16.msra.mxu0 0
        %899 = vmatprep.subr.bf16.mxu0 0
        %900 = vmatpush1.bf16.msra.mxu0 0
        %901 = vmatprep.subr.bf16.mxu0 0
        %902 = vmatpush1.bf16.msra.mxu0 0
        %903 = vmatprep.subr.bf16.mxu0 0
        %904 = vmatpush1.bf16.msra.mxu0 0
        %905 = vmatprep.subr.bf16.mxu0 0
        %906 = vmatpush1.bf16.msra.mxu0 0
        %907 = vmatprep.subr.bf16.mxu0 0
        %908 = vmatpush1.bf16.msra.mxu0 %v889
        %909 = vmatprep.subr.bf16.mxu0 0
        %910 = vmatpush1.bf16.msra.mxu0 %v888
        %911 = vmatprep.subr.bf16.mxu0 0
        %912 = vmatpush2.bf16.msra.mxu0 0
        %913 = vmatprep.subr.bf16.mxu0 0
        %914 = vmatpush2.bf16.msra.mxu0 0
        %915 = vmatprep.subr.bf16.mxu0 0
        %916 = vmatpush2.bf16.msra.mxu0 0
        %917 = vmatprep.subr.bf16.mxu0 0
        %918 = vmatpush2.bf16.msra.mxu0 0
        %919 = vmatprep.subr.bf16.mxu0 0
        %920 = vmatpush2.bf16.msra.mxu0 0
        %921 = vmatprep.subr.bf16.mxu0 0
        %922 = vmatpush2.bf16.msra.mxu0 0
        %923 = vmatprep.subr.bf16.mxu0 0
        %924 = vmatpush2.bf16.msra.mxu0 0
        %925 = vmatprep.subr.bf16.mxu0 0
        %926 = vmatpush2.bf16.msra.mxu0 0
        %927 = vmatprep.mubr.bf16.mxu0 0
        %928 = vmatmul.mubr.bf16.gmra.mxu0 %v893
        %v929 = vpop.f32.mrf.mxu0
        %v930 = vadd.f32 %v878, %v929
        %v931 = vpop.f32.mrf.mxu0
        %v932 = vpop.f32.mrf.mxu0
        %v933 = vpop.f32.mrf.mxu0
        %934 = vdwg.mxu0
        %v939 = vunpack.c.l.b16 %v859
        %v940 = vunpack.c.l.b16 %v860
        %v941 = vunpack.c.l.b16 %v861
        %v942 = vunpack.c.l.b16 %v862
        %v943 = vpack.c.b16 %v940, %v939
        %v944 = vpack.c.b16 %v942, %v941
        %947 = vmatprep.subr.bf16.mxu0 0
        %948 = vmatpush1.bf16.msra.mxu0 0
        %949 = vmatprep.subr.bf16.mxu0 0
        %950 = vmatpush1.bf16.msra.mxu0 0
        %951 = vmatprep.subr.bf16.mxu0 0
        %952 = vmatpush1.bf16.msra.mxu0 0
        %953 = vmatprep.subr.bf16.mxu0 0
        %954 = vmatpush1.bf16.msra.mxu0 0
        %955 = vmatprep.subr.bf16.mxu0 0
        %956 = vmatpush1.bf16.msra.mxu0 0
        %957 = vmatprep.subr.bf16.mxu0 0
        %958 = vmatpush1.bf16.msra.mxu0 0
        %959 = vmatprep.subr.bf16.mxu0 0
        %960 = vmatpush1.bf16.msra.mxu0 %v944
        %961 = vmatprep.subr.bf16.mxu0 0
        %962 = vmatpush1.bf16.msra.mxu0 %v943
        %963 = vmatprep.subr.bf16.mxu0 0
        %964 = vmatpush2.bf16.msra.mxu0 0
        %965 = vmatprep.subr.bf16.mxu0 0
        %966 = vmatpush2.bf16.msra.mxu0 0
        %967 = vmatprep.subr.bf16.mxu0 0
        %968 = vmatpush2.bf16.msra.mxu0 0
        %969 = vmatprep.subr.bf16.mxu0 0
        %970 = vmatpush2.bf16.msra.mxu0 0
        %971 = vmatprep.subr.bf16.mxu0 0
        %972 = vmatpush2.bf16.msra.mxu0 0
        %973 = vmatprep.subr.bf16.mxu0 0
        %974 = vmatpush2.bf16.msra.mxu0 0
        %975 = vmatprep.subr.bf16.mxu0 0
        %976 = vmatpush2.bf16.msra.mxu0 0
        %977 = vmatprep.subr.bf16.mxu0 0
        %978 = vmatpush2.bf16.msra.mxu0 0
        %979 = vmatprep.mubr.bf16.mxu0 0
        %980 = vmatmul.mubr.bf16.gmra.mxu0 %v893
        %v981 = vpop.f32.mrf.mxu0
        %v982 = vadd.f32 0.0, %v981
        %v983 = vpop.f32.mrf.mxu0
        %v984 = vpop.f32.mrf.mxu0
        %v985 = vpop.f32.mrf.mxu0
        %986 = vdwg.mxu0
        %v988 = vlaneseq
        %v989 = vshrl.u32 %v988, 7
        %v990 = vsub.s32 0, %v989
        %v991 = vrot.slane %v867, %v990
        %v997 = vunpack.c.l.b16 %v863
        %v998 = vunpack.c.l.b16 %v864
        %v999 = vunpack.c.l.b16 %v865
        %v1000 = vunpack.c.l.b16 %v866
        %v1001 = vpack.c.b16 %v998, %v997
        %v1002 = vpack.c.b16 %v1000, %v999
        %1005 = vmatprep.subr.bf16.mxu0 0
        %1006 = vmatpush1.bf16.msra.mxu0 0
        %1007 = vmatprep.subr.bf16.mxu0 0
        %1008 = vmatpush1.bf16.msra.mxu0 0
        %1009 = vmatprep.subr.bf16.mxu0 0
        %1010 = vmatpush1.bf16.msra.mxu0 0
        %1011 = vmatprep.subr.bf16.mxu0 0
        %1012 = vmatpush1.bf16.msra.mxu0 0
        %1013 = vmatprep.subr.bf16.mxu0 0
        %1014 = vmatpush1.bf16.msra.mxu0 0
        %1015 = vmatprep.subr.bf16.mxu0 0
        %1016 = vmatpush1.bf16.msra.mxu0 0
        %1017 = vmatprep.subr.bf16.mxu0 0
        %1018 = vmatpush1.bf16.msra.mxu0 %v1002
        %1019 = vmatprep.subr.bf16.mxu0 0
        %1020 = vmatpush1.bf16.msra.mxu0 %v1001
        %1021 = vmatprep.subr.bf16.mxu0 0
        %1022 = vmatpush2.bf16.msra.mxu0 0
        %1023 = vmatprep.subr.bf16.mxu0 0
        %1024 = vmatpush2.bf16.msra.mxu0 0
        %1025 = vmatprep.subr.bf16.mxu0 0
        %1026 = vmatpush2.bf16.msra.mxu0 0
        %1027 = vmatprep.subr.bf16.mxu0 0
        %1028 = vmatpush2.bf16.msra.mxu0 0
        %1029 = vmatprep.subr.bf16.mxu0 0
        %1030 = vmatpush2.bf16.msra.mxu0 0
        %1031 = vmatprep.subr.bf16.mxu0 0
        %1032 = vmatpush2.bf16.msra.mxu0 0
        %1033 = vmatprep.subr.bf16.mxu0 0
        %1034 = vmatpush2.bf16.msra.mxu0 0
        %1035 = vmatprep.subr.bf16.mxu0 0
        %1036 = vmatpush2.bf16.msra.mxu0 0
        %1037 = vmatprep.mubr.bf16.mxu0 0
        %1038 = vmatmul.mubr.bf16.gmra.mxu0 %v893
        %v1039 = vpop.f32.mrf.mxu0
        %v1040 = vadd.f32 %v991, %v1039
        %v1041 = vpop.f32.mrf.mxu0
        %v1042 = vpop.f32.mrf.mxu0
        %v1043 = vpop.f32.mrf.mxu0
        %1044 = vdwg.mxu0
        %1046 = vrot.lane.b32.xlu0 %v930, 120
        %v1047 = vpop.permute.xlu0 %1046
        %1049 = vrot.lane.b32.xlu0 %v930, 112
        %v1050 = vpop.permute.xlu0 %1049
        %1052 = vrot.lane.b32.xlu0 %v930, 104
        %v1053 = vpop.permute.xlu0 %1052
        %v1055 = vcombine.low %v930, %v1050
        %v1056 = vcombine.high %v930, %v1050
        %v1058 = vunpack.c.l.s4 1983009808
        %v1059 = vunpack.c.0.s8 %v1058
        %v1060 = vlaneseq
        %v1061 = vshrl.u32 %v1060, 7
        %v1062 = vsub.s32 %v1059, %v1061
        %v1063 = vrot.slane %v1055, %v1062
        %v1065 = vunpack.c.l.s4 1983009808
        %v1066 = vunpack.c.0.s8 %v1065
        %v1067 = vlaneseq
        %v1068 = vshrl.u32 %v1067, 7
        %v1069 = vsub.s32 %v1066, %v1068
        %v1070 = vrot.slane %v1056, %v1069
        %v1071 = vcombine.low %v1047, %v1053
        %v1072 = vcombine.high %v1047, %v1053
        %v1074 = vunpack.c.l.s4 1983009808
        %v1075 = vunpack.c.0.s8 %v1074
        %v1076 = vlaneseq
        %v1077 = vshrl.u32 %v1076, 7
        %v1078 = vsub.s32 %v1075, %v1077
        %v1079 = vrot.slane %v1071, %v1078
        %v1081 = vunpack.c.l.s4 1983009808
        %v1082 = vunpack.c.0.s8 %v1081
        %v1083 = vlaneseq
        %v1084 = vshrl.u32 %v1083, 7
        %v1085 = vsub.s32 %v1082, %v1084
        %v1086 = vrot.slane %v1072, %v1085
        %v1087 = vcombine.low %v1063, %v1079
        %v1088 = vcombine.high %v1063, %v1079
        %v1090 = vunpack.c.l.s4 1934713408
        %v1091 = vunpack.c.0.s8 %v1090
        %v1092 = vlaneseq
        %v1093 = vshrl.u32 %v1092, 7
        %v1094 = vsub.s32 %v1091, %v1093
        %v1095 = vrot.slane %v1087, %v1094
        %v1097 = vunpack.c.l.s4 1934713408
        %v1098 = vunpack.c.0.s8 %v1097
        %v1099 = vlaneseq
        %v1100 = vshrl.u32 %v1099, 7
        %v1101 = vsub.s32 %v1098, %v1100
        %v1102 = vrot.slane %v1088, %v1101
        %v1103 = vcombine.low %v1070, %v1086
        %v1104 = vcombine.high %v1070, %v1086
        %v1106 = vunpack.c.l.s4 1934713408
        %v1107 = vunpack.c.0.s8 %v1106
        %v1108 = vlaneseq
        %v1109 = vshrl.u32 %v1108, 7
        %v1110 = vsub.s32 %v1107, %v1109
        %v1111 = vrot.slane %v1103, %v1110
        %v1113 = vunpack.c.l.s4 1934713408
        %v1114 = vunpack.c.0.s8 %v1113
        %v1115 = vlaneseq
        %v1116 = vshrl.u32 %v1115, 7
        %v1117 = vsub.s32 %v1114, %v1116
        %v1118 = vrot.slane %v1104, %v1117
        %v1119 = vcombine.high %v1095, 0.0
        %v1120 = vcombine.high %v1102, 0.0
        %v1121 = vcombine.high %v1111, 0.0
        %v1122 = vcombine.high %v1118, 0.0
        %v1123 = vcombine.low %v1095, %v1102
        %v1125 = vunpack.c.l.s4 1983009808
        %v1126 = vunpack.c.0.s8 %v1125
        %v1127 = vlaneseq
        %v1128 = vshrl.u32 %v1127, 7
        %v1129 = vsub.s32 %v1126, %v1128
        %v1130 = vrot.slane %v1123, %v1129
        %v1131 = vcombine.low %v1119, %v1120
        %v1133 = vunpack.c.l.s4 1983009808
        %v1134 = vunpack.c.0.s8 %v1133
        %v1135 = vlaneseq
        %v1136 = vshrl.u32 %v1135, 7
        %v1137 = vsub.s32 %v1134, %v1136
        %v1138 = vrot.slane %v1131, %v1137
        %v1139 = vcombine.low %v1111, %v1118
        %v1141 = vunpack.c.l.s4 1983009808
        %v1142 = vunpack.c.0.s8 %v1141
        %v1143 = vlaneseq
        %v1144 = vshrl.u32 %v1143, 7
        %v1145 = vsub.s32 %v1142, %v1144
        %v1146 = vrot.slane %v1139, %v1145
        %v1147 = vcombine.low %v1121, %v1122
        %v1149 = vunpack.c.l.s4 1983009808
        %v1150 = vunpack.c.0.s8 %v1149
        %v1151 = vlaneseq
        %v1152 = vshrl.u32 %v1151, 7
        %v1153 = vsub.s32 %v1150, %v1152
        %v1154 = vrot.slane %v1147, %v1153
        %v1155 = vcombine.low %v1130, %v1138
        %v1156 = vcombine.high %v1130, %v1138
        %v1158 = vunpack.c.l.s4 1934713408
        %v1159 = vunpack.c.0.s8 %v1158
        %v1160 = vlaneseq
        %v1161 = vshrl.u32 %v1160, 7
        %v1162 = vsub.s32 %v1159, %v1161
        %v1163 = vrot.slane %v1155, %v1162
        %v1165 = vunpack.c.l.s4 1934713408
        %v1166 = vunpack.c.0.s8 %v1165
        %v1167 = vlaneseq
        %v1168 = vshrl.u32 %v1167, 7
        %v1169 = vsub.s32 %v1166, %v1168
        %v1170 = vrot.slane %v1156, %v1169
        %v1171 = vcombine.low %v1146, %v1154
        %v1172 = vcombine.high %v1146, %v1154
        %v1174 = vunpack.c.l.s4 1934713408
        %v1175 = vunpack.c.0.s8 %v1174
        %v1176 = vlaneseq
        %v1177 = vshrl.u32 %v1176, 7
        %v1178 = vsub.s32 %v1175, %v1177
        %v1179 = vrot.slane %v1171, %v1178
        %v1181 = vunpack.c.l.s4 1934713408
        %v1182 = vunpack.c.0.s8 %v1181
        %v1183 = vlaneseq
        %v1184 = vshrl.u32 %v1183, 7
        %v1185 = vsub.s32 %v1182, %v1184
        %v1186 = vrot.slane %v1172, %v1185
        %v1187 = vcombine.low %v1163, %v1179
        %v1188 = vcombine.high %v1163, %v1179
        %v1189 = vcombine.low %v1170, %v1186
        %v1190 = vcombine.high %v1170, %v1186
        %v1191 = vpack.c.bf16 %v1187, %v1187
        %v1192 = vpack.c.bf16 %v1188, %v1188
        %v1193 = vpack.c.bf16 %v1189, %v1189
        %v1194 = vpack.c.bf16 %v1190, %v1190
        %1196 = vrot.lane.b32.xlu0 %v982, 120
        %v1197 = vpop.permute.xlu0 %1196
        %1199 = vrot.lane.b32.xlu0 %v982, 112
        %v1200 = vpop.permute.xlu0 %1199
        %1202 = vrot.lane.b32.xlu0 %v982, 104
        %v1203 = vpop.permute.xlu0 %1202
        %v1205 = vcombine.low %v982, %v1200
        %v1206 = vcombine.high %v982, %v1200
        %v1208 = vunpack.c.l.s4 1983009808
        %v1209 = vunpack.c.0.s8 %v1208
        %v1210 = vlaneseq
        %v1211 = vshrl.u32 %v1210, 7
        %v1212 = vsub.s32 %v1209, %v1211
        %v1213 = vrot.slane %v1205, %v1212
        %v1215 = vunpack.c.l.s4 1983009808
        %v1216 = vunpack.c.0.s8 %v1215
        %v1217 = vlaneseq
        %v1218 = vshrl.u32 %v1217, 7
        %v1219 = vsub.s32 %v1216, %v1218
        %v1220 = vrot.slane %v1206, %v1219
        %v1221 = vcombine.low %v1197, %v1203
        %v1222 = vcombine.high %v1197, %v1203
        %v1224 = vunpack.c.l.s4 1983009808
        %v1225 = vunpack.c.0.s8 %v1224
        %v1226 = vlaneseq
        %v1227 = vshrl.u32 %v1226, 7
        %v1228 = vsub.s32 %v1225, %v1227
        %v1229 = vrot.slane %v1221, %v1228
        %v1231 = vunpack.c.l.s4 1983009808
        %v1232 = vunpack.c.0.s8 %v1231
        %v1233 = vlaneseq
        %v1234 = vshrl.u32 %v1233, 7
        %v1235 = vsub.s32 %v1232, %v1234
        %v1236 = vrot.slane %v1222, %v1235
        %v1237 = vcombine.low %v1213, %v1229
        %v1238 = vcombine.high %v1213, %v1229
        %v1240 = vunpack.c.l.s4 1934713408
        %v1241 = vunpack.c.0.s8 %v1240
        %v1242 = vlaneseq
        %v1243 = vshrl.u32 %v1242, 7
        %v1244 = vsub.s32 %v1241, %v1243
        %v1245 = vrot.slane %v1237, %v1244
        %v1247 = vunpack.c.l.s4 1934713408
        %v1248 = vunpack.c.0.s8 %v1247
        %v1249 = vlaneseq
        %v1250 = vshrl.u32 %v1249, 7
        %v1251 = vsub.s32 %v1248, %v1250
        %v1252 = vrot.slane %v1238, %v1251
        %v1253 = vcombine.low %v1220, %v1236
        %v1254 = vcombine.high %v1220, %v1236
        %v1256 = vunpack.c.l.s4 1934713408
        %v1257 = vunpack.c.0.s8 %v1256
        %v1258 = vlaneseq
        %v1259 = vshrl.u32 %v1258, 7
        %v1260 = vsub.s32 %v1257, %v1259
        %v1261 = vrot.slane %v1253, %v1260
        %v1263 = vunpack.c.l.s4 1934713408
        %v1264 = vunpack.c.0.s8 %v1263
        %v1265 = vlaneseq
        %v1266 = vshrl.u32 %v1265, 7
        %v1267 = vsub.s32 %v1264, %v1266
        %v1268 = vrot.slane %v1254, %v1267
        %v1269 = vcombine.high %v1245, 0.0
        %v1270 = vcombine.high %v1252, 0.0
        %v1271 = vcombine.high %v1261, 0.0
        %v1272 = vcombine.high %v1268, 0.0
        %v1273 = vcombine.low %v1245, %v1252
        %v1275 = vunpack.c.l.s4 1983009808
        %v1276 = vunpack.c.0.s8 %v1275
        %v1277 = vlaneseq
        %v1278 = vshrl.u32 %v1277, 7
        %v1279 = vsub.s32 %v1276, %v1278
        %v1280 = vrot.slane %v1273, %v1279
        %v1281 = vcombine.low %v1269, %v1270
        %v1283 = vunpack.c.l.s4 1983009808
        %v1284 = vunpack.c.0.s8 %v1283
        %v1285 = vlaneseq
        %v1286 = vshrl.u32 %v1285, 7
        %v1287 = vsub.s32 %v1284, %v1286
        %v1288 = vrot.slane %v1281, %v1287
        %v1289 = vcombine.low %v1261, %v1268
        %v1291 = vunpack.c.l.s4 1983009808
        %v1292 = vunpack.c.0.s8 %v1291
        %v1293 = vlaneseq
        %v1294 = vshrl.u32 %v1293, 7
        %v1295 = vsub.s32 %v1292, %v1294
        %v1296 = vrot.slane %v1289, %v1295
        %v1297 = vcombine.low %v1271, %v1272
        %v1299 = vunpack.c.l.s4 1983009808
        %v1300 = vunpack.c.0.s8 %v1299
        %v1301 = vlaneseq
        %v1302 = vshrl.u32 %v1301, 7
        %v1303 = vsub.s32 %v1300, %v1302
        %v1304 = vrot.slane %v1297, %v1303
        %v1305 = vcombine.low %v1280, %v1288
        %v1306 = vcombine.high %v1280, %v1288
        %v1308 = vunpack.c.l.s4 1934713408
        %v1309 = vunpack.c.0.s8 %v1308
        %v1310 = vlaneseq
        %v1311 = vshrl.u32 %v1310, 7
        %v1312 = vsub.s32 %v1309, %v1311
        %v1313 = vrot.slane %v1305, %v1312
        %v1315 = vunpack.c.l.s4 1934713408
        %v1316 = vunpack.c.0.s8 %v1315
        %v1317 = vlaneseq
        %v1318 = vshrl.u32 %v1317, 7
        %v1319 = vsub.s32 %v1316, %v1318
        %v1320 = vrot.slane %v1306, %v1319
        %v1321 = vcombine.low %v1296, %v1304
        %v1322 = vcombine.high %v1296, %v1304
        %v1324 = vunpack.c.l.s4 1934713408
        %v1325 = vunpack.c.0.s8 %v1324
        %v1326 = vlaneseq
        %v1327 = vshrl.u32 %v1326, 7
        %v1328 = vsub.s32 %v1325, %v1327
        %v1329 = vrot.slane %v1321, %v1328
        %v1331 = vunpack.c.l.s4 1934713408
        %v1332 = vunpack.c.0.s8 %v1331
        %v1333 = vlaneseq
        %v1334 = vshrl.u32 %v1333, 7
        %v1335 = vsub.s32 %v1332, %v1334
        %v1336 = vrot.slane %v1322, %v1335
        %v1337 = vcombine.low %v1313, %v1329
        %v1338 = vcombine.high %v1313, %v1329
        %v1339 = vcombine.low %v1320, %v1336
        %v1340 = vcombine.high %v1320, %v1336
        %v1341 = vpack.c.bf16 %v1337, %v1337
        %v1342 = vpack.c.bf16 %v1338, %v1338
        %v1343 = vpack.c.bf16 %v1339, %v1339
        %v1344 = vpack.c.bf16 %v1340, %v1340
        %1346 = vrot.lane.b32.xlu0 %v1040, 120
        %v1347 = vpop.permute.xlu0 %1346
        %1349 = vrot.lane.b32.xlu0 %v1040, 112
        %v1350 = vpop.permute.xlu0 %1349
        %1352 = vrot.lane.b32.xlu0 %v1040, 104
        %v1353 = vpop.permute.xlu0 %1352
        %v1355 = vcombine.low %v1040, %v1350
        %v1356 = vcombine.high %v1040, %v1350
        %v1358 = vunpack.c.l.s4 1983009808
        %v1359 = vunpack.c.0.s8 %v1358
        %v1360 = vlaneseq
        %v1361 = vshrl.u32 %v1360, 7
        %v1362 = vsub.s32 %v1359, %v1361
        %v1363 = vrot.slane %v1355, %v1362
        %v1365 = vunpack.c.l.s4 1983009808
        %v1366 = vunpack.c.0.s8 %v1365
        %v1367 = vlaneseq
        %v1368 = vshrl.u32 %v1367, 7
        %v1369 = vsub.s32 %v1366, %v1368
        %v1370 = vrot.slane %v1356, %v1369
        %v1371 = vcombine.low %v1347, %v1353
        %v1372 = vcombine.high %v1347, %v1353
        %v1374 = vunpack.c.l.s4 1983009808
        %v1375 = vunpack.c.0.s8 %v1374
        %v1376 = vlaneseq
        %v1377 = vshrl.u32 %v1376, 7
        %v1378 = vsub.s32 %v1375, %v1377
        %v1379 = vrot.slane %v1371, %v1378
        %v1381 = vunpack.c.l.s4 1983009808
        %v1382 = vunpack.c.0.s8 %v1381
        %v1383 = vlaneseq
        %v1384 = vshrl.u32 %v1383, 7
        %v1385 = vsub.s32 %v1382, %v1384
        %v1386 = vrot.slane %v1372, %v1385
        %v1387 = vcombine.low %v1363, %v1379
        %v1388 = vcombine.high %v1363, %v1379
        %v1390 = vunpack.c.l.s4 1934713408
        %v1391 = vunpack.c.0.s8 %v1390
        %v1392 = vlaneseq
        %v1393 = vshrl.u32 %v1392, 7
        %v1394 = vsub.s32 %v1391, %v1393
        %v1395 = vrot.slane %v1387, %v1394
        %v1397 = vunpack.c.l.s4 1934713408
        %v1398 = vunpack.c.0.s8 %v1397
        %v1399 = vlaneseq
        %v1400 = vshrl.u32 %v1399, 7
        %v1401 = vsub.s32 %v1398, %v1400
        %v1402 = vrot.slane %v1388, %v1401
        %v1403 = vcombine.low %v1370, %v1386
        %v1404 = vcombine.high %v1370, %v1386
        %v1406 = vunpack.c.l.s4 1934713408
        %v1407 = vunpack.c.0.s8 %v1406
        %v1408 = vlaneseq
        %v1409 = vshrl.u32 %v1408, 7
        %v1410 = vsub.s32 %v1407, %v1409
        %v1411 = vrot.slane %v1403, %v1410
        %v1413 = vunpack.c.l.s4 1934713408
        %v1414 = vunpack.c.0.s8 %v1413
        %v1415 = vlaneseq
        %v1416 = vshrl.u32 %v1415, 7
        %v1417 = vsub.s32 %v1414, %v1416
        %v1418 = vrot.slane %v1404, %v1417
        %v1419 = vcombine.high %v1395, 0.0
        %v1420 = vcombine.high %v1402, 0.0
        %v1421 = vcombine.high %v1411, 0.0
        %v1422 = vcombine.high %v1418, 0.0
        %v1423 = vcombine.low %v1395, %v1402
        %v1425 = vunpack.c.l.s4 1983009808
        %v1426 = vunpack.c.0.s8 %v1425
        %v1427 = vlaneseq
        %v1428 = vshrl.u32 %v1427, 7
        %v1429 = vsub.s32 %v1426, %v1428
        %v1430 = vrot.slane %v1423, %v1429
        %v1431 = vcombine.low %v1419, %v1420
        %v1433 = vunpack.c.l.s4 1983009808
        %v1434 = vunpack.c.0.s8 %v1433
        %v1435 = vlaneseq
        %v1436 = vshrl.u32 %v1435, 7
        %v1437 = vsub.s32 %v1434, %v1436
        %v1438 = vrot.slane %v1431, %v1437
        %v1439 = vcombine.low %v1411, %v1418
        %v1441 = vunpack.c.l.s4 1983009808
        %v1442 = vunpack.c.0.s8 %v1441
        %v1443 = vlaneseq
        %v1444 = vshrl.u32 %v1443, 7
        %v1445 = vsub.s32 %v1442, %v1444
        %v1446 = vrot.slane %v1439, %v1445
        %v1447 = vcombine.low %v1421, %v1422
        %v1449 = vunpack.c.l.s4 1983009808
        %v1450 = vunpack.c.0.s8 %v1449
        %v1451 = vlaneseq
        %v1452 = vshrl.u32 %v1451, 7
        %v1453 = vsub.s32 %v1450, %v1452
        %v1454 = vrot.slane %v1447, %v1453
        %v1455 = vcombine.low %v1430, %v1438
        %v1456 = vcombine.high %v1430, %v1438
        %v1458 = vunpack.c.l.s4 1934713408
        %v1459 = vunpack.c.0.s8 %v1458
        %v1460 = vlaneseq
        %v1461 = vshrl.u32 %v1460, 7
        %v1462 = vsub.s32 %v1459, %v1461
        %v1463 = vrot.slane %v1455, %v1462
        %v1465 = vunpack.c.l.s4 1934713408
        %v1466 = vunpack.c.0.s8 %v1465
        %v1467 = vlaneseq
        %v1468 = vshrl.u32 %v1467, 7
        %v1469 = vsub.s32 %v1466, %v1468
        %v1470 = vrot.slane %v1456, %v1469
        %v1471 = vcombine.low %v1446, %v1454
        %v1472 = vcombine.high %v1446, %v1454
        %v1474 = vunpack.c.l.s4 1934713408
        %v1475 = vunpack.c.0.s8 %v1474
        %v1476 = vlaneseq
        %v1477 = vshrl.u32 %v1476, 7
        %v1478 = vsub.s32 %v1475, %v1477
        %v1479 = vrot.slane %v1471, %v1478
        %v1481 = vunpack.c.l.s4 1934713408
        %v1482 = vunpack.c.0.s8 %v1481
        %v1483 = vlaneseq
        %v1484 = vshrl.u32 %v1483, 7
        %v1485 = vsub.s32 %v1482, %v1484
        %v1486 = vrot.slane %v1472, %v1485
        %v1487 = vcombine.low %v1463, %v1479
        %v1488 = vcombine.high %v1463, %v1479
        %v1489 = vcombine.low %v1470, %v1486
        %v1490 = vcombine.high %v1470, %v1486
        %v1491 = vpack.c.bf16 %v1487, %v1487
        %v1492 = vpack.c.bf16 %v1488, %v1488
        %v1493 = vpack.c.bf16 %v1489, %v1489
        %v1494 = vpack.c.bf16 %v1490, %v1490
        %vm1495 = vcmask 64512
        %v1497 = vsel %vm1495, %v1191, 0
        %v1500 = vsel %vm1495, %v1341, 0
        %1502 = vmatprep.subr.bf16.mxu0 0
        %1503 = vmatpush1.bf16.xpose.msra.mxu0 0
        %1504 = vmatprep.subr.bf16.mxu0 0
        %1505 = vmatpush1.bf16.xpose.msra.mxu0 0
        %1506 = vmatprep.subr.bf16.mxu0 0
        %1507 = vmatpush1.bf16.xpose.msra.mxu0 0
        %1508 = vmatprep.subr.bf16.mxu0 0
        %1509 = vmatpush1.bf16.xpose.msra.mxu0 0
        %1510 = vmatprep.subr.bf16.mxu0 0
        %1511 = vmatpush1.bf16.xpose.msra.mxu0 0
        %1512 = vmatprep.subr.bf16.mxu0 0
        %1513 = vmatpush1.bf16.xpose.msra.mxu0 0
        %1514 = vmatprep.subr.bf16.mxu0 0
        %1515 = vmatpush1.bf16.xpose.msra.mxu0 0
        %1516 = vmatprep.subr.bf16.mxu0 0
        %1517 = vmatpush1.bf16.xpose.msra.mxu0 %v1500
        %1518 = vmatprep.subr.bf16.mxu0 0
        %1519 = vmatpush2.bf16.xpose.msra.mxu0 0
        %1520 = vmatprep.subr.bf16.mxu0 0
        %1521 = vmatpush2.bf16.xpose.msra.mxu0 0
        %1522 = vmatprep.subr.bf16.mxu0 0
        %1523 = vmatpush2.bf16.xpose.msra.mxu0 0
        %1524 = vmatprep.subr.bf16.mxu0 0
        %1525 = vmatpush2.bf16.xpose.msra.mxu0 0
        %1526 = vmatprep.subr.bf16.mxu0 0
        %1527 = vmatpush2.bf16.xpose.msra.mxu0 0
        %1528 = vmatprep.subr.bf16.mxu0 0
        %1529 = vmatpush2.bf16.xpose.msra.mxu0 0
        %1530 = vmatprep.subr.bf16.mxu0 0
        %1531 = vmatpush2.bf16.xpose.msra.mxu0 0
        %1532 = vmatprep.subr.bf16.mxu0 0
        %1533 = vmatpush2.bf16.xpose.msra.mxu0 0
        %1534 = vmatprep.mubr.bf16.mxu0 0
        %1535 = vmatmul.mubr.bf16.gmra.mxu0 %v1497
        %v1536 = vpop.f32.mrf.mxu0
        %v1537 = vadd.f32 0.0, %v1536
        %v1538 = vpop.f32.mrf.mxu0
        %v1539 = vpop.f32.mrf.mxu0
        %v1540 = vpop.f32.mrf.mxu0
        %1541 = vdwg.mxu0
        %v1543 = vsel %vm1495, %v1192, 0
        %v1546 = vsel %vm1495, %v1342, 0
        %1548 = vmatprep.subr.bf16.mxu0 0
        %1549 = vmatpush1.bf16.xpose.msra.mxu0 0
        %1550 = vmatprep.subr.bf16.mxu0 0
        %1551 = vmatpush1.bf16.xpose.msra.mxu0 0
        %1552 = vmatprep.subr.bf16.mxu0 0
        %1553 = vmatpush1.bf16.xpose.msra.mxu0 0
        %1554 = vmatprep.subr.bf16.mxu0 0
        %1555 = vmatpush1.bf16.xpose.msra.mxu0 0
        %1556 = vmatprep.subr.bf16.mxu0 0
        %1557 = vmatpush1.bf16.xpose.msra.mxu0 0
        %1558 = vmatprep.subr.bf16.mxu0 0
        %1559 = vmatpush1.bf16.xpose.msra.mxu0 0
        %1560 = vmatprep.subr.bf16.mxu0 0
        %1561 = vmatpush1.bf16.xpose.msra.mxu0 0
        %1562 = vmatprep.subr.bf16.mxu0 0
        %1563 = vmatpush1.bf16.xpose.msra.mxu0 %v1546
        %1564 = vmatprep.subr.bf16.mxu0 0
        %1565 = vmatpush2.bf16.xpose.msra.mxu0 0
        %1566 = vmatprep.subr.bf16.mxu0 0
        %1567 = vmatpush2.bf16.xpose.msra.mxu0 0
        %1568 = vmatprep.subr.bf16.mxu0 0
        %1569 = vmatpush2.bf16.xpose.msra.mxu0 0
        %1570 = vmatprep.subr.bf16.mxu0 0
        %1571 = vmatpush2.bf16.xpose.msra.mxu0 0
        %1572 = vmatprep.subr.bf16.mxu0 0
        %1573 = vmatpush2.bf16.xpose.msra.mxu0 0
        %1574 = vmatprep.subr.bf16.mxu0 0
        %1575 = vmatpush2.bf16.xpose.msra.mxu0 0
        %1576 = vmatprep.subr.bf16.mxu0 0
        %1577 = vmatpush2.bf16.xpose.msra.mxu0 0
        %1578 = vmatprep.subr.bf16.mxu0 0
        %1579 = vmatpush2.bf16.xpose.msra.mxu0 0
        %1580 = vmatprep.mubr.bf16.mxu0 0
        %1581 = vmatmul.mubr.bf16.gmra.mxu0 %v1543
        %v1582 = vpop.f32.mrf.mxu0
        %v1583 = vadd.f32 0.0, %v1582
        %v1584 = vpop.f32.mrf.mxu0
        %v1585 = vpop.f32.mrf.mxu0
        %v1586 = vpop.f32.mrf.mxu0
        %1587 = vdwg.mxu0
        %v1589 = vsel %vm1495, %v1193, 0
        %v1592 = vsel %vm1495, %v1343, 0
        %1594 = vmatprep.subr.bf16.mxu0 0
        %1595 = vmatpush1.bf16.xpose.msra.mxu0 0
        %1596 = vmatprep.subr.bf16.mxu0 0
        %1597 = vmatpush1.bf16.xpose.msra.mxu0 0
        %1598 = vmatprep.subr.bf16.mxu0 0
        %1599 = vmatpush1.bf16.xpose.msra.mxu0 0
        %1600 = vmatprep.subr.bf16.mxu0 0
        %1601 = vmatpush1.bf16.xpose.msra.mxu0 0
        %1602 = vmatprep.subr.bf16.mxu0 0
        %1603 = vmatpush1.bf16.xpose.msra.mxu0 0
        %1604 = vmatprep.subr.bf16.mxu0 0
        %1605 = vmatpush1.bf16.xpose.msra.mxu0 0
        %1606 = vmatprep.subr.bf16.mxu0 0
        %1607 = vmatpush1.bf16.xpose.msra.mxu0 0
        %1608 = vmatprep.subr.bf16.mxu0 0
        %1609 = vmatpush1.bf16.xpose.msra.mxu0 %v1592
        %1610 = vmatprep.subr.bf16.mxu0 0
        %1611 = vmatpush2.bf16.xpose.msra.mxu0 0
        %1612 = vmatprep.subr.bf16.mxu0 0
        %1613 = vmatpush2.bf16.xpose.msra.mxu0 0
        %1614 = vmatprep.subr.bf16.mxu0 0
        %1615 = vmatpush2.bf16.xpose.msra.mxu0 0
        %1616 = vmatprep.subr.bf16.mxu0 0
        %1617 = vmatpush2.bf16.xpose.msra.mxu0 0
        %1618 = vmatprep.subr.bf16.mxu0 0
        %1619 = vmatpush2.bf16.xpose.msra.mxu0 0
        %1620 = vmatprep.subr.bf16.mxu0 0
        %1621 = vmatpush2.bf16.xpose.msra.mxu0 0
        %1622 = vmatprep.subr.bf16.mxu0 0
        %1623 = vmatpush2.bf16.xpose.msra.mxu0 0
        %1624 = vmatprep.subr.bf16.mxu0 0
        %1625 = vmatpush2.bf16.xpose.msra.mxu0 0
        %1626 = vmatprep.mubr.bf16.mxu0 0
        %1627 = vmatmul.mubr.bf16.gmra.mxu0 %v1589
        %v1628 = vpop.f32.mrf.mxu0
        %v1629 = vadd.f32 0.0, %v1628
        %v1630 = vpop.f32.mrf.mxu0
        %v1631 = vpop.f32.mrf.mxu0
        %v1632 = vpop.f32.mrf.mxu0
        %1633 = vdwg.mxu0
        %v1635 = vsel %vm1495, %v1194, 0
        %v1638 = vsel %vm1495, %v1344, 0
        %1640 = vmatprep.subr.bf16.mxu0 0
        %1641 = vmatpush1.bf16.xpose.msra.mxu0 0
        %1642 = vmatprep.subr.bf16.mxu0 0
        %1643 = vmatpush1.bf16.xpose.msra.mxu0 0
        %1644 = vmatprep.subr.bf16.mxu0 0
        %1645 = vmatpush1.bf16.xpose.msra.mxu0 0
        %1646 = vmatprep.subr.bf16.mxu0 0
        %1647 = vmatpush1.bf16.xpose.msra.mxu0 0
        %1648 = vmatprep.subr.bf16.mxu0 0
        %1649 = vmatpush1.bf16.xpose.msra.mxu0 0
        %1650 = vmatprep.subr.bf16.mxu0 0
        %1651 = vmatpush1.bf16.xpose.msra.mxu0 0
        %1652 = vmatprep.subr.bf16.mxu0 0
        %1653 = vmatpush1.bf16.xpose.msra.mxu0 0
        %1654 = vmatprep.subr.bf16.mxu0 0
        %1655 = vmatpush1.bf16.xpose.msra.mxu0 %v1638
        %1656 = vmatprep.subr.bf16.mxu0 0
        %1657 = vmatpush2.bf16.xpose.msra.mxu0 0
        %1658 = vmatprep.subr.bf16.mxu0 0
        %1659 = vmatpush2.bf16.xpose.msra.mxu0 0
        %1660 = vmatprep.subr.bf16.mxu0 0
        %1661 = vmatpush2.bf16.xpose.msra.mxu0 0
        %1662 = vmatprep.subr.bf16.mxu0 0
        %1663 = vmatpush2.bf16.xpose.msra.mxu0 0
        %1664 = vmatprep.subr.bf16.mxu0 0
        %1665 = vmatpush2.bf16.xpose.msra.mxu0 0
        %1666 = vmatprep.subr.bf16.mxu0 0
        %1667 = vmatpush2.bf16.xpose.msra.mxu0 0
        %1668 = vmatprep.subr.bf16.mxu0 0
        %1669 = vmatpush2.bf16.xpose.msra.mxu0 0
        %1670 = vmatprep.subr.bf16.mxu0 0
        %1671 = vmatpush2.bf16.xpose.msra.mxu0 0
        %1672 = vmatprep.mubr.bf16.mxu0 0
        %1673 = vmatmul.mubr.bf16.gmra.mxu0 %v1635
        %v1674 = vpop.f32.mrf.mxu0
        %v1675 = vadd.f32 0.0, %v1674
        %v1676 = vpop.f32.mrf.mxu0
        %v1677 = vpop.f32.mrf.mxu0
        %v1678 = vpop.f32.mrf.mxu0
        %1679 = vdwg.mxu0
        %v1680 = vlaneseq
        %v1681 = vshrl.u32 %v1680, 7
        %v1682 = vlaneseq
        %v1683 = vand.u32 %v1682, 127
        %vm1684 = vcmp.le.s32.totalorder %v1683, %v1681
        %v1685 = vsel %vm1684, 1, 0
        %vm1686 = vcmp.eq.s32.totalorder %v1685, 1
        %v1687 = vsel %vm1686, %v1537, -1e+30
        %v1688 = vsel %vm1686, %v1583, -1e+30
        %v1689 = vsel %vm1686, %v1629, -1e+30
        %v1690 = vsel %vm1686, %v1675, -1e+30
        %v1691 = vsel %vm1495, %v1687, -inf
        %1692 = vmax.xlane.f32.xlu0 %v1691
        %v1693 = vpop.xlane.xlu0 %1692
        %v1694 = vsel %vm1495, %v1688, -inf
        %1695 = vmax.xlane.f32.xlu0 %v1694
        %v1696 = vpop.xlane.xlu0 %1695
        %v1697 = vsel %vm1495, %v1689, -inf
        %1698 = vmax.xlane.f32.xlu0 %v1697
        %v1699 = vpop.xlane.xlu0 %1698
        %v1700 = vsel %vm1495, %v1690, -inf
        %1701 = vmax.xlane.f32.xlu0 %v1700
        %v1702 = vpop.xlane.xlu0 %1701
        %v1703 = vmax.f32 %v1693, -1e+30
        %v1704 = vmax.f32 %v1696, -1e+30
        %v1705 = vmax.f32 %v1699, -1e+30
        %v1706 = vmax.f32 %v1702, -1e+30
        %v1707 = vsub.f32 -1e+30, %v1703
        %v1708 = vsub.f32 -1e+30, %v1704
        %v1709 = vsub.f32 -1e+30, %v1705
        %v1710 = vsub.f32 -1e+30, %v1706
        %v1711 = vmul.f32 %v1707, 1.442695
        %v1712 = vpow.pop %v1711
        %v1713 = vmul.f32 %v1708, 1.442695
        %v1714 = vpow.pop %v1713
        %v1715 = vmul.f32 %v1709, 1.442695
        %v1716 = vpow.pop %v1715
        %v1717 = vmul.f32 %v1710, 1.442695
        %v1718 = vpow.pop %v1717
        %v1719 = vsub.f32 %v1687, %v1703
        %v1720 = vsub.f32 %v1688, %v1704
        %v1721 = vsub.f32 %v1689, %v1705
        %v1722 = vsub.f32 %v1690, %v1706
        %v1723 = vmul.f32 %v1719, 1.442695
        %v1724 = vpow.pop %v1723
        %v1725 = vmul.f32 %v1720, 1.442695
        %v1726 = vpow.pop %v1725
        %v1727 = vmul.f32 %v1721, 1.442695
        %v1728 = vpow.pop %v1727
        %v1729 = vmul.f32 %v1722, 1.442695
        %v1730 = vpow.pop %v1729
        %v1731 = vmul.f32 %v1712, 0.0
        %v1732 = vmul.f32 %v1714, 0.0
        %v1733 = vmul.f32 %v1716, 0.0
        %v1734 = vmul.f32 %v1718, 0.0
        %v1735 = vsel %vm1495, %v1724, 0.0
        %1736 = vadd.xlane.f32.xlu0 %v1735
        %v1737 = vpop.xlane.xlu0 %1736
        %v1738 = vsel %vm1495, %v1726, 0.0
        %1739 = vadd.xlane.f32.xlu0 %v1738
        %v1740 = vpop.xlane.xlu0 %1739
        %v1741 = vsel %vm1495, %v1728, 0.0
        %1742 = vadd.xlane.f32.xlu0 %v1741
        %v1743 = vpop.xlane.xlu0 %1742
        %v1744 = vsel %vm1495, %v1730, 0.0
        %1745 = vadd.xlane.f32.xlu0 %v1744
        %v1746 = vpop.xlane.xlu0 %1745
        %v1747 = vadd.f32 %v1731, %v1737
        %v1748 = vadd.f32 %v1732, %v1740
        %v1749 = vadd.f32 %v1733, %v1743
        %v1750 = vadd.f32 %v1734, %v1746
        %v1751 = vpack.c.bf16 %v1724, %v1724
        %v1752 = vpack.c.bf16 %v1726, %v1726
        %v1753 = vpack.c.bf16 %v1728, %v1728
        %v1754 = vpack.c.bf16 %v1730, %v1730
        %v1756 = vsel %vm1495, %v1751, 0
        %vm1758 = vcmask 1043456
        %v1760 = vsel %vm1758, %v1491, 0
        %1762 = vmatprep.subr.bf16.mxu0 0
        %1763 = vmatpush1.bf16.msra.mxu0 0
        %1764 = vmatprep.subr.bf16.mxu0 0
        %1765 = vmatpush1.bf16.msra.mxu0 0
        %1766 = vmatprep.subr.bf16.mxu0 0
        %1767 = vmatpush1.bf16.msra.mxu0 0
        %1768 = vmatprep.subr.bf16.mxu0 0
        %1769 = vmatpush1.bf16.msra.mxu0 0
        %1770 = vmatprep.subr.bf16.mxu0 0
        %1771 = vmatpush1.bf16.msra.mxu0 0
        %1772 = vmatprep.subr.bf16.mxu0 0
        %1773 = vmatpush1.bf16.msra.mxu0 0
        %1774 = vmatprep.subr.bf16.mxu0 0
        %1775 = vmatpush1.bf16.msra.mxu0 0
        %1776 = vmatprep.subr.bf16.mxu0 0
        %1777 = vmatpush1.bf16.msra.mxu0 %v1760
        %1778 = vmatprep.subr.bf16.mxu0 0
        %1779 = vmatpush2.bf16.msra.mxu0 0
        %1780 = vmatprep.subr.bf16.mxu0 0
        %1781 = vmatpush2.bf16.msra.mxu0 0
        %1782 = vmatprep.subr.bf16.mxu0 0
        %1783 = vmatpush2.bf16.msra.mxu0 0
        %1784 = vmatprep.subr.bf16.mxu0 0
        %1785 = vmatpush2.bf16.msra.mxu0 0
        %1786 = vmatprep.subr.bf16.mxu0 0
        %1787 = vmatpush2.bf16.msra.mxu0 0
        %1788 = vmatprep.subr.bf16.mxu0 0
        %1789 = vmatpush2.bf16.msra.mxu0 0
        %1790 = vmatprep.subr.bf16.mxu0 0
        %1791 = vmatpush2.bf16.msra.mxu0 0
        %1792 = vmatprep.subr.bf16.mxu0 0
        %1793 = vmatpush2.bf16.msra.mxu0 0
        %1794 = vmatprep.mubr.bf16.mxu0 0
        %1795 = vmatmul.mubr.bf16.gmra.mxu0 %v1756
        %v1796 = vpop.f32.mrf.mxu0
        %v1797 = vadd.f32 0.0, %v1796
        %v1798 = vpop.f32.mrf.mxu0
        %v1799 = vpop.f32.mrf.mxu0
        %v1800 = vpop.f32.mrf.mxu0
        %1801 = vdwg.mxu0
        %v1803 = vsel %vm1495, %v1752, 0
        %v1806 = vsel %vm1758, %v1492, 0
        %1808 = vmatprep.subr.bf16.mxu0 0
        %1809 = vmatpush1.bf16.msra.mxu0 0
        %1810 = vmatprep.subr.bf16.mxu0 0
        %1811 = vmatpush1.bf16.msra.mxu0 0
        %1812 = vmatprep.subr.bf16.mxu0 0
        %1813 = vmatpush1.bf16.msra.mxu0 0
        %1814 = vmatprep.subr.bf16.mxu0 0
        %1815 = vmatpush1.bf16.msra.mxu0 0
        %1816 = vmatprep.subr.bf16.mxu0 0
        %1817 = vmatpush1.bf16.msra.mxu0 0
        %1818 = vmatprep.subr.bf16.mxu0 0
        %1819 = vmatpush1.bf16.msra.mxu0 0
        %1820 = vmatprep.subr.bf16.mxu0 0
        %1821 = vmatpush1.bf16.msra.mxu0 0
        %1822 = vmatprep.subr.bf16.mxu0 0
        %1823 = vmatpush1.bf16.msra.mxu0 %v1806
        %1824 = vmatprep.subr.bf16.mxu0 0
        %1825 = vmatpush2.bf16.msra.mxu0 0
        %1826 = vmatprep.subr.bf16.mxu0 0
        %1827 = vmatpush2.bf16.msra.mxu0 0
        %1828 = vmatprep.subr.bf16.mxu0 0
        %1829 = vmatpush2.bf16.msra.mxu0 0
        %1830 = vmatprep.subr.bf16.mxu0 0
        %1831 = vmatpush2.bf16.msra.mxu0 0
        %1832 = vmatprep.subr.bf16.mxu0 0
        %1833 = vmatpush2.bf16.msra.mxu0 0
        %1834 = vmatprep.subr.bf16.mxu0 0
        %1835 = vmatpush2.bf16.msra.mxu0 0
        %1836 = vmatprep.subr.bf16.mxu0 0
        %1837 = vmatpush2.bf16.msra.mxu0 0
        %1838 = vmatprep.subr.bf16.mxu0 0
        %1839 = vmatpush2.bf16.msra.mxu0 0
        %1840 = vmatprep.mubr.bf16.mxu0 0
        %1841 = vmatmul.mubr.bf16.gmra.mxu0 %v1803
        %v1842 = vpop.f32.mrf.mxu0
        %v1843 = vadd.f32 0.0, %v1842
        %v1844 = vpop.f32.mrf.mxu0
        %v1845 = vpop.f32.mrf.mxu0
        %v1846 = vpop.f32.mrf.mxu0
        %1847 = vdwg.mxu0
        %v1849 = vsel %vm1495, %v1753, 0
        %v1852 = vsel %vm1758, %v1493, 0
        %1854 = vmatprep.subr.bf16.mxu0 0
        %1855 = vmatpush1.bf16.msra.mxu0 0
        %1856 = vmatprep.subr.bf16.mxu0 0
        %1857 = vmatpush1.bf16.msra.mxu0 0
        %1858 = vmatprep.subr.bf16.mxu0 0
        %1859 = vmatpush1.bf16.msra.mxu0 0
        %1860 = vmatprep.subr.bf16.mxu0 0
        %1861 = vmatpush1.bf16.msra.mxu0 0
        %1862 = vmatprep.subr.bf16.mxu0 0
        %1863 = vmatpush1.bf16.msra.mxu0 0
        %1864 = vmatprep.subr.bf16.mxu0 0
        %1865 = vmatpush1.bf16.msra.mxu0 0
        %1866 = vmatprep.subr.bf16.mxu0 0
        %1867 = vmatpush1.bf16.msra.mxu0 0
        %1868 = vmatprep.subr.bf16.mxu0 0
        %1869 = vmatpush1.bf16.msra.mxu0 %v1852
        %1870 = vmatprep.subr.bf16.mxu0 0
        %1871 = vmatpush2.bf16.msra.mxu0 0
        %1872 = vmatprep.subr.bf16.mxu0 0
        %1873 = vmatpush2.bf16.msra.mxu0 0
        %1874 = vmatprep.subr.bf16.mxu0 0
        %1875 = vmatpush2.bf16.msra.mxu0 0
        %1876 = vmatprep.subr.bf16.mxu0 0
        %1877 = vmatpush2.bf16.msra.mxu0 0
        %1878 = vmatprep.subr.bf16.mxu0 0
        %1879 = vmatpush2.bf16.msra.mxu0 0
        %1880 = vmatprep.subr.bf16.mxu0 0
        %1881 = vmatpush2.bf16.msra.mxu0 0
        %1882 = vmatprep.subr.bf16.mxu0 0
        %1883 = vmatpush2.bf16.msra.mxu0 0
        %1884 = vmatprep.subr.bf16.mxu0 0
        %1885 = vmatpush2.bf16.msra.mxu0 0
        %1886 = vmatprep.mubr.bf16.mxu0 0
        %1887 = vmatmul.mubr.bf16.gmra.mxu0 %v1849
        %v1888 = vpop.f32.mrf.mxu0
        %v1889 = vadd.f32 0.0, %v1888
        %v1890 = vpop.f32.mrf.mxu0
        %v1891 = vpop.f32.mrf.mxu0
        %v1892 = vpop.f32.mrf.mxu0
        %1893 = vdwg.mxu0
        %v1895 = vsel %vm1495, %v1754, 0
        %v1898 = vsel %vm1758, %v1494, 0
        %1900 = vmatprep.subr.bf16.mxu0 0
        %1901 = vmatpush1.bf16.msra.mxu0 0
        %1902 = vmatprep.subr.bf16.mxu0 0
        %1903 = vmatpush1.bf16.msra.mxu0 0
        %1904 = vmatprep.subr.bf16.mxu0 0
        %1905 = vmatpush1.bf16.msra.mxu0 0
        %1906 = vmatprep.subr.bf16.mxu0 0
        %1907 = vmatpush1.bf16.msra.mxu0 0
        %1908 = vmatprep.subr.bf16.mxu0 0
        %1909 = vmatpush1.bf16.msra.mxu0 0
        %1910 = vmatprep.subr.bf16.mxu0 0
        %1911 = vmatpush1.bf16.msra.mxu0 0
        %1912 = vmatprep.subr.bf16.mxu0 0
        %1913 = vmatpush1.bf16.msra.mxu0 0
        %1914 = vmatprep.subr.bf16.mxu0 0
        %1915 = vmatpush1.bf16.msra.mxu0 %v1898
        %1916 = vmatprep.subr.bf16.mxu0 0
        %1917 = vmatpush2.bf16.msra.mxu0 0
        %1918 = vmatprep.subr.bf16.mxu0 0
        %1919 = vmatpush2.bf16.msra.mxu0 0
        %1920 = vmatprep.subr.bf16.mxu0 0
        %1921 = vmatpush2.bf16.msra.mxu0 0
        %1922 = vmatprep.subr.bf16.mxu0 0
        %1923 = vmatpush2.bf16.msra.mxu0 0
        %1924 = vmatprep.subr.bf16.mxu0 0
        %1925 = vmatpush2.bf16.msra.mxu0 0
        %1926 = vmatprep.subr.bf16.mxu0 0
        %1927 = vmatpush2.bf16.msra.mxu0 0
        %1928 = vmatprep.subr.bf16.mxu0 0
        %1929 = vmatpush2.bf16.msra.mxu0 0
        %1930 = vmatprep.subr.bf16.mxu0 0
        %1931 = vmatpush2.bf16.msra.mxu0 0
        %1932 = vmatprep.mubr.bf16.mxu0 0
        %1933 = vmatmul.mubr.bf16.gmra.mxu0 %v1895
        %v1934 = vpop.f32.mrf.mxu0
        %v1935 = vadd.f32 0.0, %v1934
        %v1936 = vpop.f32.mrf.mxu0
        %v1937 = vpop.f32.mrf.mxu0
        %v1938 = vpop.f32.mrf.mxu0
        %1939 = vdwg.mxu0
        %v1940 = vadd.f32 %v1731, %v1797
        %v1941 = vadd.f32 %v1732, %v1843
        %v1942 = vadd.f32 %v1733, %v1889
        %v1943 = vadd.f32 %v1734, %v1935
        %v1944 = vrcp.pop %v1747
        %v1945 = vrcp.pop %v1748
        %v1946 = vrcp.pop %v1749
        %v1947 = vrcp.pop %v1750
        %v1948 = vmul.f32 %v1940, %v1944
        %v1949 = vmul.f32 %v1941, %v1945
        %v1950 = vmul.f32 %v1942, %v1946
        %v1951 = vmul.f32 %v1943, %v1947
        %v1952 = vcombine.low %v1948, %v1950
        %v1953 = vcombine.high %v1948, %v1950
        %v1955 = vunpack.c.l.s4 1983009808
        %v1956 = vunpack.c.0.s8 %v1955
        %v1957 = vlaneseq
        %v1958 = vshrl.u32 %v1957, 7
        %v1959 = vsub.s32 %v1956, %v1958
        %v1960 = vrot.slane %v1952, %v1959
        %v1962 = vunpack.c.l.s4 1983009808
        %v1963 = vunpack.c.0.s8 %v1962
        %v1964 = vlaneseq
        %v1965 = vshrl.u32 %v1964, 7
        %v1966 = vsub.s32 %v1963, %v1965
        %v1967 = vrot.slane %v1953, %v1966
        %v1968 = vcombine.low %v1949, %v1951
        %v1969 = vcombine.high %v1949, %v1951
        %v1971 = vunpack.c.l.s4 1983009808
        %v1972 = vunpack.c.0.s8 %v1971
        %v1973 = vlaneseq
        %v1974 = vshrl.u32 %v1973, 7
        %v1975 = vsub.s32 %v1972, %v1974
        %v1976 = vrot.slane %v1968, %v1975
        %v1978 = vunpack.c.l.s4 1983009808
        %v1979 = vunpack.c.0.s8 %v1978
        %v1980 = vlaneseq
        %v1981 = vshrl.u32 %v1980, 7
        %v1982 = vsub.s32 %v1979, %v1981
        %v1983 = vrot.slane %v1969, %v1982
        %v1984 = vcombine.low %v1960, %v1976
        %v1985 = vcombine.high %v1960, %v1976
        %v1987 = vunpack.c.l.s4 1934713408
        %v1988 = vunpack.c.0.s8 %v1987
        %v1989 = vlaneseq
        %v1990 = vshrl.u32 %v1989, 7
        %v1991 = vsub.s32 %v1988, %v1990
        %v1992 = vrot.slane %v1984, %v1991
        %v1994 = vunpack.c.l.s4 1934713408
        %v1995 = vunpack.c.0.s8 %v1994
        %v1996 = vlaneseq
        %v1997 = vshrl.u32 %v1996, 7
        %v1998 = vsub.s32 %v1995, %v1997
        %v1999 = vrot.slane %v1985, %v1998
        %v2000 = vcombine.low %v1967, %v1983
        %v2001 = vcombine.high %v1967, %v1983
        %v2003 = vunpack.c.l.s4 1934713408
        %v2004 = vunpack.c.0.s8 %v2003
        %v2005 = vlaneseq
        %v2006 = vshrl.u32 %v2005, 7
        %v2007 = vsub.s32 %v2004, %v2006
        %v2008 = vrot.slane %v2000, %v2007
        %v2010 = vunpack.c.l.s4 1934713408
        %v2011 = vunpack.c.0.s8 %v2010
        %v2012 = vlaneseq
        %v2013 = vshrl.u32 %v2012, 7
        %v2014 = vsub.s32 %v2011, %v2013
        %v2015 = vrot.slane %v2001, %v2014
        %v2016 = vcombine.high %v1992, 0.0
        %v2017 = vcombine.high %v1999, 0.0
        %v2018 = vcombine.high %v2008, 0.0
        %v2019 = vcombine.high %v2015, 0.0
        %v2020 = vcombine.low %v1992, %v1999
        %v2022 = vunpack.c.l.s4 1983009808
        %v2023 = vunpack.c.0.s8 %v2022
        %v2024 = vlaneseq
        %v2025 = vshrl.u32 %v2024, 7
        %v2026 = vsub.s32 %v2023, %v2025
        %v2027 = vrot.slane %v2020, %v2026
        %v2028 = vcombine.low %v2016, %v2017
        %v2030 = vunpack.c.l.s4 1983009808
        %v2031 = vunpack.c.0.s8 %v2030
        %v2032 = vlaneseq
        %v2033 = vshrl.u32 %v2032, 7
        %v2034 = vsub.s32 %v2031, %v2033
        %v2035 = vrot.slane %v2028, %v2034
        %v2036 = vcombine.low %v2008, %v2015
        %v2038 = vunpack.c.l.s4 1983009808
        %v2039 = vunpack.c.0.s8 %v2038
        %v2040 = vlaneseq
        %v2041 = vshrl.u32 %v2040, 7
        %v2042 = vsub.s32 %v2039, %v2041
        %v2043 = vrot.slane %v2036, %v2042
        %v2044 = vcombine.low %v2018, %v2019
        %v2046 = vunpack.c.l.s4 1983009808
        %v2047 = vunpack.c.0.s8 %v2046
        %v2048 = vlaneseq
        %v2049 = vshrl.u32 %v2048, 7
        %v2050 = vsub.s32 %v2047, %v2049
        %v2051 = vrot.slane %v2044, %v2050
        %v2052 = vcombine.low %v2027, %v2035
        %v2053 = vcombine.high %v2027, %v2035
        %v2055 = vunpack.c.l.s4 1934713408
        %v2056 = vunpack.c.0.s8 %v2055
        %v2057 = vlaneseq
        %v2058 = vshrl.u32 %v2057, 7
        %v2059 = vsub.s32 %v2056, %v2058
        %v2060 = vrot.slane %v2052, %v2059
        %v2062 = vunpack.c.l.s4 1934713408
        %v2063 = vunpack.c.0.s8 %v2062
        %v2064 = vlaneseq
        %v2065 = vshrl.u32 %v2064, 7
        %v2066 = vsub.s32 %v2063, %v2065
        %v2067 = vrot.slane %v2053, %v2066
        %v2068 = vcombine.low %v2043, %v2051
        %v2069 = vcombine.high %v2043, %v2051
        %v2071 = vunpack.c.l.s4 1934713408
        %v2072 = vunpack.c.0.s8 %v2071
        %v2073 = vlaneseq
        %v2074 = vshrl.u32 %v2073, 7
        %v2075 = vsub.s32 %v2072, %v2074
        %v2076 = vrot.slane %v2068, %v2075
        %v2078 = vunpack.c.l.s4 1934713408
        %v2079 = vunpack.c.0.s8 %v2078
        %v2080 = vlaneseq
        %v2081 = vshrl.u32 %v2080, 7
        %v2082 = vsub.s32 %v2079, %v2081
        %v2083 = vrot.slane %v2069, %v2082
        %v2084 = vcombine.low %v2060, %v2076
        %v2085 = vcombine.high %v2060, %v2076
        %v2086 = vcombine.low %v2067, %v2083
        %v2087 = vcombine.high %v2067, %v2083
        %2089 = vrot.lane.b32.xlu0 %v2085, 8
        %v2090 = vpop.permute.xlu0 %2089
        %2093 = vrot.lane.b32.xlu0 %v2086, 16
        %v2094 = vpop.permute.xlu0 %2093
        %2097 = vrot.lane.b32.xlu0 %v2087, 24
        %v2098 = vpop.permute.xlu0 %2097
        %v2100 = vsel %vm1495, %v2084, %v2090
        %vm2101 = vcmask 130048
        %v2102 = vsel %vm2101, %v2100, %v2094
        %vm2103 = vcmask 195584
        %v2104 = vsel %vm2103, %v2102, %v2098
        %v2105 = vpack.c.bf16 %v2104, %v2104
        %v2107 = vlaneseq
        %v2108 = vshrl.u32 %v2107, 7
        %v2109 = vsub.s32 0, %v2108
        %v2110 = vrot.slane %v872, %v2109
        %v2116 = vunpack.c.l.b16 %v868
        %v2117 = vunpack.c.l.b16 %v869
        %v2118 = vunpack.c.l.b16 %v870
        %v2119 = vunpack.c.l.b16 %v871
        %v2120 = vpack.c.b16 %v2117, %v2116
        %v2121 = vpack.c.b16 %v2119, %v2118
        %v2125 = vsel %vm825, %v2105, 0
        %2127 = vmatprep.subr.bf16.mxu0 0
        %2128 = vmatpush1.bf16.msra.mxu0 0
        %2129 = vmatprep.subr.bf16.mxu0 0
        %2130 = vmatpush1.bf16.msra.mxu0 0
        %2131 = vmatprep.subr.bf16.mxu0 0
        %2132 = vmatpush1.bf16.msra.mxu0 0
        %2133 = vmatprep.subr.bf16.mxu0 0
        %2134 = vmatpush1.bf16.msra.mxu0 0
        %2135 = vmatprep.subr.bf16.mxu0 0
        %2136 = vmatpush1.bf16.msra.mxu0 0
        %2137 = vmatprep.subr.bf16.mxu0 0
        %2138 = vmatpush1.bf16.msra.mxu0 0
        %2139 = vmatprep.subr.bf16.mxu0 0
        %2140 = vmatpush1.bf16.msra.mxu0 %v2121
        %2141 = vmatprep.subr.bf16.mxu0 0
        %2142 = vmatpush1.bf16.msra.mxu0 %v2120
        %2143 = vmatprep.subr.bf16.mxu0 0
        %2144 = vmatpush2.bf16.msra.mxu0 0
        %2145 = vmatprep.subr.bf16.mxu0 0
        %2146 = vmatpush2.bf16.msra.mxu0 0
        %2147 = vmatprep.subr.bf16.mxu0 0
        %2148 = vmatpush2.bf16.msra.mxu0 0
        %2149 = vmatprep.subr.bf16.mxu0 0
        %2150 = vmatpush2.bf16.msra.mxu0 0
        %2151 = vmatprep.subr.bf16.mxu0 0
        %2152 = vmatpush2.bf16.msra.mxu0 0
        %2153 = vmatprep.subr.bf16.mxu0 0
        %2154 = vmatpush2.bf16.msra.mxu0 0
        %2155 = vmatprep.subr.bf16.mxu0 0
        %2156 = vmatpush2.bf16.msra.mxu0 0
        %2157 = vmatprep.subr.bf16.mxu0 0
        %2158 = vmatpush2.bf16.msra.mxu0 0
        %2159 = vmatprep.mubr.bf16.mxu0 0
        %2160 = vmatmul.mubr.bf16.gmra.mxu0 %v2125
        %v2161 = vpop.f32.mrf.mxu0
        %v2162 = vadd.f32 %v2110, %v2161
        %v2163 = vpop.f32.mrf.mxu0
        %v2164 = vpop.f32.mrf.mxu0
        %v2165 = vpop.f32.mrf.mxu0
        %2166 = vdwg.mxu0
        %v2167 = vadd.f32 %v820, %v2162
        %v2168 = vld [vmem:[%s11] sm:$0x1]
        %v2169 = vld [vmem:[%s12] sm:$0x1]
        %v2170 = vsel %vm825, %v2167, 0.0
        %2171 = vadd.xlane.f32.xlu0 %v2170
        %v2172 = vpop.xlane.xlu0 %2171
        %v2173 = vmul.f32 %v2172, %v829
        %v2174 = vsub.f32 %v2167, %v2173
        %v2175 = vmul.f32 %v2174, %v2174
        %v2176 = vsel %vm825, %v2175, 0.0
        %2177 = vadd.xlane.f32.xlu0 %v2176
        %v2178 = vpop.xlane.xlu0 %2177
        %v2179 = vmul.f32 %v2178, %v829
        %v2180 = vadd.f32 %v2179, 1e-05
        %v2181 = vrsqrt.pop %v2180
        %v2182 = vmul.f32 %v2174, %v2181
        %v2184 = vlaneseq
        %v2185 = vshrl.u32 %v2184, 7
        %v2186 = vsub.s32 0, %v2185
        %v2187 = vrot.slane %v2168, %v2186
        %v2189 = vmul.f32 %v2182, %v2187
        %v2191 = vlaneseq
        %v2192 = vshrl.u32 %v2191, 7
        %v2193 = vsub.s32 0, %v2192
        %v2194 = vrot.slane %v2169, %v2193
        %v2196 = vadd.f32 %v2189, %v2194
        %v2197 = vld [vmem:[%s13] sm:$0xf]
        %v2198 = vld [vmem:[%s13 + $0x4] sm:$0xf]
        %v2199 = vld [vmem:[%s13 + $0x8] sm:$0xf]
        %v2200 = vld [vmem:[%s13 + $0xc] sm:$0xf]
        %v2201 = vld [vmem:[%s14] sm:$0x1]
        %v2202 = vld [vmem:[%s15] sm:$0xf]
        %v2203 = vld [vmem:[%s15 + $0x4] sm:$0xf]
        %v2204 = vld [vmem:[%s15 + $0x8] sm:$0xf]
        %v2205 = vld [vmem:[%s15 + $0xc] sm:$0xf]
        %v2206 = vld [vmem:[%s16] sm:$0xf]
        %v2207 = vld [vmem:[%s16 + $0x4] sm:$0xf]
        %v2208 = vld [vmem:[%s16 + $0x8] sm:$0xf]
        %v2209 = vld [vmem:[%s16 + $0xc] sm:$0xf]
        %v2210 = vld [vmem:[%s17] sm:$0x1]
        %v2211 = vld [vmem:[%s18] sm:$0xf]
        %v2212 = vld [vmem:[%s18 + $0x4] sm:$0xf]
        %v2213 = vld [vmem:[%s18 + $0x8] sm:$0xf]
        %v2214 = vld [vmem:[%s18 + $0xc] sm:$0xf]
        %v2215 = vld [vmem:[%s19] sm:$0x1]
        %v2216 = vpack.c.bf16 %v2196, %v2196
        %v2218 = vlaneseq
        %v2219 = vshrl.u32 %v2218, 7
        %v2220 = vsub.s32 0, %v2219
        %v2221 = vrot.slane %v2201, %v2220
        %v2227 = vunpack.c.l.b16 %v2197
        %v2228 = vunpack.c.l.b16 %v2198
        %v2229 = vunpack.c.l.b16 %v2199
        %v2230 = vunpack.c.l.b16 %v2200
        %v2231 = vpack.c.b16 %v2228, %v2227
        %v2232 = vpack.c.b16 %v2230, %v2229
        %v2236 = vsel %vm825, %v2216, 0
        %2238 = vmatprep.subr.bf16.mxu0 0
        %2239 = vmatpush1.bf16.msra.mxu0 0
        %2240 = vmatprep.subr.bf16.mxu0 0
        %2241 = vmatpush1.bf16.msra.mxu0 0
        %2242 = vmatprep.subr.bf16.mxu0 0
        %2243 = vmatpush1.bf16.msra.mxu0 0
        %2244 = vmatprep.subr.bf16.mxu0 0
        %2245 = vmatpush1.bf16.msra.mxu0 0
        %2246 = vmatprep.subr.bf16.mxu0 0
        %2247 = vmatpush1.bf16.msra.mxu0 0
        %2248 = vmatprep.subr.bf16.mxu0 0
        %2249 = vmatpush1.bf16.msra.mxu0 0
        %2250 = vmatprep.subr.bf16.mxu0 0
        %2251 = vmatpush1.bf16.msra.mxu0 %v2232
        %2252 = vmatprep.subr.bf16.mxu0 0
        %2253 = vmatpush1.bf16.msra.mxu0 %v2231
        %2254 = vmatprep.subr.bf16.mxu0 0
        %2255 = vmatpush2.bf16.msra.mxu0 0
        %2256 = vmatprep.subr.bf16.mxu0 0
        %2257 = vmatpush2.bf16.msra.mxu0 0
        %2258 = vmatprep.subr.bf16.mxu0 0
        %2259 = vmatpush2.bf16.msra.mxu0 0
        %2260 = vmatprep.subr.bf16.mxu0 0
        %2261 = vmatpush2.bf16.msra.mxu0 0
        %2262 = vmatprep.subr.bf16.mxu0 0
        %2263 = vmatpush2.bf16.msra.mxu0 0
        %2264 = vmatprep.subr.bf16.mxu0 0
        %2265 = vmatpush2.bf16.msra.mxu0 0
        %2266 = vmatprep.subr.bf16.mxu0 0
        %2267 = vmatpush2.bf16.msra.mxu0 0
        %2268 = vmatprep.subr.bf16.mxu0 0
        %2269 = vmatpush2.bf16.msra.mxu0 0
        %2270 = vmatprep.mubr.bf16.mxu0 0
        %2271 = vmatmul.mubr.bf16.gmra.mxu0 %v2236
        %v2272 = vpop.f32.mrf.mxu0
        %v2273 = vadd.f32 %v2221, %v2272
        %v2274 = vpop.f32.mrf.mxu0
        %v2275 = vpop.f32.mrf.mxu0
        %v2276 = vpop.f32.mrf.mxu0
        %2277 = vdwg.mxu0
        %v2280 = vunpack.c.l.b16 %v821
        %v2281 = vunpack.c.l.b16 %v822
        %v2282 = vpack.c.b16 %v2281, %v2280
        %v2287 = vunpack.c.l.b16 %v2202
        %v2288 = vunpack.c.l.b16 %v2203
        %v2289 = vunpack.c.l.b16 %v2204
        %v2290 = vunpack.c.l.b16 %v2205
        %v2291 = vpack.c.b16 %v2288, %v2287
        %v2292 = vpack.c.b16 %v2290, %v2289
        %v2296 = vsel %vm825, %v2282, 0
        %2298 = vmatprep.subr.bf16.mxu0 0
        %2299 = vmatpush1.bf16.msra.mxu0 0
        %2300 = vmatprep.subr.bf16.mxu0 0
        %2301 = vmatpush1.bf16.msra.mxu0 0
        %2302 = vmatprep.subr.bf16.mxu0 0
        %2303 = vmatpush1.bf16.msra.mxu0 0
        %2304 = vmatprep.subr.bf16.mxu0 0
        %2305 = vmatpush1.bf16.msra.mxu0 0
        %2306 = vmatprep.subr.bf16.mxu0 0
        %2307 = vmatpush1.bf16.msra.mxu0 0
        %2308 = vmatprep.subr.bf16.mxu0 0
        %2309 = vmatpush1.bf16.msra.mxu0 0
        %2310 = vmatprep.subr.bf16.mxu0 0
        %2311 = vmatpush1.bf16.msra.mxu0 %v2292
        %2312 = vmatprep.subr.bf16.mxu0 0
        %2313 = vmatpush1.bf16.msra.mxu0 %v2291
        %2314 = vmatprep.subr.bf16.mxu0 0
        %2315 = vmatpush2.bf16.msra.mxu0 0
        %2316 = vmatprep.subr.bf16.mxu0 0
        %2317 = vmatpush2.bf16.msra.mxu0 0
        %2318 = vmatprep.subr.bf16.mxu0 0
        %2319 = vmatpush2.bf16.msra.mxu0 0
        %2320 = vmatprep.subr.bf16.mxu0 0
        %2321 = vmatpush2.bf16.msra.mxu0 0
        %2322 = vmatprep.subr.bf16.mxu0 0
        %2323 = vmatpush2.bf16.msra.mxu0 0
        %2324 = vmatprep.subr.bf16.mxu0 0
        %2325 = vmatpush2.bf16.msra.mxu0 0
        %2326 = vmatprep.subr.bf16.mxu0 0
        %2327 = vmatpush2.bf16.msra.mxu0 0
        %2328 = vmatprep.subr.bf16.mxu0 0
        %2329 = vmatpush2.bf16.msra.mxu0 0
        %2330 = vmatprep.mubr.bf16.mxu0 0
        %2331 = vmatmul.mubr.bf16.gmra.mxu0 %v2296
        %v2332 = vpop.f32.mrf.mxu0
        %v2333 = vadd.f32 0.0, %v2332
        %v2334 = vpop.f32.mrf.mxu0
        %v2335 = vpop.f32.mrf.mxu0
        %v2336 = vadd.f32 0.0, %v2335
        %v2337 = vpop.f32.mrf.mxu0
        %2338 = vdwg.mxu0
        %v2340 = vlaneseq
        %v2341 = vshrl.u32 %v2340, 7
        %v2342 = vsub.s32 0, %v2341
        %v2343 = vrot.slane %v2210, %v2342
        %v2349 = vunpack.c.l.b16 %v2206
        %v2350 = vunpack.c.l.b16 %v2207
        %v2351 = vunpack.c.l.b16 %v2208
        %v2352 = vunpack.c.l.b16 %v2209
        %v2353 = vpack.c.b16 %v2350, %v2349
        %v2354 = vpack.c.b16 %v2352, %v2351
        %2357 = vmatprep.subr.bf16.mxu0 0
        %2358 = vmatpush1.bf16.msra.mxu0 0
        %2359 = vmatprep.subr.bf16.mxu0 0
        %2360 = vmatpush1.bf16.msra.mxu0 0
        %2361 = vmatprep.subr.bf16.mxu0 0
        %2362 = vmatpush1.bf16.msra.mxu0 0
        %2363 = vmatprep.subr.bf16.mxu0 0
        %2364 = vmatpush1.bf16.msra.mxu0 0
        %2365 = vmatprep.subr.bf16.mxu0 0
        %2366 = vmatpush1.bf16.msra.mxu0 0
        %2367 = vmatprep.subr.bf16.mxu0 0
        %2368 = vmatpush1.bf16.msra.mxu0 0
        %2369 = vmatprep.subr.bf16.mxu0 0
        %2370 = vmatpush1.bf16.msra.mxu0 %v2354
        %2371 = vmatprep.subr.bf16.mxu0 0
        %2372 = vmatpush1.bf16.msra.mxu0 %v2353
        %2373 = vmatprep.subr.bf16.mxu0 0
        %2374 = vmatpush2.bf16.msra.mxu0 0
        %2375 = vmatprep.subr.bf16.mxu0 0
        %2376 = vmatpush2.bf16.msra.mxu0 0
        %2377 = vmatprep.subr.bf16.mxu0 0
        %2378 = vmatpush2.bf16.msra.mxu0 0
        %2379 = vmatprep.subr.bf16.mxu0 0
        %2380 = vmatpush2.bf16.msra.mxu0 0
        %2381 = vmatprep.subr.bf16.mxu0 0
        %2382 = vmatpush2.bf16.msra.mxu0 0
        %2383 = vmatprep.subr.bf16.mxu0 0
        %2384 = vmatpush2.bf16.msra.mxu0 0
        %2385 = vmatprep.subr.bf16.mxu0 0
        %2386 = vmatpush2.bf16.msra.mxu0 0
        %2387 = vmatprep.subr.bf16.mxu0 0
        %2388 = vmatpush2.bf16.msra.mxu0 0
        %2389 = vmatprep.mubr.bf16.mxu0 0
        %2390 = vmatmul.mubr.bf16.gmra.mxu0 %v2296
        %v2391 = vpop.f32.mrf.mxu0
        %v2392 = vadd.f32 %v2343, %v2391
        %v2393 = vpop.f32.mrf.mxu0
        %v2394 = vpop.f32.mrf.mxu0
        %v2395 = vadd.f32 %v2343, %v2394
        %v2396 = vpop.f32.mrf.mxu0
        %2397 = vdwg.mxu0
        %2399 = vrot.lane.b32.xlu0 %v2273, 120
        %v2400 = vpop.permute.xlu0 %2399
        %2402 = vrot.lane.b32.xlu0 %v2273, 112
        %v2403 = vpop.permute.xlu0 %2402
        %2405 = vrot.lane.b32.xlu0 %v2273, 104
        %v2406 = vpop.permute.xlu0 %2405
        %v2408 = vcombine.low %v2273, %v2403
        %v2409 = vcombine.high %v2273, %v2403
        %v2411 = vunpack.c.l.s4 1983009808
        %v2412 = vunpack.c.0.s8 %v2411
        %v2413 = vlaneseq
        %v2414 = vshrl.u32 %v2413, 7
        %v2415 = vsub.s32 %v2412, %v2414
        %v2416 = vrot.slane %v2408, %v2415
        %v2418 = vunpack.c.l.s4 1983009808
        %v2419 = vunpack.c.0.s8 %v2418
        %v2420 = vlaneseq
        %v2421 = vshrl.u32 %v2420, 7
        %v2422 = vsub.s32 %v2419, %v2421
        %v2423 = vrot.slane %v2409, %v2422
        %v2424 = vcombine.low %v2400, %v2406
        %v2425 = vcombine.high %v2400, %v2406
        %v2427 = vunpack.c.l.s4 1983009808
        %v2428 = vunpack.c.0.s8 %v2427
        %v2429 = vlaneseq
        %v2430 = vshrl.u32 %v2429, 7
        %v2431 = vsub.s32 %v2428, %v2430
        %v2432 = vrot.slane %v2424, %v2431
        %v2434 = vunpack.c.l.s4 1983009808
        %v2435 = vunpack.c.0.s8 %v2434
        %v2436 = vlaneseq
        %v2437 = vshrl.u32 %v2436, 7
        %v2438 = vsub.s32 %v2435, %v2437
        %v2439 = vrot.slane %v2425, %v2438
        %v2440 = vcombine.low %v2416, %v2432
        %v2441 = vcombine.high %v2416, %v2432
        %v2443 = vunpack.c.l.s4 1934713408
        %v2444 = vunpack.c.0.s8 %v2443
        %v2445 = vlaneseq
        %v2446 = vshrl.u32 %v2445, 7
        %v2447 = vsub.s32 %v2444, %v2446
        %v2448 = vrot.slane %v2440, %v2447
        %v2450 = vunpack.c.l.s4 1934713408
        %v2451 = vunpack.c.0.s8 %v2450
        %v2452 = vlaneseq
        %v2453 = vshrl.u32 %v2452, 7
        %v2454 = vsub.s32 %v2451, %v2453
        %v2455 = vrot.slane %v2441, %v2454
        %v2456 = vcombine.low %v2423, %v2439
        %v2457 = vcombine.high %v2423, %v2439
        %v2459 = vunpack.c.l.s4 1934713408
        %v2460 = vunpack.c.0.s8 %v2459
        %v2461 = vlaneseq
        %v2462 = vshrl.u32 %v2461, 7
        %v2463 = vsub.s32 %v2460, %v2462
        %v2464 = vrot.slane %v2456, %v2463
        %v2466 = vunpack.c.l.s4 1934713408
        %v2467 = vunpack.c.0.s8 %v2466
        %v2468 = vlaneseq
        %v2469 = vshrl.u32 %v2468, 7
        %v2470 = vsub.s32 %v2467, %v2469
        %v2471 = vrot.slane %v2457, %v2470
        %v2472 = vcombine.high %v2448, 0.0
        %v2473 = vcombine.high %v2455, 0.0
        %v2474 = vcombine.high %v2464, 0.0
        %v2475 = vcombine.high %v2471, 0.0
        %v2476 = vcombine.low %v2448, %v2455
        %v2478 = vunpack.c.l.s4 1983009808
        %v2479 = vunpack.c.0.s8 %v2478
        %v2480 = vlaneseq
        %v2481 = vshrl.u32 %v2480, 7
        %v2482 = vsub.s32 %v2479, %v2481
        %v2483 = vrot.slane %v2476, %v2482
        %v2484 = vcombine.low %v2472, %v2473
        %v2486 = vunpack.c.l.s4 1983009808
        %v2487 = vunpack.c.0.s8 %v2486
        %v2488 = vlaneseq
        %v2489 = vshrl.u32 %v2488, 7
        %v2490 = vsub.s32 %v2487, %v2489
        %v2491 = vrot.slane %v2484, %v2490
        %v2492 = vcombine.low %v2464, %v2471
        %v2494 = vunpack.c.l.s4 1983009808
        %v2495 = vunpack.c.0.s8 %v2494
        %v2496 = vlaneseq
        %v2497 = vshrl.u32 %v2496, 7
        %v2498 = vsub.s32 %v2495, %v2497
        %v2499 = vrot.slane %v2492, %v2498
        %v2500 = vcombine.low %v2474, %v2475
        %v2502 = vunpack.c.l.s4 1983009808
        %v2503 = vunpack.c.0.s8 %v2502
        %v2504 = vlaneseq
        %v2505 = vshrl.u32 %v2504, 7
        %v2506 = vsub.s32 %v2503, %v2505
        %v2507 = vrot.slane %v2500, %v2506
        %v2508 = vcombine.low %v2483, %v2491
        %v2509 = vcombine.high %v2483, %v2491
        %v2511 = vunpack.c.l.s4 1934713408
        %v2512 = vunpack.c.0.s8 %v2511
        %v2513 = vlaneseq
        %v2514 = vshrl.u32 %v2513, 7
        %v2515 = vsub.s32 %v2512, %v2514
        %v2516 = vrot.slane %v2508, %v2515
        %v2518 = vunpack.c.l.s4 1934713408
        %v2519 = vunpack.c.0.s8 %v2518
        %v2520 = vlaneseq
        %v2521 = vshrl.u32 %v2520, 7
        %v2522 = vsub.s32 %v2519, %v2521
        %v2523 = vrot.slane %v2509, %v2522
        %v2524 = vcombine.low %v2499, %v2507
        %v2525 = vcombine.high %v2499, %v2507
        %v2527 = vunpack.c.l.s4 1934713408
        %v2528 = vunpack.c.0.s8 %v2527
        %v2529 = vlaneseq
        %v2530 = vshrl.u32 %v2529, 7
        %v2531 = vsub.s32 %v2528, %v2530
        %v2532 = vrot.slane %v2524, %v2531
        %v2534 = vunpack.c.l.s4 1934713408
        %v2535 = vunpack.c.0.s8 %v2534
        %v2536 = vlaneseq
        %v2537 = vshrl.u32 %v2536, 7
        %v2538 = vsub.s32 %v2535, %v2537
        %v2539 = vrot.slane %v2525, %v2538
        %v2540 = vcombine.low %v2516, %v2532
        %v2541 = vcombine.high %v2516, %v2532
        %v2542 = vcombine.low %v2523, %v2539
        %v2543 = vcombine.high %v2523, %v2539
        %v2544 = vpack.c.bf16 %v2540, %v2540
        %v2545 = vpack.c.bf16 %v2541, %v2541
        %v2546 = vpack.c.bf16 %v2542, %v2542
        %v2547 = vpack.c.bf16 %v2543, %v2543
        %2550 = vrot.lane.b32.xlu0 %v2333, 120
        %v2551 = vpop.permute.xlu0 %2550
        %2552 = vrot.lane.b32.xlu0 %v2336, 120
        %v2553 = vpop.permute.xlu0 %2552
        %2556 = vrot.lane.b32.xlu0 %v2333, 112
        %v2557 = vpop.permute.xlu0 %2556
        %2558 = vrot.lane.b32.xlu0 %v2336, 112
        %v2559 = vpop.permute.xlu0 %2558
        %2562 = vrot.lane.b32.xlu0 %v2333, 104
        %v2563 = vpop.permute.xlu0 %2562
        %2564 = vrot.lane.b32.xlu0 %v2336, 104
        %v2565 = vpop.permute.xlu0 %2564
        %v2568 = vcombine.low %v2333, %v2557
        %v2569 = vcombine.high %v2333, %v2557
        %v2571 = vunpack.c.l.s4 1983009808
        %v2572 = vunpack.c.0.s8 %v2571
        %v2573 = vlaneseq
        %v2574 = vshrl.u32 %v2573, 7
        %v2575 = vsub.s32 %v2572, %v2574
        %v2576 = vrot.slane %v2568, %v2575
        %v2578 = vunpack.c.l.s4 1983009808
        %v2579 = vunpack.c.0.s8 %v2578
        %v2580 = vlaneseq
        %v2581 = vshrl.u32 %v2580, 7
        %v2582 = vsub.s32 %v2579, %v2581
        %v2583 = vrot.slane %v2569, %v2582
        %v2584 = vcombine.low %v2551, %v2563
        %v2585 = vcombine.high %v2551, %v2563
        %v2587 = vunpack.c.l.s4 1983009808
        %v2588 = vunpack.c.0.s8 %v2587
        %v2589 = vlaneseq
        %v2590 = vshrl.u32 %v2589, 7
        %v2591 = vsub.s32 %v2588, %v2590
        %v2592 = vrot.slane %v2584, %v2591
        %v2594 = vunpack.c.l.s4 1983009808
        %v2595 = vunpack.c.0.s8 %v2594
        %v2596 = vlaneseq
        %v2597 = vshrl.u32 %v2596, 7
        %v2598 = vsub.s32 %v2595, %v2597
        %v2599 = vrot.slane %v2585, %v2598
        %v2600 = vcombine.low %v2576, %v2592
        %v2601 = vcombine.high %v2576, %v2592
        %v2603 = vunpack.c.l.s4 1934713408
        %v2604 = vunpack.c.0.s8 %v2603
        %v2605 = vlaneseq
        %v2606 = vshrl.u32 %v2605, 7
        %v2607 = vsub.s32 %v2604, %v2606
        %v2608 = vrot.slane %v2600, %v2607
        %v2610 = vunpack.c.l.s4 1934713408
        %v2611 = vunpack.c.0.s8 %v2610
        %v2612 = vlaneseq
        %v2613 = vshrl.u32 %v2612, 7
        %v2614 = vsub.s32 %v2611, %v2613
        %v2615 = vrot.slane %v2601, %v2614
        %v2616 = vcombine.low %v2583, %v2599
        %v2617 = vcombine.high %v2583, %v2599
        %v2619 = vunpack.c.l.s4 1934713408
        %v2620 = vunpack.c.0.s8 %v2619
        %v2621 = vlaneseq
        %v2622 = vshrl.u32 %v2621, 7
        %v2623 = vsub.s32 %v2620, %v2622
        %v2624 = vrot.slane %v2616, %v2623
        %v2626 = vunpack.c.l.s4 1934713408
        %v2627 = vunpack.c.0.s8 %v2626
        %v2628 = vlaneseq
        %v2629 = vshrl.u32 %v2628, 7
        %v2630 = vsub.s32 %v2627, %v2629
        %v2631 = vrot.slane %v2617, %v2630
        %v2632 = vcombine.high %v2608, 0.0
        %v2633 = vcombine.high %v2615, 0.0
        %v2634 = vcombine.high %v2624, 0.0
        %v2635 = vcombine.high %v2631, 0.0
        %v2636 = vcombine.low %v2336, %v2559
        %v2637 = vcombine.high %v2336, %v2559
        %v2639 = vunpack.c.l.s4 1983009808
        %v2640 = vunpack.c.0.s8 %v2639
        %v2641 = vlaneseq
        %v2642 = vshrl.u32 %v2641, 7
        %v2643 = vsub.s32 %v2640, %v2642
        %v2644 = vrot.slane %v2636, %v2643
        %v2646 = vunpack.c.l.s4 1983009808
        %v2647 = vunpack.c.0.s8 %v2646
        %v2648 = vlaneseq
        %v2649 = vshrl.u32 %v2648, 7
        %v2650 = vsub.s32 %v2647, %v2649
        %v2651 = vrot.slane %v2637, %v2650
        %v2652 = vcombine.low %v2553, %v2565
        %v2653 = vcombine.high %v2553, %v2565
        %v2655 = vunpack.c.l.s4 1983009808
        %v2656 = vunpack.c.0.s8 %v2655
        %v2657 = vlaneseq
        %v2658 = vshrl.u32 %v2657, 7
        %v2659 = vsub.s32 %v2656, %v2658
        %v2660 = vrot.slane %v2652, %v2659
        %v2662 = vunpack.c.l.s4 1983009808
        %v2663 = vunpack.c.0.s8 %v2662
        %v2664 = vlaneseq
        %v2665 = vshrl.u32 %v2664, 7
        %v2666 = vsub.s32 %v2663, %v2665
        %v2667 = vrot.slane %v2653, %v2666
        %v2668 = vcombine.low %v2644, %v2660
        %v2669 = vcombine.high %v2644, %v2660
        %v2671 = vunpack.c.l.s4 1934713408
        %v2672 = vunpack.c.0.s8 %v2671
        %v2673 = vlaneseq
        %v2674 = vshrl.u32 %v2673, 7
        %v2675 = vsub.s32 %v2672, %v2674
        %v2676 = vrot.slane %v2668, %v2675
        %v2678 = vunpack.c.l.s4 1934713408
        %v2679 = vunpack.c.0.s8 %v2678
        %v2680 = vlaneseq
        %v2681 = vshrl.u32 %v2680, 7
        %v2682 = vsub.s32 %v2679, %v2681
        %v2683 = vrot.slane %v2669, %v2682
        %v2684 = vcombine.low %v2651, %v2667
        %v2685 = vcombine.high %v2651, %v2667
        %v2687 = vunpack.c.l.s4 1934713408
        %v2688 = vunpack.c.0.s8 %v2687
        %v2689 = vlaneseq
        %v2690 = vshrl.u32 %v2689, 7
        %v2691 = vsub.s32 %v2688, %v2690
        %v2692 = vrot.slane %v2684, %v2691
        %v2694 = vunpack.c.l.s4 1934713408
        %v2695 = vunpack.c.0.s8 %v2694
        %v2696 = vlaneseq
        %v2697 = vshrl.u32 %v2696, 7
        %v2698 = vsub.s32 %v2695, %v2697
        %v2699 = vrot.slane %v2685, %v2698
        %v2700 = vcombine.high %v2676, 0.0
        %v2701 = vcombine.high %v2683, 0.0
        %v2702 = vcombine.high %v2692, 0.0
        %v2703 = vcombine.high %v2699, 0.0
        %v2704 = vcombine.low %v2608, %v2615
        %v2706 = vunpack.c.l.s4 1983009808
        %v2707 = vunpack.c.0.s8 %v2706
        %v2708 = vlaneseq
        %v2709 = vshrl.u32 %v2708, 7
        %v2710 = vsub.s32 %v2707, %v2709
        %v2711 = vrot.slane %v2704, %v2710
        %v2712 = vcombine.low %v2632, %v2633
        %v2714 = vunpack.c.l.s4 1983009808
        %v2715 = vunpack.c.0.s8 %v2714
        %v2716 = vlaneseq
        %v2717 = vshrl.u32 %v2716, 7
        %v2718 = vsub.s32 %v2715, %v2717
        %v2719 = vrot.slane %v2712, %v2718
        %v2720 = vcombine.low %v2624, %v2631
        %v2722 = vunpack.c.l.s4 1983009808
        %v2723 = vunpack.c.0.s8 %v2722
        %v2724 = vlaneseq
        %v2725 = vshrl.u32 %v2724, 7
        %v2726 = vsub.s32 %v2723, %v2725
        %v2727 = vrot.slane %v2720, %v2726
        %v2728 = vcombine.low %v2634, %v2635
        %v2730 = vunpack.c.l.s4 1983009808
        %v2731 = vunpack.c.0.s8 %v2730
        %v2732 = vlaneseq
        %v2733 = vshrl.u32 %v2732, 7
        %v2734 = vsub.s32 %v2731, %v2733
        %v2735 = vrot.slane %v2728, %v2734
        %v2736 = vcombine.low %v2711, %v2719
        %v2737 = vcombine.high %v2711, %v2719
        %v2739 = vunpack.c.l.s4 1934713408
        %v2740 = vunpack.c.0.s8 %v2739
        %v2741 = vlaneseq
        %v2742 = vshrl.u32 %v2741, 7
        %v2743 = vsub.s32 %v2740, %v2742
        %v2744 = vrot.slane %v2736, %v2743
        %v2746 = vunpack.c.l.s4 1934713408
        %v2747 = vunpack.c.0.s8 %v2746
        %v2748 = vlaneseq
        %v2749 = vshrl.u32 %v2748, 7
        %v2750 = vsub.s32 %v2747, %v2749
        %v2751 = vrot.slane %v2737, %v2750
        %v2752 = vcombine.low %v2727, %v2735
        %v2753 = vcombine.high %v2727, %v2735
        %v2755 = vunpack.c.l.s4 1934713408
        %v2756 = vunpack.c.0.s8 %v2755
        %v2757 = vlaneseq
        %v2758 = vshrl.u32 %v2757, 7
        %v2759 = vsub.s32 %v2756, %v2758
        %v2760 = vrot.slane %v2752, %v2759
        %v2762 = vunpack.c.l.s4 1934713408
        %v2763 = vunpack.c.0.s8 %v2762
        %v2764 = vlaneseq
        %v2765 = vshrl.u32 %v2764, 7
        %v2766 = vsub.s32 %v2763, %v2765
        %v2767 = vrot.slane %v2753, %v2766
        %v2768 = vcombine.low %v2744, %v2760
        %v2769 = vcombine.high %v2744, %v2760
        %v2770 = vcombine.low %v2751, %v2767
        %v2771 = vcombine.high %v2751, %v2767
        %v2772 = vcombine.low %v2676, %v2683
        %v2774 = vunpack.c.l.s4 1983009808
        %v2775 = vunpack.c.0.s8 %v2774
        %v2776 = vlaneseq
        %v2777 = vshrl.u32 %v2776, 7
        %v2778 = vsub.s32 %v2775, %v2777
        %v2779 = vrot.slane %v2772, %v2778
        %v2780 = vcombine.low %v2700, %v2701
        %v2782 = vunpack.c.l.s4 1983009808
        %v2783 = vunpack.c.0.s8 %v2782
        %v2784 = vlaneseq
        %v2785 = vshrl.u32 %v2784, 7
        %v2786 = vsub.s32 %v2783, %v2785
        %v2787 = vrot.slane %v2780, %v2786
        %v2788 = vcombine.low %v2692, %v2699
        %v2790 = vunpack.c.l.s4 1983009808
        %v2791 = vunpack.c.0.s8 %v2790
        %v2792 = vlaneseq
        %v2793 = vshrl.u32 %v2792, 7
        %v2794 = vsub.s32 %v2791, %v2793
        %v2795 = vrot.slane %v2788, %v2794
        %v2796 = vcombine.low %v2702, %v2703
        %v2798 = vunpack.c.l.s4 1983009808
        %v2799 = vunpack.c.0.s8 %v2798
        %v2800 = vlaneseq
        %v2801 = vshrl.u32 %v2800, 7
        %v2802 = vsub.s32 %v2799, %v2801
        %v2803 = vrot.slane %v2796, %v2802
        %v2804 = vcombine.low %v2779, %v2787
        %v2805 = vcombine.high %v2779, %v2787
        %v2807 = vunpack.c.l.s4 1934713408
        %v2808 = vunpack.c.0.s8 %v2807
        %v2809 = vlaneseq
        %v2810 = vshrl.u32 %v2809, 7
        %v2811 = vsub.s32 %v2808, %v2810
        %v2812 = vrot.slane %v2804, %v2811
        %v2814 = vunpack.c.l.s4 1934713408
        %v2815 = vunpack.c.0.s8 %v2814
        %v2816 = vlaneseq
        %v2817 = vshrl.u32 %v2816, 7
        %v2818 = vsub.s32 %v2815, %v2817
        %v2819 = vrot.slane %v2805, %v2818
        %v2820 = vcombine.low %v2795, %v2803
        %v2821 = vcombine.high %v2795, %v2803
        %v2823 = vunpack.c.l.s4 1934713408
        %v2824 = vunpack.c.0.s8 %v2823
        %v2825 = vlaneseq
        %v2826 = vshrl.u32 %v2825, 7
        %v2827 = vsub.s32 %v2824, %v2826
        %v2828 = vrot.slane %v2820, %v2827
        %v2830 = vunpack.c.l.s4 1934713408
        %v2831 = vunpack.c.0.s8 %v2830
        %v2832 = vlaneseq
        %v2833 = vshrl.u32 %v2832, 7
        %v2834 = vsub.s32 %v2831, %v2833
        %v2835 = vrot.slane %v2821, %v2834
        %v2836 = vcombine.low %v2812, %v2828
        %v2837 = vcombine.high %v2812, %v2828
        %v2838 = vcombine.low %v2819, %v2835
        %v2839 = vcombine.high %v2819, %v2835
        %v2840 = vpack.c.bf16 %v2836, %v2768
        %v2841 = vpack.c.bf16 %v2837, %v2769
        %v2842 = vpack.c.bf16 %v2838, %v2770
        %v2843 = vpack.c.bf16 %v2839, %v2771
        %2846 = vrot.lane.b32.xlu0 %v2392, 120
        %v2847 = vpop.permute.xlu0 %2846
        %2848 = vrot.lane.b32.xlu0 %v2395, 120
        %v2849 = vpop.permute.xlu0 %2848
        %2852 = vrot.lane.b32.xlu0 %v2392, 112
        %v2853 = vpop.permute.xlu0 %2852
        %2854 = vrot.lane.b32.xlu0 %v2395, 112
        %v2855 = vpop.permute.xlu0 %2854
        %2858 = vrot.lane.b32.xlu0 %v2392, 104
        %v2859 = vpop.permute.xlu0 %2858
        %2860 = vrot.lane.b32.xlu0 %v2395, 104
        %v2861 = vpop.permute.xlu0 %2860
        %v2864 = vcombine.low %v2392, %v2853
        %v2865 = vcombine.high %v2392, %v2853
        %v2867 = vunpack.c.l.s4 1983009808
        %v2868 = vunpack.c.0.s8 %v2867
        %v2869 = vlaneseq
        %v2870 = vshrl.u32 %v2869, 7
        %v2871 = vsub.s32 %v2868, %v2870
        %v2872 = vrot.slane %v2864, %v2871
        %v2874 = vunpack.c.l.s4 1983009808
        %v2875 = vunpack.c.0.s8 %v2874
        %v2876 = vlaneseq
        %v2877 = vshrl.u32 %v2876, 7
        %v2878 = vsub.s32 %v2875, %v2877
        %v2879 = vrot.slane %v2865, %v2878
        %v2880 = vcombine.low %v2847, %v2859
        %v2881 = vcombine.high %v2847, %v2859
        %v2883 = vunpack.c.l.s4 1983009808
        %v2884 = vunpack.c.0.s8 %v2883
        %v2885 = vlaneseq
        %v2886 = vshrl.u32 %v2885, 7
        %v2887 = vsub.s32 %v2884, %v2886
        %v2888 = vrot.slane %v2880, %v2887
        %v2890 = vunpack.c.l.s4 1983009808
        %v2891 = vunpack.c.0.s8 %v2890
        %v2892 = vlaneseq
        %v2893 = vshrl.u32 %v2892, 7
        %v2894 = vsub.s32 %v2891, %v2893
        %v2895 = vrot.slane %v2881, %v2894
        %v2896 = vcombine.low %v2872, %v2888
        %v2897 = vcombine.high %v2872, %v2888
        %v2899 = vunpack.c.l.s4 1934713408
        %v2900 = vunpack.c.0.s8 %v2899
        %v2901 = vlaneseq
        %v2902 = vshrl.u32 %v2901, 7
        %v2903 = vsub.s32 %v2900, %v2902
        %v2904 = vrot.slane %v2896, %v2903
        %v2906 = vunpack.c.l.s4 1934713408
        %v2907 = vunpack.c.0.s8 %v2906
        %v2908 = vlaneseq
        %v2909 = vshrl.u32 %v2908, 7
        %v2910 = vsub.s32 %v2907, %v2909
        %v2911 = vrot.slane %v2897, %v2910
        %v2912 = vcombine.low %v2879, %v2895
        %v2913 = vcombine.high %v2879, %v2895
        %v2915 = vunpack.c.l.s4 1934713408
        %v2916 = vunpack.c.0.s8 %v2915
        %v2917 = vlaneseq
        %v2918 = vshrl.u32 %v2917, 7
        %v2919 = vsub.s32 %v2916, %v2918
        %v2920 = vrot.slane %v2912, %v2919
        %v2922 = vunpack.c.l.s4 1934713408
        %v2923 = vunpack.c.0.s8 %v2922
        %v2924 = vlaneseq
        %v2925 = vshrl.u32 %v2924, 7
        %v2926 = vsub.s32 %v2923, %v2925
        %v2927 = vrot.slane %v2913, %v2926
        %v2928 = vcombine.high %v2904, 0.0
        %v2929 = vcombine.high %v2911, 0.0
        %v2930 = vcombine.high %v2920, 0.0
        %v2931 = vcombine.high %v2927, 0.0
        %v2932 = vcombine.low %v2395, %v2855
        %v2933 = vcombine.high %v2395, %v2855
        %v2935 = vunpack.c.l.s4 1983009808
        %v2936 = vunpack.c.0.s8 %v2935
        %v2937 = vlaneseq
        %v2938 = vshrl.u32 %v2937, 7
        %v2939 = vsub.s32 %v2936, %v2938
        %v2940 = vrot.slane %v2932, %v2939
        %v2942 = vunpack.c.l.s4 1983009808
        %v2943 = vunpack.c.0.s8 %v2942
        %v2944 = vlaneseq
        %v2945 = vshrl.u32 %v2944, 7
        %v2946 = vsub.s32 %v2943, %v2945
        %v2947 = vrot.slane %v2933, %v2946
        %v2948 = vcombine.low %v2849, %v2861
        %v2949 = vcombine.high %v2849, %v2861
        %v2951 = vunpack.c.l.s4 1983009808
        %v2952 = vunpack.c.0.s8 %v2951
        %v2953 = vlaneseq
        %v2954 = vshrl.u32 %v2953, 7
        %v2955 = vsub.s32 %v2952, %v2954
        %v2956 = vrot.slane %v2948, %v2955
        %v2958 = vunpack.c.l.s4 1983009808
        %v2959 = vunpack.c.0.s8 %v2958
        %v2960 = vlaneseq
        %v2961 = vshrl.u32 %v2960, 7
        %v2962 = vsub.s32 %v2959, %v2961
        %v2963 = vrot.slane %v2949, %v2962
        %v2964 = vcombine.low %v2940, %v2956
        %v2965 = vcombine.high %v2940, %v2956
        %v2967 = vunpack.c.l.s4 1934713408
        %v2968 = vunpack.c.0.s8 %v2967
        %v2969 = vlaneseq
        %v2970 = vshrl.u32 %v2969, 7
        %v2971 = vsub.s32 %v2968, %v2970
        %v2972 = vrot.slane %v2964, %v2971
        %v2974 = vunpack.c.l.s4 1934713408
        %v2975 = vunpack.c.0.s8 %v2974
        %v2976 = vlaneseq
        %v2977 = vshrl.u32 %v2976, 7
        %v2978 = vsub.s32 %v2975, %v2977
        %v2979 = vrot.slane %v2965, %v2978
        %v2980 = vcombine.low %v2947, %v2963
        %v2981 = vcombine.high %v2947, %v2963
        %v2983 = vunpack.c.l.s4 1934713408
        %v2984 = vunpack.c.0.s8 %v2983
        %v2985 = vlaneseq
        %v2986 = vshrl.u32 %v2985, 7
        %v2987 = vsub.s32 %v2984, %v2986
        %v2988 = vrot.slane %v2980, %v2987
        %v2990 = vunpack.c.l.s4 1934713408
        %v2991 = vunpack.c.0.s8 %v2990
        %v2992 = vlaneseq
        %v2993 = vshrl.u32 %v2992, 7
        %v2994 = vsub.s32 %v2991, %v2993
        %v2995 = vrot.slane %v2981, %v2994
        %v2996 = vcombine.high %v2972, 0.0
        %v2997 = vcombine.high %v2979, 0.0
        %v2998 = vcombine.high %v2988, 0.0
        %v2999 = vcombine.high %v2995, 0.0
        %v3000 = vcombine.low %v2904, %v2911
        %v3002 = vunpack.c.l.s4 1983009808
        %v3003 = vunpack.c.0.s8 %v3002
        %v3004 = vlaneseq
        %v3005 = vshrl.u32 %v3004, 7
        %v3006 = vsub.s32 %v3003, %v3005
        %v3007 = vrot.slane %v3000, %v3006
        %v3008 = vcombine.low %v2928, %v2929
        %v3010 = vunpack.c.l.s4 1983009808
        %v3011 = vunpack.c.0.s8 %v3010
        %v3012 = vlaneseq
        %v3013 = vshrl.u32 %v3012, 7
        %v3014 = vsub.s32 %v3011, %v3013
        %v3015 = vrot.slane %v3008, %v3014
        %v3016 = vcombine.low %v2920, %v2927
        %v3018 = vunpack.c.l.s4 1983009808
        %v3019 = vunpack.c.0.s8 %v3018
        %v3020 = vlaneseq
        %v3021 = vshrl.u32 %v3020, 7
        %v3022 = vsub.s32 %v3019, %v3021
        %v3023 = vrot.slane %v3016, %v3022
        %v3024 = vcombine.low %v2930, %v2931
        %v3026 = vunpack.c.l.s4 1983009808
        %v3027 = vunpack.c.0.s8 %v3026
        %v3028 = vlaneseq
        %v3029 = vshrl.u32 %v3028, 7
        %v3030 = vsub.s32 %v3027, %v3029
        %v3031 = vrot.slane %v3024, %v3030
        %v3032 = vcombine.low %v3007, %v3015
        %v3033 = vcombine.high %v3007, %v3015
        %v3035 = vunpack.c.l.s4 1934713408
        %v3036 = vunpack.c.0.s8 %v3035
        %v3037 = vlaneseq
        %v3038 = vshrl.u32 %v3037, 7
        %v3039 = vsub.s32 %v3036, %v3038
        %v3040 = vrot.slane %v3032, %v3039
        %v3042 = vunpack.c.l.s4 1934713408
        %v3043 = vunpack.c.0.s8 %v3042
        %v3044 = vlaneseq
        %v3045 = vshrl.u32 %v3044, 7
        %v3046 = vsub.s32 %v3043, %v3045
        %v3047 = vrot.slane %v3033, %v3046
        %v3048 = vcombine.low %v3023, %v3031
        %v3049 = vcombine.high %v3023, %v3031
        %v3051 = vunpack.c.l.s4 1934713408
        %v3052 = vunpack.c.0.s8 %v3051
        %v3053 = vlaneseq
        %v3054 = vshrl.u32 %v3053, 7
        %v3055 = vsub.s32 %v3052, %v3054
        %v3056 = vrot.slane %v3048, %v3055
        %v3058 = vunpack.c.l.s4 1934713408
        %v3059 = vunpack.c.0.s8 %v3058
        %v3060 = vlaneseq
        %v3061 = vshrl.u32 %v3060, 7
        %v3062 = vsub.s32 %v3059, %v3061
        %v3063 = vrot.slane %v3049, %v3062
        %v3064 = vcombine.low %v3040, %v3056
        %v3065 = vcombine.high %v3040, %v3056
        %v3066 = vcombine.low %v3047, %v3063
        %v3067 = vcombine.high %v3047, %v3063
        %v3068 = vcombine.low %v2972, %v2979
        %v3070 = vunpack.c.l.s4 1983009808
        %v3071 = vunpack.c.0.s8 %v3070
        %v3072 = vlaneseq
        %v3073 = vshrl.u32 %v3072, 7
        %v3074 = vsub.s32 %v3071, %v3073
        %v3075 = vrot.slane %v3068, %v3074
        %v3076 = vcombine.low %v2996, %v2997
        %v3078 = vunpack.c.l.s4 1983009808
        %v3079 = vunpack.c.0.s8 %v3078
        %v3080 = vlaneseq
        %v3081 = vshrl.u32 %v3080, 7
        %v3082 = vsub.s32 %v3079, %v3081
        %v3083 = vrot.slane %v3076, %v3082
        %v3084 = vcombine.low %v2988, %v2995
        %v3086 = vunpack.c.l.s4 1983009808
        %v3087 = vunpack.c.0.s8 %v3086
        %v3088 = vlaneseq
        %v3089 = vshrl.u32 %v3088, 7
        %v3090 = vsub.s32 %v3087, %v3089
        %v3091 = vrot.slane %v3084, %v3090
        %v3092 = vcombine.low %v2998, %v2999
        %v3094 = vunpack.c.l.s4 1983009808
        %v3095 = vunpack.c.0.s8 %v3094
        %v3096 = vlaneseq
        %v3097 = vshrl.u32 %v3096, 7
        %v3098 = vsub.s32 %v3095, %v3097
        %v3099 = vrot.slane %v3092, %v3098
        %v3100 = vcombine.low %v3075, %v3083
        %v3101 = vcombine.high %v3075, %v3083
        %v3103 = vunpack.c.l.s4 1934713408
        %v3104 = vunpack.c.0.s8 %v3103
        %v3105 = vlaneseq
        %v3106 = vshrl.u32 %v3105, 7
        %v3107 = vsub.s32 %v3104, %v3106
        %v3108 = vrot.slane %v3100, %v3107
        %v3110 = vunpack.c.l.s4 1934713408
        %v3111 = vunpack.c.0.s8 %v3110
        %v3112 = vlaneseq
        %v3113 = vshrl.u32 %v3112, 7
        %v3114 = vsub.s32 %v3111, %v3113
        %v3115 = vrot.slane %v3101, %v3114
        %v3116 = vcombine.low %v3091, %v3099
        %v3117 = vcombine.high %v3091, %v3099
        %v3119 = vunpack.c.l.s4 1934713408
        %v3120 = vunpack.c.0.s8 %v3119
        %v3121 = vlaneseq
        %v3122 = vshrl.u32 %v3121, 7
        %v3123 = vsub.s32 %v3120, %v3122
        %v3124 = vrot.slane %v3116, %v3123
        %v3126 = vunpack.c.l.s4 1934713408
        %v3127 = vunpack.c.0.s8 %v3126
        %v3128 = vlaneseq
        %v3129 = vshrl.u32 %v3128, 7
        %v3130 = vsub.s32 %v3127, %v3129
        %v3131 = vrot.slane %v3117, %v3130
        %v3132 = vcombine.low %v3108, %v3124
        %v3133 = vcombine.high %v3108, %v3124
        %v3134 = vcombine.low %v3115, %v3131
        %v3135 = vcombine.high %v3115, %v3131
        %v3136 = vpack.c.bf16 %v3132, %v3064
        %v3137 = vpack.c.bf16 %v3133, %v3065
        %v3138 = vpack.c.bf16 %v3134, %v3066
        %v3139 = vpack.c.bf16 %v3135, %v3067
        %v3141 = vsel %vm1495, %v2544, 0
        %v3144 = vsel %vm1495, %v2840, 0
        %3146 = vmatprep.subr.bf16.mxu0 0
        %3147 = vmatpush1.bf16.xpose.msra.mxu0 0
        %3148 = vmatprep.subr.bf16.mxu0 0
        %3149 = vmatpush1.bf16.xpose.msra.mxu0 0
        %3150 = vmatprep.subr.bf16.mxu0 0
        %3151 = vmatpush1.bf16.xpose.msra.mxu0 0
        %3152 = vmatprep.subr.bf16.mxu0 0
        %3153 = vmatpush1.bf16.xpose.msra.mxu0 0
        %3154 = vmatprep.subr.bf16.mxu0 0
        %3155 = vmatpush1.bf16.xpose.msra.mxu0 0
        %3156 = vmatprep.subr.bf16.mxu0 0
        %3157 = vmatpush1.bf16.xpose.msra.mxu0 0
        %3158 = vmatprep.subr.bf16.mxu0 0
        %3159 = vmatpush1.bf16.xpose.msra.mxu0 0
        %3160 = vmatprep.subr.bf16.mxu0 0
        %3161 = vmatpush1.bf16.xpose.msra.mxu0 %v3144
        %3162 = vmatprep.subr.bf16.mxu0 0
        %3163 = vmatpush2.bf16.xpose.msra.mxu0 0
        %3164 = vmatprep.subr.bf16.mxu0 0
        %3165 = vmatpush2.bf16.xpose.msra.mxu0 0
        %3166 = vmatprep.subr.bf16.mxu0 0
        %3167 = vmatpush2.bf16.xpose.msra.mxu0 0
        %3168 = vmatprep.subr.bf16.mxu0 0
        %3169 = vmatpush2.bf16.xpose.msra.mxu0 0
        %3170 = vmatprep.subr.bf16.mxu0 0
        %3171 = vmatpush2.bf16.xpose.msra.mxu0 0
        %3172 = vmatprep.subr.bf16.mxu0 0
        %3173 = vmatpush2.bf16.xpose.msra.mxu0 0
        %3174 = vmatprep.subr.bf16.mxu0 0
        %3175 = vmatpush2.bf16.xpose.msra.mxu0 0
        %3176 = vmatprep.subr.bf16.mxu0 0
        %3177 = vmatpush2.bf16.xpose.msra.mxu0 0
        %3178 = vmatprep.mubr.bf16.mxu0 0
        %3179 = vmatmul.mubr.bf16.gmra.mxu0 %v3141
        %v3180 = vpop.f32.mrf.mxu0
        %v3181 = vadd.f32 0.0, %v3180
        %v3182 = vpop.f32.mrf.mxu0
        %v3183 = vpop.f32.mrf.mxu0
        %v3184 = vpop.f32.mrf.mxu0
        %3185 = vdwg.mxu0
        %v3187 = vsel %vm1495, %v2545, 0
        %v3190 = vsel %vm1495, %v2841, 0
        %3192 = vmatprep.subr.bf16.mxu0 0
        %3193 = vmatpush1.bf16.xpose.msra.mxu0 0
        %3194 = vmatprep.subr.bf16.mxu0 0
        %3195 = vmatpush1.bf16.xpose.msra.mxu0 0
        %3196 = vmatprep.subr.bf16.mxu0 0
        %3197 = vmatpush1.bf16.xpose.msra.mxu0 0
        %3198 = vmatprep.subr.bf16.mxu0 0
        %3199 = vmatpush1.bf16.xpose.msra.mxu0 0
        %3200 = vmatprep.subr.bf16.mxu0 0
        %3201 = vmatpush1.bf16.xpose.msra.mxu0 0
        %3202 = vmatprep.subr.bf16.mxu0 0
        %3203 = vmatpush1.bf16.xpose.msra.mxu0 0
        %3204 = vmatprep.subr.bf16.mxu0 0
        %3205 = vmatpush1.bf16.xpose.msra.mxu0 0
        %3206 = vmatprep.subr.bf16.mxu0 0
        %3207 = vmatpush1.bf16.xpose.msra.mxu0 %v3190
        %3208 = vmatprep.subr.bf16.mxu0 0
        %3209 = vmatpush2.bf16.xpose.msra.mxu0 0
        %3210 = vmatprep.subr.bf16.mxu0 0
        %3211 = vmatpush2.bf16.xpose.msra.mxu0 0
        %3212 = vmatprep.subr.bf16.mxu0 0
        %3213 = vmatpush2.bf16.xpose.msra.mxu0 0
        %3214 = vmatprep.subr.bf16.mxu0 0
        %3215 = vmatpush2.bf16.xpose.msra.mxu0 0
        %3216 = vmatprep.subr.bf16.mxu0 0
        %3217 = vmatpush2.bf16.xpose.msra.mxu0 0
        %3218 = vmatprep.subr.bf16.mxu0 0
        %3219 = vmatpush2.bf16.xpose.msra.mxu0 0
        %3220 = vmatprep.subr.bf16.mxu0 0
        %3221 = vmatpush2.bf16.xpose.msra.mxu0 0
        %3222 = vmatprep.subr.bf16.mxu0 0
        %3223 = vmatpush2.bf16.xpose.msra.mxu0 0
        %3224 = vmatprep.mubr.bf16.mxu0 0
        %3225 = vmatmul.mubr.bf16.gmra.mxu0 %v3187
        %v3226 = vpop.f32.mrf.mxu0
        %v3227 = vadd.f32 0.0, %v3226
        %v3228 = vpop.f32.mrf.mxu0
        %v3229 = vpop.f32.mrf.mxu0
        %v3230 = vpop.f32.mrf.mxu0
        %3231 = vdwg.mxu0
        %v3233 = vsel %vm1495, %v2546, 0
        %v3236 = vsel %vm1495, %v2842, 0
        %3238 = vmatprep.subr.bf16.mxu0 0
        %3239 = vmatpush1.bf16.xpose.msra.mxu0 0
        %3240 = vmatprep.subr.bf16.mxu0 0
        %3241 = vmatpush1.bf16.xpose.msra.mxu0 0
        %3242 = vmatprep.subr.bf16.mxu0 0
        %3243 = vmatpush1.bf16.xpose.msra.mxu0 0
        %3244 = vmatprep.subr.bf16.mxu0 0
        %3245 = vmatpush1.bf16.xpose.msra.mxu0 0
        %3246 = vmatprep.subr.bf16.mxu0 0
        %3247 = vmatpush1.bf16.xpose.msra.mxu0 0
        %3248 = vmatprep.subr.bf16.mxu0 0
        %3249 = vmatpush1.bf16.xpose.msra.mxu0 0
        %3250 = vmatprep.subr.bf16.mxu0 0
        %3251 = vmatpush1.bf16.xpose.msra.mxu0 0
        %3252 = vmatprep.subr.bf16.mxu0 0
        %3253 = vmatpush1.bf16.xpose.msra.mxu0 %v3236
        %3254 = vmatprep.subr.bf16.mxu0 0
        %3255 = vmatpush2.bf16.xpose.msra.mxu0 0
        %3256 = vmatprep.subr.bf16.mxu0 0
        %3257 = vmatpush2.bf16.xpose.msra.mxu0 0
        %3258 = vmatprep.subr.bf16.mxu0 0
        %3259 = vmatpush2.bf16.xpose.msra.mxu0 0
        %3260 = vmatprep.subr.bf16.mxu0 0
        %3261 = vmatpush2.bf16.xpose.msra.mxu0 0
        %3262 = vmatprep.subr.bf16.mxu0 0
        %3263 = vmatpush2.bf16.xpose.msra.mxu0 0
        %3264 = vmatprep.subr.bf16.mxu0 0
        %3265 = vmatpush2.bf16.xpose.msra.mxu0 0
        %3266 = vmatprep.subr.bf16.mxu0 0
        %3267 = vmatpush2.bf16.xpose.msra.mxu0 0
        %3268 = vmatprep.subr.bf16.mxu0 0
        %3269 = vmatpush2.bf16.xpose.msra.mxu0 0
        %3270 = vmatprep.mubr.bf16.mxu0 0
        %3271 = vmatmul.mubr.bf16.gmra.mxu0 %v3233
        %v3272 = vpop.f32.mrf.mxu0
        %v3273 = vadd.f32 0.0, %v3272
        %v3274 = vpop.f32.mrf.mxu0
        %v3275 = vpop.f32.mrf.mxu0
        %v3276 = vpop.f32.mrf.mxu0
        %3277 = vdwg.mxu0
        %v3279 = vsel %vm1495, %v2547, 0
        %v3282 = vsel %vm1495, %v2843, 0
        %3284 = vmatprep.subr.bf16.mxu0 0
        %3285 = vmatpush1.bf16.xpose.msra.mxu0 0
        %3286 = vmatprep.subr.bf16.mxu0 0
        %3287 = vmatpush1.bf16.xpose.msra.mxu0 0
        %3288 = vmatprep.subr.bf16.mxu0 0
        %3289 = vmatpush1.bf16.xpose.msra.mxu0 0
        %3290 = vmatprep.subr.bf16.mxu0 0
        %3291 = vmatpush1.bf16.xpose.msra.mxu0 0
        %3292 = vmatprep.subr.bf16.mxu0 0
        %3293 = vmatpush1.bf16.xpose.msra.mxu0 0
        %3294 = vmatprep.subr.bf16.mxu0 0
        %3295 = vmatpush1.bf16.xpose.msra.mxu0 0
        %3296 = vmatprep.subr.bf16.mxu0 0
        %3297 = vmatpush1.bf16.xpose.msra.mxu0 0
        %3298 = vmatprep.subr.bf16.mxu0 0
        %3299 = vmatpush1.bf16.xpose.msra.mxu0 %v3282
        %3300 = vmatprep.subr.bf16.mxu0 0
        %3301 = vmatpush2.bf16.xpose.msra.mxu0 0
        %3302 = vmatprep.subr.bf16.mxu0 0
        %3303 = vmatpush2.bf16.xpose.msra.mxu0 0
        %3304 = vmatprep.subr.bf16.mxu0 0
        %3305 = vmatpush2.bf16.xpose.msra.mxu0 0
        %3306 = vmatprep.subr.bf16.mxu0 0
        %3307 = vmatpush2.bf16.xpose.msra.mxu0 0
        %3308 = vmatprep.subr.bf16.mxu0 0
        %3309 = vmatpush2.bf16.xpose.msra.mxu0 0
        %3310 = vmatprep.subr.bf16.mxu0 0
        %3311 = vmatpush2.bf16.xpose.msra.mxu0 0
        %3312 = vmatprep.subr.bf16.mxu0 0
        %3313 = vmatpush2.bf16.xpose.msra.mxu0 0
        %3314 = vmatprep.subr.bf16.mxu0 0
        %3315 = vmatpush2.bf16.xpose.msra.mxu0 0
        %3316 = vmatprep.mubr.bf16.mxu0 0
        %3317 = vmatmul.mubr.bf16.gmra.mxu0 %v3279
        %v3318 = vpop.f32.mrf.mxu0
        %v3319 = vadd.f32 0.0, %v3318
        %v3320 = vpop.f32.mrf.mxu0
        %v3321 = vpop.f32.mrf.mxu0
        %v3322 = vpop.f32.mrf.mxu0
        %3323 = vdwg.mxu0
        %v3324 = vsel %vm2101, %v3181, -inf
        %3325 = vmax.xlane.f32.xlu0 %v3324
        %v3326 = vpop.xlane.xlu0 %3325
        %v3327 = vsel %vm2101, %v3227, -inf
        %3328 = vmax.xlane.f32.xlu0 %v3327
        %v3329 = vpop.xlane.xlu0 %3328
        %v3330 = vsel %vm2101, %v3273, -inf
        %3331 = vmax.xlane.f32.xlu0 %v3330
        %v3332 = vpop.xlane.xlu0 %3331
        %v3333 = vsel %vm2101, %v3319, -inf
        %3334 = vmax.xlane.f32.xlu0 %v3333
        %v3335 = vpop.xlane.xlu0 %3334
        %v3336 = vmax.f32 %v3326, -1e+30
        %v3337 = vmax.f32 %v3329, -1e+30
        %v3338 = vmax.f32 %v3332, -1e+30
        %v3339 = vmax.f32 %v3335, -1e+30
        %v3340 = vsub.f32 -1e+30, %v3336
        %v3341 = vsub.f32 -1e+30, %v3337
        %v3342 = vsub.f32 -1e+30, %v3338
        %v3343 = vsub.f32 -1e+30, %v3339
        %v3344 = vmul.f32 %v3340, 1.442695
        %v3345 = vpow.pop %v3344
        %v3346 = vmul.f32 %v3341, 1.442695
        %v3347 = vpow.pop %v3346
        %v3348 = vmul.f32 %v3342, 1.442695
        %v3349 = vpow.pop %v3348
        %v3350 = vmul.f32 %v3343, 1.442695
        %v3351 = vpow.pop %v3350
        %v3352 = vsub.f32 %v3181, %v3336
        %v3353 = vsub.f32 %v3227, %v3337
        %v3354 = vsub.f32 %v3273, %v3338
        %v3355 = vsub.f32 %v3319, %v3339
        %v3356 = vmul.f32 %v3352, 1.442695
        %v3357 = vpow.pop %v3356
        %v3358 = vmul.f32 %v3353, 1.442695
        %v3359 = vpow.pop %v3358
        %v3360 = vmul.f32 %v3354, 1.442695
        %v3361 = vpow.pop %v3360
        %v3362 = vmul.f32 %v3355, 1.442695
        %v3363 = vpow.pop %v3362
        %v3364 = vmul.f32 %v3345, 0.0
        %v3365 = vmul.f32 %v3347, 0.0
        %v3366 = vmul.f32 %v3349, 0.0
        %v3367 = vmul.f32 %v3351, 0.0
        %v3368 = vsel %vm2101, %v3357, 0.0
        %3369 = vadd.xlane.f32.xlu0 %v3368
        %v3370 = vpop.xlane.xlu0 %3369
        %v3371 = vsel %vm2101, %v3359, 0.0
        %3372 = vadd.xlane.f32.xlu0 %v3371
        %v3373 = vpop.xlane.xlu0 %3372
        %v3374 = vsel %vm2101, %v3361, 0.0
        %3375 = vadd.xlane.f32.xlu0 %v3374
        %v3376 = vpop.xlane.xlu0 %3375
        %v3377 = vsel %vm2101, %v3363, 0.0
        %3378 = vadd.xlane.f32.xlu0 %v3377
        %v3379 = vpop.xlane.xlu0 %3378
        %v3380 = vadd.f32 %v3364, %v3370
        %v3381 = vadd.f32 %v3365, %v3373
        %v3382 = vadd.f32 %v3366, %v3376
        %v3383 = vadd.f32 %v3367, %v3379
        %v3384 = vpack.c.bf16 %v3357, %v3357
        %v3385 = vpack.c.bf16 %v3359, %v3359
        %v3386 = vpack.c.bf16 %v3361, %v3361
        %v3387 = vpack.c.bf16 %v3363, %v3363
        %v3389 = vsel %vm2101, %v3384, 0
        %3391 = vmatprep.subr.bf16.mxu0 0
        %3392 = vmatpush1.bf16.msra.mxu0 0
        %3393 = vmatprep.subr.bf16.mxu0 0
        %3394 = vmatpush1.bf16.msra.mxu0 0
        %3395 = vmatprep.subr.bf16.mxu0 0
        %3396 = vmatpush1.bf16.msra.mxu0 0
        %3397 = vmatprep.subr.bf16.mxu0 0
        %3398 = vmatpush1.bf16.msra.mxu0 0
        %3399 = vmatprep.subr.bf16.mxu0 0
        %3400 = vmatpush1.bf16.msra.mxu0 0
        %3401 = vmatprep.subr.bf16.mxu0 0
        %3402 = vmatpush1.bf16.msra.mxu0 0
        %3403 = vmatprep.subr.bf16.mxu0 0
        %3404 = vmatpush1.bf16.msra.mxu0 0
        %3405 = vmatprep.subr.bf16.mxu0 0
        %3406 = vmatpush1.bf16.msra.mxu0 %v3136
        %3407 = vmatprep.subr.bf16.mxu0 0
        %3408 = vmatpush2.bf16.msra.mxu0 0
        %3409 = vmatprep.subr.bf16.mxu0 0
        %3410 = vmatpush2.bf16.msra.mxu0 0
        %3411 = vmatprep.subr.bf16.mxu0 0
        %3412 = vmatpush2.bf16.msra.mxu0 0
        %3413 = vmatprep.subr.bf16.mxu0 0
        %3414 = vmatpush2.bf16.msra.mxu0 0
        %3415 = vmatprep.subr.bf16.mxu0 0
        %3416 = vmatpush2.bf16.msra.mxu0 0
        %3417 = vmatprep.subr.bf16.mxu0 0
        %3418 = vmatpush2.bf16.msra.mxu0 0
        %3419 = vmatprep.subr.bf16.mxu0 0
        %3420 = vmatpush2.bf16.msra.mxu0 0
        %3421 = vmatprep.subr.bf16.mxu0 0
        %3422 = vmatpush2.bf16.msra.mxu0 0
        %3423 = vmatprep.mubr.bf16.mxu0 0
        %3424 = vmatmul.mubr.bf16.gmra.mxu0 %v3389
        %v3425 = vpop.f32.mrf.mxu0
        %v3426 = vadd.f32 0.0, %v3425
        %v3427 = vpop.f32.mrf.mxu0
        %v3428 = vpop.f32.mrf.mxu0
        %v3429 = vpop.f32.mrf.mxu0
        %3430 = vdwg.mxu0
        %v3432 = vsel %vm2101, %v3385, 0
        %3434 = vmatprep.subr.bf16.mxu0 0
        %3435 = vmatpush1.bf16.msra.mxu0 0
        %3436 = vmatprep.subr.bf16.mxu0 0
        %3437 = vmatpush1.bf16.msra.mxu0 0
        %3438 = vmatprep.subr.bf16.mxu0 0
        %3439 = vmatpush1.bf16.msra.mxu0 0
        %3440 = vmatprep.subr.bf16.mxu0 0
        %3441 = vmatpush1.bf16.msra.mxu0 0
        %3442 = vmatprep.subr.bf16.mxu0 0
        %3443 = vmatpush1.bf16.msra.mxu0 0
        %3444 = vmatprep.subr.bf16.mxu0 0
        %3445 = vmatpush1.bf16.msra.mxu0 0
        %3446 = vmatprep.subr.bf16.mxu0 0
        %3447 = vmatpush1.bf16.msra.mxu0 0
        %3448 = vmatprep.subr.bf16.mxu0 0
        %3449 = vmatpush1.bf16.msra.mxu0 %v3137
        %3450 = vmatprep.subr.bf16.mxu0 0
        %3451 = vmatpush2.bf16.msra.mxu0 0
        %3452 = vmatprep.subr.bf16.mxu0 0
        %3453 = vmatpush2.bf16.msra.mxu0 0
        %3454 = vmatprep.subr.bf16.mxu0 0
        %3455 = vmatpush2.bf16.msra.mxu0 0
        %3456 = vmatprep.subr.bf16.mxu0 0
        %3457 = vmatpush2.bf16.msra.mxu0 0
        %3458 = vmatprep.subr.bf16.mxu0 0
        %3459 = vmatpush2.bf16.msra.mxu0 0
        %3460 = vmatprep.subr.bf16.mxu0 0
        %3461 = vmatpush2.bf16.msra.mxu0 0
        %3462 = vmatprep.subr.bf16.mxu0 0
        %3463 = vmatpush2.bf16.msra.mxu0 0
        %3464 = vmatprep.subr.bf16.mxu0 0
        %3465 = vmatpush2.bf16.msra.mxu0 0
        %3466 = vmatprep.mubr.bf16.mxu0 0
        %3467 = vmatmul.mubr.bf16.gmra.mxu0 %v3432
        %v3468 = vpop.f32.mrf.mxu0
        %v3469 = vadd.f32 0.0, %v3468
        %v3470 = vpop.f32.mrf.mxu0
        %v3471 = vpop.f32.mrf.mxu0
        %v3472 = vpop.f32.mrf.mxu0
        %3473 = vdwg.mxu0
        %v3475 = vsel %vm2101, %v3386, 0
        %3477 = vmatprep.subr.bf16.mxu0 0
        %3478 = vmatpush1.bf16.msra.mxu0 0
        %3479 = vmatprep.subr.bf16.mxu0 0
        %3480 = vmatpush1.bf16.msra.mxu0 0
        %3481 = vmatprep.subr.bf16.mxu0 0
        %3482 = vmatpush1.bf16.msra.mxu0 0
        %3483 = vmatprep.subr.bf16.mxu0 0
        %3484 = vmatpush1.bf16.msra.mxu0 0
        %3485 = vmatprep.subr.bf16.mxu0 0
        %3486 = vmatpush1.bf16.msra.mxu0 0
        %3487 = vmatprep.subr.bf16.mxu0 0
        %3488 = vmatpush1.bf16.msra.mxu0 0
        %3489 = vmatprep.subr.bf16.mxu0 0
        %3490 = vmatpush1.bf16.msra.mxu0 0
        %3491 = vmatprep.subr.bf16.mxu0 0
        %3492 = vmatpush1.bf16.msra.mxu0 %v3138
        %3493 = vmatprep.subr.bf16.mxu0 0
        %3494 = vmatpush2.bf16.msra.mxu0 0
        %3495 = vmatprep.subr.bf16.mxu0 0
        %3496 = vmatpush2.bf16.msra.mxu0 0
        %3497 = vmatprep.subr.bf16.mxu0 0
        %3498 = vmatpush2.bf16.msra.mxu0 0
        %3499 = vmatprep.subr.bf16.mxu0 0
        %3500 = vmatpush2.bf16.msra.mxu0 0
        %3501 = vmatprep.subr.bf16.mxu0 0
        %3502 = vmatpush2.bf16.msra.mxu0 0
        %3503 = vmatprep.subr.bf16.mxu0 0
        %3504 = vmatpush2.bf16.msra.mxu0 0
        %3505 = vmatprep.subr.bf16.mxu0 0
        %3506 = vmatpush2.bf16.msra.mxu0 0
        %3507 = vmatprep.subr.bf16.mxu0 0
        %3508 = vmatpush2.bf16.msra.mxu0 0
        %3509 = vmatprep.mubr.bf16.mxu0 0
        %3510 = vmatmul.mubr.bf16.gmra.mxu0 %v3475
        %v3511 = vpop.f32.mrf.mxu0
        %v3512 = vadd.f32 0.0, %v3511
        %v3513 = vpop.f32.mrf.mxu0
        %v3514 = vpop.f32.mrf.mxu0
        %v3515 = vpop.f32.mrf.mxu0
        %3516 = vdwg.mxu0
        %v3518 = vsel %vm2101, %v3387, 0
        %3520 = vmatprep.subr.bf16.mxu0 0
        %3521 = vmatpush1.bf16.msra.mxu0 0
        %3522 = vmatprep.subr.bf16.mxu0 0
        %3523 = vmatpush1.bf16.msra.mxu0 0
        %3524 = vmatprep.subr.bf16.mxu0 0
        %3525 = vmatpush1.bf16.msra.mxu0 0
        %3526 = vmatprep.subr.bf16.mxu0 0
        %3527 = vmatpush1.bf16.msra.mxu0 0
        %3528 = vmatprep.subr.bf16.mxu0 0
        %3529 = vmatpush1.bf16.msra.mxu0 0
        %3530 = vmatprep.subr.bf16.mxu0 0
        %3531 = vmatpush1.bf16.msra.mxu0 0
        %3532 = vmatprep.subr.bf16.mxu0 0
        %3533 = vmatpush1.bf16.msra.mxu0 0
        %3534 = vmatprep.subr.bf16.mxu0 0
        %3535 = vmatpush1.bf16.msra.mxu0 %v3139
        %3536 = vmatprep.subr.bf16.mxu0 0
        %3537 = vmatpush2.bf16.msra.mxu0 0
        %3538 = vmatprep.subr.bf16.mxu0 0
        %3539 = vmatpush2.bf16.msra.mxu0 0
        %3540 = vmatprep.subr.bf16.mxu0 0
        %3541 = vmatpush2.bf16.msra.mxu0 0
        %3542 = vmatprep.subr.bf16.mxu0 0
        %3543 = vmatpush2.bf16.msra.mxu0 0
        %3544 = vmatprep.subr.bf16.mxu0 0
        %3545 = vmatpush2.bf16.msra.mxu0 0
        %3546 = vmatprep.subr.bf16.mxu0 0
        %3547 = vmatpush2.bf16.msra.mxu0 0
        %3548 = vmatprep.subr.bf16.mxu0 0
        %3549 = vmatpush2.bf16.msra.mxu0 0
        %3550 = vmatprep.subr.bf16.mxu0 0
        %3551 = vmatpush2.bf16.msra.mxu0 0
        %3552 = vmatprep.mubr.bf16.mxu0 0
        %3553 = vmatmul.mubr.bf16.gmra.mxu0 %v3518
        %v3554 = vpop.f32.mrf.mxu0
        %v3555 = vadd.f32 0.0, %v3554
        %v3556 = vpop.f32.mrf.mxu0
        %v3557 = vpop.f32.mrf.mxu0
        %v3558 = vpop.f32.mrf.mxu0
        %3559 = vdwg.mxu0
        %v3560 = vadd.f32 %v3364, %v3426
        %v3561 = vadd.f32 %v3365, %v3469
        %v3562 = vadd.f32 %v3366, %v3512
        %v3563 = vadd.f32 %v3367, %v3555
        %v3564 = vrcp.pop %v3380
        %v3565 = vrcp.pop %v3381
        %v3566 = vrcp.pop %v3382
        %v3567 = vrcp.pop %v3383
        %v3568 = vmul.f32 %v3560, %v3564
        %v3569 = vmul.f32 %v3561, %v3565
        %v3570 = vmul.f32 %v3562, %v3566
        %v3571 = vmul.f32 %v3563, %v3567
        %v3572 = vcombine.low %v3568, %v3570
        %v3573 = vcombine.high %v3568, %v3570
        %v3575 = vunpack.c.l.s4 1983009808
        %v3576 = vunpack.c.0.s8 %v3575
        %v3577 = vlaneseq
        %v3578 = vshrl.u32 %v3577, 7
        %v3579 = vsub.s32 %v3576, %v3578
        %v3580 = vrot.slane %v3572, %v3579
        %v3582 = vunpack.c.l.s4 1983009808
        %v3583 = vunpack.c.0.s8 %v3582
        %v3584 = vlaneseq
        %v3585 = vshrl.u32 %v3584, 7
        %v3586 = vsub.s32 %v3583, %v3585
        %v3587 = vrot.slane %v3573, %v3586
        %v3588 = vcombine.low %v3569, %v3571
        %v3589 = vcombine.high %v3569, %v3571
        %v3591 = vunpack.c.l.s4 1983009808
        %v3592 = vunpack.c.0.s8 %v3591
        %v3593 = vlaneseq
        %v3594 = vshrl.u32 %v3593, 7
        %v3595 = vsub.s32 %v3592, %v3594
        %v3596 = vrot.slane %v3588, %v3595
        %v3598 = vunpack.c.l.s4 1983009808
        %v3599 = vunpack.c.0.s8 %v3598
        %v3600 = vlaneseq
        %v3601 = vshrl.u32 %v3600, 7
        %v3602 = vsub.s32 %v3599, %v3601
        %v3603 = vrot.slane %v3589, %v3602
        %v3604 = vcombine.low %v3580, %v3596
        %v3605 = vcombine.high %v3580, %v3596
        %v3607 = vunpack.c.l.s4 1934713408
        %v3608 = vunpack.c.0.s8 %v3607
        %v3609 = vlaneseq
        %v3610 = vshrl.u32 %v3609, 7
        %v3611 = vsub.s32 %v3608, %v3610
        %v3612 = vrot.slane %v3604, %v3611
        %v3614 = vunpack.c.l.s4 1934713408
        %v3615 = vunpack.c.0.s8 %v3614
        %v3616 = vlaneseq
        %v3617 = vshrl.u32 %v3616, 7
        %v3618 = vsub.s32 %v3615, %v3617
        %v3619 = vrot.slane %v3605, %v3618
        %v3620 = vcombine.low %v3587, %v3603
        %v3621 = vcombine.high %v3587, %v3603
        %v3623 = vunpack.c.l.s4 1934713408
        %v3624 = vunpack.c.0.s8 %v3623
        %v3625 = vlaneseq
        %v3626 = vshrl.u32 %v3625, 7
        %v3627 = vsub.s32 %v3624, %v3626
        %v3628 = vrot.slane %v3620, %v3627
        %v3630 = vunpack.c.l.s4 1934713408
        %v3631 = vunpack.c.0.s8 %v3630
        %v3632 = vlaneseq
        %v3633 = vshrl.u32 %v3632, 7
        %v3634 = vsub.s32 %v3631, %v3633
        %v3635 = vrot.slane %v3621, %v3634
        %v3636 = vcombine.high %v3612, 0.0
        %v3637 = vcombine.high %v3619, 0.0
        %v3638 = vcombine.high %v3628, 0.0
        %v3639 = vcombine.high %v3635, 0.0
        %v3640 = vcombine.low %v3612, %v3619
        %v3642 = vunpack.c.l.s4 1983009808
        %v3643 = vunpack.c.0.s8 %v3642
        %v3644 = vlaneseq
        %v3645 = vshrl.u32 %v3644, 7
        %v3646 = vsub.s32 %v3643, %v3645
        %v3647 = vrot.slane %v3640, %v3646
        %v3648 = vcombine.low %v3636, %v3637
        %v3650 = vunpack.c.l.s4 1983009808
        %v3651 = vunpack.c.0.s8 %v3650
        %v3652 = vlaneseq
        %v3653 = vshrl.u32 %v3652, 7
        %v3654 = vsub.s32 %v3651, %v3653
        %v3655 = vrot.slane %v3648, %v3654
        %v3656 = vcombine.low %v3628, %v3635
        %v3658 = vunpack.c.l.s4 1983009808
        %v3659 = vunpack.c.0.s8 %v3658
        %v3660 = vlaneseq
        %v3661 = vshrl.u32 %v3660, 7
        %v3662 = vsub.s32 %v3659, %v3661
        %v3663 = vrot.slane %v3656, %v3662
        %v3664 = vcombine.low %v3638, %v3639
        %v3666 = vunpack.c.l.s4 1983009808
        %v3667 = vunpack.c.0.s8 %v3666
        %v3668 = vlaneseq
        %v3669 = vshrl.u32 %v3668, 7
        %v3670 = vsub.s32 %v3667, %v3669
        %v3671 = vrot.slane %v3664, %v3670
        %v3672 = vcombine.low %v3647, %v3655
        %v3673 = vcombine.high %v3647, %v3655
        %v3675 = vunpack.c.l.s4 1934713408
        %v3676 = vunpack.c.0.s8 %v3675
        %v3677 = vlaneseq
        %v3678 = vshrl.u32 %v3677, 7
        %v3679 = vsub.s32 %v3676, %v3678
        %v3680 = vrot.slane %v3672, %v3679
        %v3682 = vunpack.c.l.s4 1934713408
        %v3683 = vunpack.c.0.s8 %v3682
        %v3684 = vlaneseq
        %v3685 = vshrl.u32 %v3684, 7
        %v3686 = vsub.s32 %v3683, %v3685
        %v3687 = vrot.slane %v3673, %v3686
        %v3688 = vcombine.low %v3663, %v3671
        %v3689 = vcombine.high %v3663, %v3671
        %v3691 = vunpack.c.l.s4 1934713408
        %v3692 = vunpack.c.0.s8 %v3691
        %v3693 = vlaneseq
        %v3694 = vshrl.u32 %v3693, 7
        %v3695 = vsub.s32 %v3692, %v3694
        %v3696 = vrot.slane %v3688, %v3695
        %v3698 = vunpack.c.l.s4 1934713408
        %v3699 = vunpack.c.0.s8 %v3698
        %v3700 = vlaneseq
        %v3701 = vshrl.u32 %v3700, 7
        %v3702 = vsub.s32 %v3699, %v3701
        %v3703 = vrot.slane %v3689, %v3702
        %v3704 = vcombine.low %v3680, %v3696
        %v3705 = vcombine.high %v3680, %v3696
        %v3706 = vcombine.low %v3687, %v3703
        %v3707 = vcombine.high %v3687, %v3703
        %3709 = vrot.lane.b32.xlu0 %v3705, 8
        %v3710 = vpop.permute.xlu0 %3709
        %3713 = vrot.lane.b32.xlu0 %v3706, 16
        %v3714 = vpop.permute.xlu0 %3713
        %3717 = vrot.lane.b32.xlu0 %v3707, 24
        %v3718 = vpop.permute.xlu0 %3717
        %v3720 = vsel %vm1495, %v3704, %v3710
        %v3721 = vsel %vm2101, %v3720, %v3714
        %v3722 = vsel %vm2103, %v3721, %v3718
        %v3723 = vpack.c.bf16 %v3722, %v3722
        %v3725 = vlaneseq
        %v3726 = vshrl.u32 %v3725, 7
        %v3727 = vsub.s32 0, %v3726
        %v3728 = vrot.slane %v2215, %v3727
        %v3734 = vunpack.c.l.b16 %v2211
        %v3735 = vunpack.c.l.b16 %v2212
        %v3736 = vunpack.c.l.b16 %v2213
        %v3737 = vunpack.c.l.b16 %v2214
        %v3738 = vpack.c.b16 %v3735, %v3734
        %v3739 = vpack.c.b16 %v3737, %v3736
        %v3743 = vsel %vm825, %v3723, 0
        %3745 = vmatprep.subr.bf16.mxu0 0
        %3746 = vmatpush1.bf16.msra.mxu0 0
        %3747 = vmatprep.subr.bf16.mxu0 0
        %3748 = vmatpush1.bf16.msra.mxu0 0
        %3749 = vmatprep.subr.bf16.mxu0 0
        %3750 = vmatpush1.bf16.msra.mxu0 0
        %3751 = vmatprep.subr.bf16.mxu0 0
        %3752 = vmatpush1.bf16.msra.mxu0 0
        %3753 = vmatprep.subr.bf16.mxu0 0
        %3754 = vmatpush1.bf16.msra.mxu0 0
        %3755 = vmatprep.subr.bf16.mxu0 0
        %3756 = vmatpush1.bf16.msra.mxu0 0
        %3757 = vmatprep.subr.bf16.mxu0 0
        %3758 = vmatpush1.bf16.msra.mxu0 %v3739
        %3759 = vmatprep.subr.bf16.mxu0 0
        %3760 = vmatpush1.bf16.msra.mxu0 %v3738
        %3761 = vmatprep.subr.bf16.mxu0 0
        %3762 = vmatpush2.bf16.msra.mxu0 0
        %3763 = vmatprep.subr.bf16.mxu0 0
        %3764 = vmatpush2.bf16.msra.mxu0 0
        %3765 = vmatprep.subr.bf16.mxu0 0
        %3766 = vmatpush2.bf16.msra.mxu0 0
        %3767 = vmatprep.subr.bf16.mxu0 0
        %3768 = vmatpush2.bf16.msra.mxu0 0
        %3769 = vmatprep.subr.bf16.mxu0 0
        %3770 = vmatpush2.bf16.msra.mxu0 0
        %3771 = vmatprep.subr.bf16.mxu0 0
        %3772 = vmatpush2.bf16.msra.mxu0 0
        %3773 = vmatprep.subr.bf16.mxu0 0
        %3774 = vmatpush2.bf16.msra.mxu0 0
        %3775 = vmatprep.subr.bf16.mxu0 0
        %3776 = vmatpush2.bf16.msra.mxu0 0
        %3777 = vmatprep.mubr.bf16.mxu0 0
        %3778 = vmatmul.mubr.bf16.gmra.mxu0 %v3743
        %v3779 = vpop.f32.mrf.mxu0
        %v3780 = vadd.f32 %v3728, %v3779
        %v3781 = vpop.f32.mrf.mxu0
        %v3782 = vpop.f32.mrf.mxu0
        %v3783 = vpop.f32.mrf.mxu0
        %3784 = vdwg.mxu0
        %v3785 = vadd.f32 %v2167, %v3780
        %v3786 = vld [vmem:[%s20] sm:$0x1]
        %v3787 = vld [vmem:[%s21] sm:$0x1]
        %v3788 = vsel %vm825, %v3785, 0.0
        %3789 = vadd.xlane.f32.xlu0 %v3788
        %v3790 = vpop.xlane.xlu0 %3789
        %v3791 = vmul.f32 %v3790, %v829
        %v3792 = vsub.f32 %v3785, %v3791
        %v3793 = vmul.f32 %v3792, %v3792
        %v3794 = vsel %vm825, %v3793, 0.0
        %3795 = vadd.xlane.f32.xlu0 %v3794
        %v3796 = vpop.xlane.xlu0 %3795
        %v3797 = vmul.f32 %v3796, %v829
        %v3798 = vadd.f32 %v3797, 1e-05
        %v3799 = vrsqrt.pop %v3798
        %v3800 = vmul.f32 %v3792, %v3799
        %v3802 = vlaneseq
        %v3803 = vshrl.u32 %v3802, 7
        %v3804 = vsub.s32 0, %v3803
        %v3805 = vrot.slane %v3786, %v3804
        %v3807 = vmul.f32 %v3800, %v3805
        %v3809 = vlaneseq
        %v3810 = vshrl.u32 %v3809, 7
        %v3811 = vsub.s32 0, %v3810
        %v3812 = vrot.slane %v3787, %v3811
        %v3814 = vadd.f32 %v3807, %v3812
        %v3815 = vpack.c.bf16 %v3814, %v3814
        %v3816 = vld [vmem:[%s22] sm:$0xff]
        %v3817 = vld [vmem:[%s22 + $0x8] sm:$0xff]
        %v3818 = vld [vmem:[%s22 + $0x10] sm:$0xff]
        %v3819 = vld [vmem:[%s22 + $0x18] sm:$0xff]
        %v3820 = vld [vmem:[%s23] sm:$0x3]
        %v3822 = vlaneseq
        %v3823 = vshrl.u32 %v3822, 7
        %v3824 = vsub.s32 0, %v3823
        %v3825 = vrot.slane %v3820, %v3824
        %v3826 = vlaneseq
        %v3827 = vshrl.u32 %v3826, 7
        %v3828 = vsub.s32 1, %v3827
        %v3829 = vrot.slane %v3820, %v3828
        %v3836 = vunpack.c.l.b16 %v3816
        %v3837 = vunpack.c.h.b16 %v3816
        %v3838 = vunpack.c.l.b16 %v3817
        %v3839 = vunpack.c.h.b16 %v3817
        %v3840 = vunpack.c.l.b16 %v3818
        %v3841 = vunpack.c.h.b16 %v3818
        %v3842 = vunpack.c.l.b16 %v3819
        %v3843 = vunpack.c.h.b16 %v3819
        %v3844 = vpack.c.b16 %v3838, %v3836
        %v3845 = vpack.c.b16 %v3839, %v3837
        %v3846 = vpack.c.b16 %v3842, %v3840
        %v3847 = vpack.c.b16 %v3843, %v3841
        %v3853 = vsel %vm825, %v3815, 0
        %3855 = vmatprep.subr.bf16.mxu0 0
        %3856 = vmatpush1.bf16.msra.mxu0 0
        %3857 = vmatprep.subr.bf16.mxu0 0
        %3858 = vmatpush1.bf16.msra.mxu0 0
        %3859 = vmatprep.subr.bf16.mxu0 0
        %3860 = vmatpush1.bf16.msra.mxu0 0
        %3861 = vmatprep.subr.bf16.mxu0 0
        %3862 = vmatpush1.bf16.msra.mxu0 0
        %3863 = vmatprep.subr.bf16.mxu0 0
        %3864 = vmatpush1.bf16.msra.mxu0 0
        %3865 = vmatprep.subr.bf16.mxu0 0
        %3866 = vmatpush1.bf16.msra.mxu0 0
        %3867 = vmatprep.subr.bf16.mxu0 %v3847
        %3868 = vmatpush1.bf16.msra.mxu0 %v3846
        %3869 = vmatprep.subr.bf16.mxu0 %v3845
        %3870 = vmatpush1.bf16.msra.mxu0 %v3844
        %3871 = vmatprep.subr.bf16.mxu0 0
        %3872 = vmatpush2.bf16.msra.mxu0 0
        %3873 = vmatprep.subr.bf16.mxu0 0
        %3874 = vmatpush2.bf16.msra.mxu0 0
        %3875 = vmatprep.subr.bf16.mxu0 0
        %3876 = vmatpush2.bf16.msra.mxu0 0
        %3877 = vmatprep.subr.bf16.mxu0 0
        %3878 = vmatpush2.bf16.msra.mxu0 0
        %3879 = vmatprep.subr.bf16.mxu0 0
        %3880 = vmatpush2.bf16.msra.mxu0 0
        %3881 = vmatprep.subr.bf16.mxu0 0
        %3882 = vmatpush2.bf16.msra.mxu0 0
        %3883 = vmatprep.subr.bf16.mxu0 0
        %3884 = vmatpush2.bf16.msra.mxu0 0
        %3885 = vmatprep.subr.bf16.mxu0 0
        %3886 = vmatpush2.bf16.msra.mxu0 0
        %3887 = vmatprep.mubr.bf16.mxu0 0
        %3888 = vmatmul.mubr.bf16.gmra.mxu0 %v3853
        %v3889 = vpop.f32.mrf.mxu0
        %v3890 = vadd.f32 %v3825, %v3889
        %v3891 = vpop.f32.mrf.mxu0
        %v3892 = vadd.f32 %v3829, %v3891
        %v3893 = vpop.f32.mrf.mxu0
        %v3894 = vpop.f32.mrf.mxu0
        %3895 = vdwg.mxu0
        %v3896 = vmul.f32 %v3890, %v3890
        %v3897 = vmul.f32 %v3892, %v3892
        %v3898 = vmul.f32 %v3890, %v3896
        %v3899 = vmul.f32 %v3892, %v3897
        %v3900 = vmul.f32 %v3898, 0.044715
        %v3901 = vmul.f32 %v3899, 0.044715
        %v3902 = vadd.f32 %v3890, %v3900
        %v3903 = vadd.f32 %v3892, %v3901
        %v3904 = vmul.f32 %v3902, 0.7978846
        %v3905 = vmul.f32 %v3903, 0.7978846
        %v3906 = vtanh.pop %v3904
        %v3907 = vtanh.pop %v3905
        %v3908 = vadd.f32 %v3906, 1.0
        %v3909 = vadd.f32 %v3907, 1.0
        %v3910 = vmul.f32 %v3908, 0.5
        %v3911 = vmul.f32 %v3909, 0.5
        %v3912 = vmul.f32 %v3890, %v3910
        %v3913 = vmul.f32 %v3892, %v3911
        %v3914 = vpack.c.bf16 %v3912, %v3912
        %v3915 = vpack.c.bf16 %v3913, %v3913
        %v3916 = vld [vmem:[%s24] sm:$0xf]
        %v3917 = vld [vmem:[%s24 + $0x4] sm:$0xf]
        %v3918 = vld [vmem:[%s24 + $0x8] sm:$0xf]
        %v3919 = vld [vmem:[%s24 + $0xc] sm:$0xf]
        %v3920 = vld [vmem:[%s24 + $0x10] sm:$0xf]
        %v3921 = vld [vmem:[%s24 + $0x14] sm:$0xf]
        %v3922 = vld [vmem:[%s24 + $0x18] sm:$0xf]
        %v3923 = vld [vmem:[%s24 + $0x1c] sm:$0xf]
        %v3924 = vld [vmem:[%s24 + $0x20] sm:$0xf]
        %v3925 = vld [vmem:[%s24 + $0x24] sm:$0xf]
        %v3926 = vld [vmem:[%s24 + $0x28] sm:$0xf]
        %v3927 = vld [vmem:[%s24 + $0x2c] sm:$0xf]
        %v3928 = vld [vmem:[%s24 + $0x30] sm:$0xf]
        %v3929 = vld [vmem:[%s24 + $0x34] sm:$0xf]
        %v3930 = vld [vmem:[%s24 + $0x38] sm:$0xf]
        %v3931 = vld [vmem:[%s24 + $0x3c] sm:$0xf]
        %v3932 = vld [vmem:[%s24 + $0x40] sm:$0xf]
        %v3933 = vld [vmem:[%s24 + $0x44] sm:$0xf]
        %v3934 = vld [vmem:[%s24 + $0x48] sm:$0xf]
        %v3935 = vld [vmem:[%s24 + $0x4c] sm:$0xf]
        %v3936 = vld [vmem:[%s24 + $0x50] sm:$0xf]
        %v3937 = vld [vmem:[%s24 + $0x54] sm:$0xf]
        %v3938 = vld [vmem:[%s24 + $0x58] sm:$0xf]
        %v3939 = vld [vmem:[%s24 + $0x5c] sm:$0xf]
        %v3940 = vld [vmem:[%s24 + $0x60] sm:$0xf]
        %v3941 = vld [vmem:[%s24 + $0x64] sm:$0xf]
        %v3942 = vld [vmem:[%s24 + $0x68] sm:$0xf]
        %v3943 = vld [vmem:[%s24 + $0x6c] sm:$0xf]
        %v3944 = vld [vmem:[%s24 + $0x70] sm:$0xf]
        %v3945 = vld [vmem:[%s24 + $0x74] sm:$0xf]
        %v3946 = vld [vmem:[%s24 + $0x78] sm:$0xf]
        %v3947 = vld [vmem:[%s24 + $0x7c] sm:$0xf]
        %v3948 = vld [vmem:[%s25] sm:$0x1]
        %v3950 = vlaneseq
        %v3951 = vshrl.u32 %v3950, 7
        %v3952 = vsub.s32 0, %v3951
        %v3953 = vrot.slane %v3948, %v3952
        %v3987 = vunpack.c.l.b16 %v3916
        %v3988 = vunpack.c.l.b16 %v3917
        %v3989 = vunpack.c.l.b16 %v3918
        %v3990 = vunpack.c.l.b16 %v3919
        %v3991 = vunpack.c.l.b16 %v3920
        %v3992 = vunpack.c.l.b16 %v3921
        %v3993 = vunpack.c.l.b16 %v3922
        %v3994 = vunpack.c.l.b16 %v3923
        %v3995 = vunpack.c.l.b16 %v3924
        %v3996 = vunpack.c.l.b16 %v3925
        %v3997 = vunpack.c.l.b16 %v3926
        %v3998 = vunpack.c.l.b16 %v3927
        %v3999 = vunpack.c.l.b16 %v3928
        %v4000 = vunpack.c.l.b16 %v3929
        %v4001 = vunpack.c.l.b16 %v3930
        %v4002 = vunpack.c.l.b16 %v3931
        %v4003 = vunpack.c.l.b16 %v3932
        %v4004 = vunpack.c.l.b16 %v3933
        %v4005 = vunpack.c.l.b16 %v3934
        %v4006 = vunpack.c.l.b16 %v3935
        %v4007 = vunpack.c.l.b16 %v3936
        %v4008 = vunpack.c.l.b16 %v3937
        %v4009 = vunpack.c.l.b16 %v3938
        %v4010 = vunpack.c.l.b16 %v3939
        %v4011 = vunpack.c.l.b16 %v3940
        %v4012 = vunpack.c.l.b16 %v3941
        %v4013 = vunpack.c.l.b16 %v3942
        %v4014 = vunpack.c.l.b16 %v3943
        %v4015 = vunpack.c.l.b16 %v3944
        %v4016 = vunpack.c.l.b16 %v3945
        %v4017 = vunpack.c.l.b16 %v3946
        %v4018 = vunpack.c.l.b16 %v3947
        %v4019 = vpack.c.b16 %v3988, %v3987
        %v4020 = vpack.c.b16 %v3990, %v3989
        %v4021 = vpack.c.b16 %v3992, %v3991
        %v4022 = vpack.c.b16 %v3994, %v3993
        %v4023 = vpack.c.b16 %v3996, %v3995
        %v4024 = vpack.c.b16 %v3998, %v3997
        %v4025 = vpack.c.b16 %v4000, %v3999
        %v4026 = vpack.c.b16 %v4002, %v4001
        %v4027 = vpack.c.b16 %v4004, %v4003
        %v4028 = vpack.c.b16 %v4006, %v4005
        %v4029 = vpack.c.b16 %v4008, %v4007
        %v4030 = vpack.c.b16 %v4010, %v4009
        %v4031 = vpack.c.b16 %v4012, %v4011
        %v4032 = vpack.c.b16 %v4014, %v4013
        %v4033 = vpack.c.b16 %v4016, %v4015
        %v4034 = vpack.c.b16 %v4018, %v4017
        %4051 = vmatprep.subr.bf16.mxu0 0
        %4052 = vmatpush1.bf16.msra.mxu0 %v4026
        %4053 = vmatprep.subr.bf16.mxu0 0
        %4054 = vmatpush1.bf16.msra.mxu0 %v4025
        %4055 = vmatprep.subr.bf16.mxu0 0
        %4056 = vmatpush1.bf16.msra.mxu0 %v4024
        %4057 = vmatprep.subr.bf16.mxu0 0
        %4058 = vmatpush1.bf16.msra.mxu0 %v4023
        %4059 = vmatprep.subr.bf16.mxu0 0
        %4060 = vmatpush1.bf16.msra.mxu0 %v4022
        %4061 = vmatprep.subr.bf16.mxu0 0
        %4062 = vmatpush1.bf16.msra.mxu0 %v4021
        %4063 = vmatprep.subr.bf16.mxu0 0
        %4064 = vmatpush1.bf16.msra.mxu0 %v4020
        %4065 = vmatprep.subr.bf16.mxu0 0
        %4066 = vmatpush1.bf16.msra.mxu0 %v4019
        %4067 = vmatprep.subr.bf16.mxu0 0
        %4068 = vmatpush2.bf16.msra.mxu0 %v4034
        %4069 = vmatprep.subr.bf16.mxu0 0
        %4070 = vmatpush2.bf16.msra.mxu0 %v4033
        %4071 = vmatprep.subr.bf16.mxu0 0
        %4072 = vmatpush2.bf16.msra.mxu0 %v4032
        %4073 = vmatprep.subr.bf16.mxu0 0
        %4074 = vmatpush2.bf16.msra.mxu0 %v4031
        %4075 = vmatprep.subr.bf16.mxu0 0
        %4076 = vmatpush2.bf16.msra.mxu0 %v4030
        %4077 = vmatprep.subr.bf16.mxu0 0
        %4078 = vmatpush2.bf16.msra.mxu0 %v4029
        %4079 = vmatprep.subr.bf16.mxu0 0
        %4080 = vmatpush2.bf16.msra.mxu0 %v4028
        %4081 = vmatprep.subr.bf16.mxu0 0
        %4082 = vmatpush2.bf16.msra.mxu0 %v4027
        %4083 = vmatprep.mubr.bf16.mxu0 %v3915
        %4084 = vmatmul.mubr.bf16.gmra.mxu0 %v3914
        %v4085 = vpop.f32.mrf.mxu0
        %v4086 = vadd.f32 %v3953, %v4085
        %v4087 = vpop.f32.mrf.mxu0
        %v4088 = vpop.f32.mrf.mxu0
        %v4089 = vpop.f32.mrf.mxu0
        %4090 = vdwg.mxu0
        %v4091 = vadd.f32 %v3785, %v4086
        %4092 = vst.msk [vmem:[%s809] sm:$0xff] %vm825, %v4091
        %s4093 = sand.u32 %s616, 1
        %s4094 = scalar_lea.sflag [#allocation3], %s4093
        %s4095 = sand.u32 %s616, 1
        %s4096 = smul.addr %s4095, 8
        %s4097 = scalar_lea.vmem [#allocation2], %s4096
        // Predicated region
        $region125: #{_lambda_.1} parent=123 // pred_check
          %p4098 = pneg %p626
        $region126: #{_lambda_.1} parent=123 // pred_check_branch
          %4100 = sbr.rel (%p4098) target = $region128
        $region127: #{_lambda_.1} parent=123 // pred_region
          %s4102 = ssub.s32 128, 128
          %4103 = vsyncadd %s4094, %s4102
          %s4104 = smul.addr %s44, 128
          %s4105 = scalar_lea.hbm %s26, %s4104
          %s4107 = sshll.u32 %s4097, 4
          %s4108 = int_to_ptr.vmem [resolvable:$true] %s4107
          %4110 = dma.vmem_to_hbm [thread:$0]  %s4108, 128, %s4105, %s4094
        $region128: #{_lambda_.1} parent=123 // pred_fallthru
          _
      $region124: #{_lambda_.1} parent=5 // pred_fallthru
        _
      %p4111 = scmp.le.s32.totalorder 2, %s35
      // Predicated region
      $region129: #{_lambda_.1} parent=5 // pred_check
        %p4112 = pneg %p4111
      $region130: #{_lambda_.1} parent=5 // pred_check_branch
        %4114 = sbr.rel (%p4112) target = $region132
      $region131: #{_lambda_.1} parent=5 // pred_region
        %s4115 = ssub.s32 %s35, 2
        // Predicated region
        $region133: #{_lambda_.1} parent=131 // pred_check
          %p4116 = pneg %p632
        $region134: #{_lambda_.1} parent=131 // pred_check_branch
          %4118 = sbr.rel (%p4116) target = $region136
        $region135: #{_lambda_.1} parent=131 // pred_region
          %s4119 = sand.u32 %s617, 1
          %s4120 = scalar_lea.sflag [#allocation3], %s4119
          %s4121 = sand.u32 %s617, 1
          %s4122 = smul.addr %s4121, 8
          %s4123 = scalar_lea.vmem [#allocation2], %s4122
          %4124 = dma.done %s4120, 128
        $region136: #{_lambda_.1} parent=131 // pred_fallthru
          _
      $region132: #{_lambda_.1} parent=5 // pred_fallthru
        _
    $region6: #{_lambda_.1} parent=1 // loop_footer
      %s39 = sadd.s32 1, %s35
    $region7: #{_lambda_.1} parent=1 // loop_footer_branch
      %34 = sbr.rel target = $region3
    $region8: #{_lambda_.1} parent=1 // loop_exit
      _
    %4125 = vsyncpa [#allocation3], 1
    %s4126 = scalar_lea.sflag [#allocation3], 1
    %4127 = vsyncpa %s4126, 1

</llo_original>
